<compile_context>
chip_gen: v7x
topology: tpu7x:2x2x1
jax: 0.10.0
libtpu: 0.0.40
codegen_flags: <defaults>
</compile_context>

<pallas_src>
import jax
import jax.numpy as jnp
from jax.experimental import pallas as pl
from jax.experimental.pallas import tpu as pltpu

H1 = 512
BN_EPS = 1e-5
TILE_N = 128     # batch tile: fills >=128 MXU rows; grid axis marked "parallel"


# ----------------------------------------------------------------- kernels ----

def _fc1_stats_kernel(x_ref, w1_ref, z1_ref, s_ref, ss_ref):
    # fc1 on the MXU (bf16 operands, f32 accumulation). Bias dropped: cancelled by
    # the following train-mode BN mean subtraction.
    z = jnp.dot(x_ref[...].astype(jnp.bfloat16), w1_ref[...],
                preferred_element_type=jnp.float32)
    z1_ref[...] = z
    # Single-pass BN statistics: per-tile sum and sum-of-squares (var = E[x^2]-m^2).
    s_ref[...] = jnp.sum(z, axis=0, keepdims=True)[None]
    ss_ref[...] = jnp.sum(z * z, axis=0, keepdims=True)[None]


def _bn1_drop_fc2_kernel(z1_ref, sc1_ref, sh1_ref, bits_ref, w2_ref,
                         feat1_ref, z2_ref, s_ref, ss_ref):
    # bn1 folded into a single scale/shift: 2 VPU ops/element instead of 4.
    y1 = z1_ref[...] * sc1_ref[...] + sh1_ref[...]
    # Dropout(p=0.5) fused with ReLU: sign bit of a uniform 32-bit word is an exact
    # p=0.5 keep test -> one compare + one select, no int->float casts.
    keep = jnp.logical_and(bits_ref[...] < 0, y1 > 0.0)
    feat1 = jnp.where(keep, y1 * 2.0, 0.0)
    feat1_ref[...] = feat1
    # fc2 on the MXU (bias dropped; cancelled by bn2).
    z2 = jnp.dot(feat1.astype(jnp.bfloat16), w2_ref[...],
                 preferred_element_type=jnp.float32)
    z2_ref[...] = z2
    s_ref[...] = jnp.sum(z2, axis=0, keepdims=True)[None]
    ss_ref[...] = jnp.sum(z2 * z2, axis=0, keepdims=True)[None]


def _bn2_relu_kernel(z2_ref, sc2_ref, sh2_ref, feat2_ref):
    feat2_ref[...] = jnp.maximum(z2_ref[...] * sc2_ref[...] + sh2_ref[...], 0.0)


# -------------------------------------------------------------- call sites ----

def _parallel():
    return pltpu.CompilerParams(dimension_semantics=("parallel",))


def _fc1_stats(x, w1_t, tn, nt):
    n, d_in = x.shape
    h = w1_t.shape[1]
    return pl.pallas_call(
        _fc1_stats_kernel,
        grid=(nt,),
        in_specs=[
            pl.BlockSpec((tn, d_in), lambda i: (i, 0)),
            pl.BlockSpec((d_in, h), lambda i: (0, 0)),     # weights resident across tiles
        ],
        out_specs=[
            pl.BlockSpec((tn, h), lambda i: (i, 0)),
            pl.BlockSpec((1, 1, h), lambda i: (i, 0, 0)),
            pl.BlockSpec((1, 1, h), lambda i: (i, 0, 0)),
        ],
        out_shape=(
            jax.ShapeDtypeStruct((n, h), jnp.float32),
            jax.ShapeDtypeStruct((nt, 1, h), jnp.float32),
            jax.ShapeDtypeStruct((nt, 1, h), jnp.float32),
        ),
        compiler_params=_parallel(),
    )(x, w1_t)


def _bn1_drop_fc2(z1, sc1, sh1, bits, w2_t, tn, nt):
    n, h = z1.shape
    d_out = w2_t.shape[1]
    return pl.pallas_call(
        _bn1_drop_fc2_kernel,
        grid=(nt,),
        in_specs=[
            pl.BlockSpec((tn, h), lambda i: (i, 0)),
            pl.BlockSpec((1, h), lambda i: (0, 0)),
            pl.BlockSpec((1, h), lambda i: (0, 0)),
            pl.BlockSpec((tn, h), lambda i: (i, 0)),
            pl.BlockSpec((h, d_out), lambda i: (0, 0)),
        ],
        out_specs=[
            pl.BlockSpec((tn, h), lambda i: (i, 0)),
            pl.BlockSpec((tn, d_out), lambda i: (i, 0)),
            pl.BlockSpec((1, 1, d_out), lambda i: (i, 0, 0)),
            pl.BlockSpec((1, 1, d_out), lambda i: (i, 0, 0)),
        ],
        out_shape=(
            jax.ShapeDtypeStruct((n, h), jnp.float32),
            jax.ShapeDtypeStruct((n, d_out), jnp.float32),
            jax.ShapeDtypeStruct((nt, 1, d_out), jnp.float32),
            jax.ShapeDtypeStruct((nt, 1, d_out), jnp.float32),
        ),
        compiler_params=_parallel(),
    )(z1, sc1, sh1, bits, w2_t)


def _bn2_relu(z2, sc2, sh2, tn, nt):
    n, d_out = z2.shape
    return pl.pallas_call(
        _bn2_relu_kernel,
        grid=(nt,),
        in_specs=[
            pl.BlockSpec((tn, d_out), lambda i: (i, 0)),
            pl.BlockSpec((1, d_out), lambda i: (0, 0)),
            pl.BlockSpec((1, d_out), lambda i: (0, 0)),
        ],
        out_specs=pl.BlockSpec((tn, d_out), lambda i: (i, 0)),
        out_shape=jax.ShapeDtypeStruct((n, d_out), jnp.float32),
        compiler_params=_parallel(),
    )(z2, sc2, sh2)


def _bn_fold(s_part, ss_part, n, gamma, beta):
    """Fold train-mode BN into one (1, C) scale/shift from per-tile partial sums.

    Tiny (C,)-sized cross-phase finalize; runs as plain XLA between pallas_calls.
    """
    s = jnp.sum(s_part[:, 0, :], axis=0)
    ss = jnp.sum(ss_part[:, 0, :], axis=0)
    mean = s / n
    var = jnp.maximum(ss / n - mean * mean, 0.0)      # biased variance (train mode)
    scale = gamma * jax.lax.rsqrt(var + BN_EPS)
    shift = beta - mean * scale
    return scale.reshape(1, -1), shift.reshape(1, -1)


@jax.jit
def fe_forward(dropout_key, x, w1_t, g1, be1, w2_t, g2, be2):
    n, _ = x.shape
    tn = TILE_N if (n % TILE_N == 0) else n
    nt = n // tn

    # TODO(synk): on-chip pltpu.prng_* has no CPU-interpret lowering; dropout random
    # words are drawn here and thresholded (exact p=0.5, sign bit) inside the kernel.
    bits = jax.lax.bitcast_convert_type(
        jax.random.bits(dropout_key, (n, H1), jnp.uint32), jnp.int32)

    z1, s1, ss1 = _fc1_stats(x, w1_t, tn, nt)
    sc1, sh1 = _bn_fold(s1, ss1, n, g1, be1)

    feat1, z2, s2, ss2 = _bn1_drop_fc2(z1, sc1, sh1, bits, w2_t, tn, nt)
    sc2, sh2 = _bn_fold(s2, ss2, n, g2, be2)

    feat2 = _bn2_relu(z2, sc2, sh2, tn, nt)
    return feat1, feat2


# --------------------------------------------------------------- reference ----

def _reference(dropout_key, x, w1_t, g1, be1, w2_t, g2, be2):
    """Pure-JAX mirror of the kernel math (same bf16 matmul casts, same RNG)."""
    n = x.shape[0]
    bits = jax.lax.bitcast_convert_type(
        jax.random.bits(dropout_key, (n, H1), jnp.uint32), jnp.int32)
    z1 = jnp.dot(x.astype(jnp.bfloat16), w1_t, preferred_element_type=jnp.float32)
    m1 = jnp.mean(z1, axis=0)
    v1 = jnp.maximum(jnp.mean(z1 * z1, axis=0) - m1 * m1, 0.0)
    y1 = (z1 - m1) * (g1 * jax.lax.rsqrt(v1 + BN_EPS)) + be1
    feat1 = jnp.where((bits < 0) & (y1 > 0.0), y1 * 2.0, 0.0)
    z2 = jnp.dot(feat1.astype(jnp.bfloat16), w2_t, preferred_element_type=jnp.float32)
    m2 = jnp.mean(z2, axis=0)
    v2 = jnp.maximum(jnp.mean(z2 * z2, axis=0) - m2 * m2, 0.0)
    feat2 = jnp.maximum((z2 - m2) * (g2 * jax.lax.rsqrt(v2 + BN_EPS)) + be2, 0.0)
    return feat1, feat2


# ------------------------------------------------------------------ params ----

def init_params(key, input_dim, output_dim):
    """PyTorch-shaped init, then transposed to (in, out) and cast to bf16 for the MXU.

    Linear biases are intentionally not created: they cancel exactly under the
    train-mode BatchNorm that immediately follows each Linear.
    """
    k1, k2 = jax.random.split(key)
    bound1 = 1.0 / (input_dim ** 0.5)
    w1 = jax.random.uniform(k1, (H1, input_dim), jnp.float32, -bound1, bound1)
    bound2 = 1.0 / (H1 ** 0.5)
    w2 = jax.random.uniform(k2, (output_dim, H1), jnp.float32, -bound2, bound2)
    g1 = jnp.ones((H1,), jnp.float32)
    be1 = jnp.zeros((H1,), jnp.float32)
    g2 = jnp.ones((output_dim,), jnp.float32)
    be2 = jnp.zeros((output_dim,), jnp.float32)
    return (w1.T.astype(jnp.bfloat16), g1, be1,
            w2.T.astype(jnp.bfloat16), g2, be2)


if __name__ == "__main__":
    N, INPUT_DIM, OUTPUT_DIM = 256, 128, 128   # 2 batch tiles of 128; lane-dense K

    key = jax.random.PRNGKey(0)
    kx, kp, kd = jax.random.split(key, 3)
    x = jax.random.normal(kx, (N, INPUT_DIM), jnp.float32)
    params = init_params(kp, INPUT_DIM, OUTPUT_DIM)

    feat1, feat2 = fe_forward(kd, x, *params)
    jax.block_until_ready((feat1, feat2))

    assert feat1.shape == (N, H1) and feat2.shape == (N, OUTPUT_DIM)
    assert bool(jnp.all(jnp.isfinite(feat1))) and bool(jnp.all(jnp.isfinite(feat2)))

    ref1, ref2 = _reference(kd, x, *params)
    assert jnp.allclose(feat1, ref1, atol=1e-2, rtol=1e-2)
    assert jnp.allclose(feat2, ref2, atol=1e-2, rtol=1e-2)

    print("KERNEL_OK")
</pallas_src>

<mosaic_0001>
module attributes {stable_mosaic.version = 11 : i64} {
  func.func @_fc1_stats_kernel(%arg0: i32, %arg1: memref<128x128xf32, #tpu.memory_space<vmem>>, %arg2: memref<128x512xbf16, #tpu.memory_space<vmem>>, %arg3: memref<128x512xf32, #tpu.memory_space<vmem>>, %arg4: memref<1x1x512xf32, #tpu.memory_space<vmem>>, %arg5: memref<1x1x512xf32, #tpu.memory_space<vmem>>) attributes {dimension_semantics = [#tpu.dimension_semantics<parallel>], iteration_bounds = array<i64: 2>, scalar_prefetch = 0 : i64, scratch_operands = 0 : i64, tpu.core_type = #tpu.core_type<tc>, window_params = [{transform_indices = @transform_0, window_bounds = array<i64: 128, 128>}, {pipeline_mode = #tpu.pipeline_mode<synchronous>, transform_indices = @transform_1, window_bounds = array<i64: 128, 512>}, {transform_indices = @transform_2, window_bounds = array<i64: 128, 512>}, {transform_indices = @transform_3, window_bounds = array<i64: 1, 1, 512>}, {transform_indices = @transform_4, window_bounds = array<i64: 1, 1, 512>}]} {
    %c0 = arith.constant 0 : index
    %c0_0 = arith.constant 0 : index
    %0 = vector.load %arg1[%c0, %c0_0] : memref<128x128xf32, #tpu.memory_space<vmem>>, vector<128x128xf32>
    %1 = arith.truncf %0 : vector<128x128xf32> to vector<128x128xbf16>
    %c0_1 = arith.constant 0 : index
    %c0_2 = arith.constant 0 : index
    %2 = vector.load %arg2[%c0_1, %c0_2] : memref<128x512xbf16, #tpu.memory_space<vmem>>, vector<128x512xbf16>
    %cst = arith.constant dense<0.000000e+00> : vector<128x512xf32>
    %3 = tpu.matmul %1, %2, %cst {dimension_numbers = #tpu.dot_dimension_numbers<[1], [0], [0], [1], [0, 0, 1, 1], [], []>} : vector<128x128xbf16>, vector<128x512xbf16>, vector<128x512xf32> -> vector<128x512xf32>
    %c0_3 = arith.constant 0 : index
    %c0_4 = arith.constant 0 : index
    %4 = vector.load %arg3[%c0_3, %c0_4] : memref<128x512xf32, #tpu.memory_space<vmem>>, vector<128x512xf32>
    tpu.vector_store %arg3[%c0_3, %c0_4], %3 {strides = array<i32>} : memref<128x512xf32, #tpu.memory_space<vmem>>, vector<128x512xf32>,
    %cst_5 = arith.constant dense<0.000000e+00> : vector<512xf32>
    %5 = vector.multi_reduction <add>, %3, %cst_5 [0] : vector<128x512xf32> to vector<512xf32>
    %6 = vector.shape_cast %5 : vector<512xf32> to vector<1x512xf32>
    %7 = vector.shape_cast %6 : vector<1x512xf32> to vector<1x1x512xf32>
    %c0_6 = arith.constant 0 : index
    %c0_7 = arith.constant 0 : index
    %c0_8 = arith.constant 0 : index
    %8 = vector.load %arg4[%c0_6, %c0_7, %c0_8] : memref<1x1x512xf32, #tpu.memory_space<vmem>>, vector<1x1x512xf32>
    tpu.vector_store %arg4[%c0_6, %c0_7, %c0_8], %7 {strides = array<i32>} : memref<1x1x512xf32, #tpu.memory_space<vmem>>, vector<1x1x512xf32>,
    %9 = arith.mulf %3, %3 : vector<128x512xf32>
    %cst_9 = arith.constant dense<0.000000e+00> : vector<512xf32>
    %10 = vector.multi_reduction <add>, %9, %cst_9 [0] : vector<128x512xf32> to vector<512xf32>
    %11 = vector.shape_cast %10 : vector<512xf32> to vector<1x512xf32>
    %12 = vector.shape_cast %11 : vector<1x512xf32> to vector<1x1x512xf32>
    %c0_10 = arith.constant 0 : index
    %c0_11 = arith.constant 0 : index
    %c0_12 = arith.constant 0 : index
    %13 = vector.load %arg5[%c0_10, %c0_11, %c0_12] : memref<1x1x512xf32, #tpu.memory_space<vmem>>, vector<1x1x512xf32>
    tpu.vector_store %arg5[%c0_10, %c0_11, %c0_12], %12 {strides = array<i32>} : memref<1x1x512xf32, #tpu.memory_space<vmem>>, vector<1x1x512xf32>,
    return
  }
  func.func @transform_0(%arg0: i32) -> (i32, i32) {
    %c0_i32 = arith.constant 0 : i32
    %c0_i32_0 = arith.constant 0 : i32
    return %arg0, %c0_i32 : i32, i32
  }
  func.func @transform_1(%arg0: i32) -> (i32, i32) {
    %c0_i32 = arith.constant 0 : i32
    %c0_i32_0 = arith.constant 0 : i32
    %c0_i32_1 = arith.constant 0 : i32
    return %c0_i32, %c0_i32_0 : i32, i32
  }
  func.func @transform_2(%arg0: i32) -> (i32, i32) {
    %c0_i32 = arith.constant 0 : i32
    %c0_i32_0 = arith.constant 0 : i32
    return %arg0, %c0_i32 : i32, i32
  }
  func.func @transform_3(%arg0: i32) -> (i32, i32, i32) {
    %c0_i32 = arith.constant 0 : i32
    %c0_i32_0 = arith.constant 0 : i32
    %c0_i32_1 = arith.constant 0 : i32
    return %arg0, %c0_i32, %c0_i32_0 : i32, i32, i32
  }
  func.func @transform_4(%arg0: i32) -> (i32, i32, i32) {
    %c0_i32 = arith.constant 0 : i32
    %c0_i32_0 = arith.constant 0 : i32
    %c0_i32_1 = arith.constant 0 : i32
    return %arg0, %c0_i32, %c0_i32_0 : i32, i32, i32
  }
}

module attributes {stable_mosaic.version = 11 : i64} {
  func.func @_bn1_drop_fc2_kernel(%arg0: i32, %arg1: memref<128x512xf32, #tpu.memory_space<vmem>>, %arg2: memref<1x512xf32, #tpu.memory_space<vmem>>, %arg3: memref<1x512xf32, #tpu.memory_space<vmem>>, %arg4: memref<128x512xi32, #tpu.memory_space<vmem>>, %arg5: memref<512x128xbf16, #tpu.memory_space<vmem>>, %arg6: memref<128x512xf32, #tpu.memory_space<vmem>>, %arg7: memref<128x128xf32, #tpu.memory_space<vmem>>, %arg8: memref<1x1x128xf32, #tpu.memory_space<vmem>>, %arg9: memref<1x1x128xf32, #tpu.memory_space<vmem>>) attributes {dimension_semantics = [#tpu.dimension_semantics<parallel>], iteration_bounds = array<i64: 2>, scalar_prefetch = 0 : i64, scratch_operands = 0 : i64, tpu.core_type = #tpu.core_type<tc>, window_params = [{transform_indices = @transform_0, window_bounds = array<i64: 128, 512>}, {pipeline_mode = #tpu.pipeline_mode<synchronous>, transform_indices = @transform_1, window_bounds = array<i64: 1, 512>}, {pipeline_mode = #tpu.pipeline_mode<synchronous>, transform_indices = @transform_2, window_bounds = array<i64: 1, 512>}, {transform_indices = @transform_3, window_bounds = array<i64: 128, 512>}, {pipeline_mode = #tpu.pipeline_mode<synchronous>, transform_indices = @transform_4, window_bounds = array<i64: 512, 128>}, {transform_indices = @transform_5, window_bounds = array<i64: 128, 512>}, {transform_indices = @transform_6, window_bounds = array<i64: 128, 128>}, {transform_indices = @transform_7, window_bounds = array<i64: 1, 1, 128>}, {transform_indices = @transform_8, window_bounds = array<i64: 1, 1, 128>}]} {
    %c0 = arith.constant 0 : index
    %c0_0 = arith.constant 0 : index
    %0 = vector.load %arg1[%c0, %c0_0] : memref<128x512xf32, #tpu.memory_space<vmem>>, vector<128x512xf32>
    %c0_1 = arith.constant 0 : index
    %c0_2 = arith.constant 0 : index
    %1 = vector.load %arg2[%c0_1, %c0_2] : memref<1x512xf32, #tpu.memory_space<vmem>>, vector<1x512xf32>
    %2 = vector.broadcast %1 : vector<1x512xf32> to vector<128x512xf32>
    %3 = arith.mulf %0, %2 : vector<128x512xf32>
    %c0_3 = arith.constant 0 : index
    %c0_4 = arith.constant 0 : index
    %4 = vector.load %arg3[%c0_3, %c0_4] : memref<1x512xf32, #tpu.memory_space<vmem>>, vector<1x512xf32>
    %5 = vector.broadcast %4 : vector<1x512xf32> to vector<128x512xf32>
    %6 = arith.addf %3, %5 : vector<128x512xf32>
    %c0_5 = arith.constant 0 : index
    %c0_6 = arith.constant 0 : index
    %7 = vector.load %arg4[%c0_5, %c0_6] : memref<128x512xi32, #tpu.memory_space<vmem>>, vector<128x512xi32>
    %c0_i32 = arith.constant 0 : i32
    %8 = vector.broadcast %c0_i32 : i32 to vector<128x512xi32>
    %9 = arith.cmpi slt, %7, %8 : vector<128x512xi32>
    %cst = arith.constant 0.000000e+00 : f32
    %10 = vector.broadcast %cst : f32 to vector<128x512xf32>
    %11 = arith.cmpf ogt, %6, %10 : vector<128x512xf32>
    %12 = arith.andi %9, %11 : vector<128x512xi1>
    %cst_7 = arith.constant 2.000000e+00 : f32
    %13 = vector.broadcast %cst_7 : f32 to vector<128x512xf32>
    %14 = arith.mulf %6, %13 : vector<128x512xf32>
    %cst_8 = arith.constant 0.000000e+00 : f32
    %15 = vector.broadcast %cst_8 : f32 to vector<128x512xf32>
    %16 = arith.select %12, %14, %15 : vector<128x512xi1>, vector<128x512xf32>
    %c0_9 = arith.constant 0 : index
    %c0_10 = arith.constant 0 : index
    %17 = vector.load %arg6[%c0_9, %c0_10] : memref<128x512xf32, #tpu.memory_space<vmem>>, vector<128x512xf32>
    tpu.vector_store %arg6[%c0_9, %c0_10], %16 {strides = array<i32>} : memref<128x512xf32, #tpu.memory_space<vmem>>, vector<128x512xf32>,
    %18 = arith.truncf %16 : vector<128x512xf32> to vector<128x512xbf16>
    %c0_11 = arith.constant 0 : index
    %c0_12 = arith.constant 0 : index
    %19 = vector.load %arg5[%c0_11, %c0_12] : memref<512x128xbf16, #tpu.memory_space<vmem>>, vector<512x128xbf16>
    %cst_13 = arith.constant dense<0.000000e+00> : vector<128x128xf32>
    %20 = tpu.matmul %18, %19, %cst_13 {dimension_numbers = #tpu.dot_dimension_numbers<[1], [0], [0], [1], [0, 0, 1, 1], [], []>} : vector<128x512xbf16>, vector<512x128xbf16>, vector<128x128xf32> -> vector<128x128xf32>
    %c0_14 = arith.constant 0 : index
    %c0_15 = arith.constant 0 : index
    %21 = vector.load %arg7[%c0_14, %c0_15] : memref<128x128xf32, #tpu.memory_space<vmem>>, vector<128x128xf32>
    tpu.vector_store %arg7[%c0_14, %c0_15], %20 {strides = array<i32>} : memref<128x128xf32, #tpu.memory_space<vmem>>, vector<128x128xf32>,
    %cst_16 = arith.constant dense<0.000000e+00> : vector<128xf32>
    %22 = vector.multi_reduction <add>, %20, %cst_16 [0] : vector<128x128xf32> to vector<128xf32>
    %23 = vector.shape_cast %22 : vector<128xf32> to vector<1x128xf32>
    %24 = vector.shape_cast %23 : vector<1x128xf32> to vector<1x1x128xf32>
    %c0_17 = arith.constant 0 : index
    %c0_18 = arith.constant 0 : index
    %c0_19 = arith.constant 0 : index
    %25 = vector.load %arg8[%c0_17, %c0_18, %c0_19] : memref<1x1x128xf32, #tpu.memory_space<vmem>>, vector<1x1x128xf32>
    tpu.vector_store %arg8[%c0_17, %c0_18, %c0_19], %24 {strides = array<i32>} : memref<1x1x128xf32, #tpu.memory_space<vmem>>, vector<1x1x128xf32>,
    %26 = arith.mulf %20, %20 : vector<128x128xf32>
    %cst_20 = arith.constant dense<0.000000e+00> : vector<128xf32>
    %27 = vector.multi_reduction <add>, %26, %cst_20 [0] : vector<128x128xf32> to vector<128xf32>
    %28 = vector.shape_cast %27 : vector<128xf32> to vector<1x128xf32>
    %29 = vector.shape_cast %28 : vector<1x128xf32> to vector<1x1x128xf32>
    %c0_21 = arith.constant 0 : index
    %c0_22 = arith.constant 0 : index
    %c0_23 = arith.constant 0 : index
    %30 = vector.load %arg9[%c0_21, %c0_22, %c0_23] : memref<1x1x128xf32, #tpu.memory_space<vmem>>, vector<1x1x128xf32>
    tpu.vector_store %arg9[%c0_21, %c0_22, %c0_23], %29 {strides = array<i32>} : memref<1x1x128xf32, #tpu.memory_space<vmem>>, vector<1x1x128xf32>,
    return
  }
  func.func @transform_0(%arg0: i32) -> (i32, i32) {
    %c0_i32 = arith.constant 0 : i32
    %c0_i32_0 = arith.constant 0 : i32
    return %arg0, %c0_i32 : i32, i32
  }
  func.func @transform_1(%arg0: i32) -> (i32, i32) {
    %c0_i32 = arith.constant 0 : i32
    %c0_i32_0 = arith.constant 0 : i32
    %c0_i32_1 = arith.constant 0 : i32
    return %c0_i32, %c0_i32_0 : i32, i32
  }
  func.func @transform_2(%arg0: i32) -> (i32, i32) {
    %c0_i32 = arith.constant 0 : i32
    %c0_i32_0 = arith.constant 0 : i32
    %c0_i32_1 = arith.constant 0 : i32
    return %c0_i32, %c0_i32_0 : i32, i32
  }
  func.func @transform_3(%arg0: i32) -> (i32, i32) {
    %c0_i32 = arith.constant 0 : i32
    %c0_i32_0 = arith.constant 0 : i32
    return %arg0, %c0_i32 : i32, i32
  }
  func.func @transform_4(%arg0: i32) -> (i32, i32) {
    %c0_i32 = arith.constant 0 : i32
    %c0_i32_0 = arith.constant 0 : i32
    %c0_i32_1 = arith.constant 0 : i32
    return %c0_i32, %c0_i32_0 : i32, i32
  }
  func.func @transform_5(%arg0: i32) -> (i32, i32) {
    %c0_i32 = arith.constant 0 : i32
    %c0_i32_0 = arith.constant 0 : i32
    return %arg0, %c0_i32 : i32, i32
  }
  func.func @transform_6(%arg0: i32) -> (i32, i32) {
    %c0_i32 = arith.constant 0 : i32
    %c0_i32_0 = arith.constant 0 : i32
    return %arg0, %c0_i32 : i32, i32
  }
  func.func @transform_7(%arg0: i32) -> (i32, i32, i32) {
    %c0_i32 = arith.constant 0 : i32
    %c0_i32_0 = arith.constant 0 : i32
    %c0_i32_1 = arith.constant 0 : i32
    return %arg0, %c0_i32, %c0_i32_0 : i32, i32, i32
  }
  func.func @transform_8(%arg0: i32) -> (i32, i32, i32) {
    %c0_i32 = arith.constant 0 : i32
    %c0_i32_0 = arith.constant 0 : i32
    %c0_i32_1 = arith.constant 0 : i32
    return %arg0, %c0_i32, %c0_i32_0 : i32, i32, i32
  }
}

module attributes {stable_mosaic.version = 11 : i64} {
  func.func @_bn2_relu_kernel(%arg0: i32, %arg1: memref<128x128xf32, #tpu.memory_space<vmem>>, %arg2: memref<1x128xf32, #tpu.memory_space<vmem>>, %arg3: memref<1x128xf32, #tpu.memory_space<vmem>>, %arg4: memref<128x128xf32, #tpu.memory_space<vmem>>) attributes {dimension_semantics = [#tpu.dimension_semantics<parallel>], iteration_bounds = array<i64: 2>, scalar_prefetch = 0 : i64, scratch_operands = 0 : i64, tpu.core_type = #tpu.core_type<tc>, window_params = [{transform_indices = @transform_0, window_bounds = array<i64: 128, 128>}, {pipeline_mode = #tpu.pipeline_mode<synchronous>, transform_indices = @transform_1, window_bounds = array<i64: 1, 128>}, {pipeline_mode = #tpu.pipeline_mode<synchronous>, transform_indices = @transform_2, window_bounds = array<i64: 1, 128>}, {transform_indices = @transform_3, window_bounds = array<i64: 128, 128>}]} {
    %c0 = arith.constant 0 : index
    %c0_0 = arith.constant 0 : index
    %0 = vector.load %arg1[%c0, %c0_0] : memref<128x128xf32, #tpu.memory_space<vmem>>, vector<128x128xf32>
    %c0_1 = arith.constant 0 : index
    %c0_2 = arith.constant 0 : index
    %1 = vector.load %arg2[%c0_1, %c0_2] : memref<1x128xf32, #tpu.memory_space<vmem>>, vector<1x128xf32>
    %2 = vector.broadcast %1 : vector<1x128xf32> to vector<128x128xf32>
    %3 = arith.mulf %0, %2 : vector<128x128xf32>
    %c0_3 = arith.constant 0 : index
    %c0_4 = arith.constant 0 : index
    %4 = vector.load %arg3[%c0_3, %c0_4] : memref<1x128xf32, #tpu.memory_space<vmem>>, vector<1x128xf32>
    %5 = vector.broadcast %4 : vector<1x128xf32> to vector<128x128xf32>
    %6 = arith.addf %3, %5 : vector<128x128xf32>
    %cst = arith.constant 0.000000e+00 : f32
    %7 = vector.broadcast %cst : f32 to vector<128x128xf32>
    %8 = arith.maximumf %6, %7 : vector<128x128xf32>
    %c0_5 = arith.constant 0 : index
    %c0_6 = arith.constant 0 : index
    %9 = vector.load %arg4[%c0_5, %c0_6] : memref<128x128xf32, #tpu.memory_space<vmem>>, vector<128x128xf32>
    tpu.vector_store %arg4[%c0_5, %c0_6], %8 {strides = array<i32>} : memref<128x128xf32, #tpu.memory_space<vmem>>, vector<128x128xf32>,
    return
  }
  func.func @transform_0(%arg0: i32) -> (i32, i32) {
    %c0_i32 = arith.constant 0 : i32
    %c0_i32_0 = arith.constant 0 : i32
    return %arg0, %c0_i32 : i32, i32
  }
  func.func @transform_1(%arg0: i32) -> (i32, i32) {
    %c0_i32 = arith.constant 0 : i32
    %c0_i32_0 = arith.constant 0 : i32
    %c0_i32_1 = arith.constant 0 : i32
    return %c0_i32, %c0_i32_0 : i32, i32
  }
  func.func @transform_2(%arg0: i32) -> (i32, i32) {
    %c0_i32 = arith.constant 0 : i32
    %c0_i32_0 = arith.constant 0 : i32
    %c0_i32_1 = arith.constant 0 : i32
    return %c0_i32, %c0_i32_0 : i32, i32
  }
  func.func @transform_3(%arg0: i32) -> (i32, i32) {
    %c0_i32 = arith.constant 0 : i32
    %c0_i32_0 = arith.constant 0 : i32
    return %arg0, %c0_i32 : i32, i32
  }
}

</mosaic_0001>

<llo_original>
// kernel: fe_forward.5
$region0: #{fe_forward.5}
  #allocation0 [shape = 'u32[]', space=smem, size = 0x4, offset = 0x4, fixed_abs, tag = 'smem constant byte address 0x4 - core index']
  #allocation1 [shape = 'u32[144,128]{1,0:T(1,128)}', space=vmem, size = 0x12000, scoped, tag = 'internal scratch']
  %s0 = inlined_call_operand.vmem [shape: f32[256,128], index: 0, kind: input, shape index: {}]
  %s1 = inlined_call_operand.vmem [shape: f32[1,128], index: 1, kind: input, shape index: {}]
  %s2 = inlined_call_operand.vmem [shape: f32[1,128], index: 2, kind: input, shape index: {}]
  %s3 = inlined_call_operand.hbm [shape: f32[256,128], index: 3, kind: output, shape index: {}]
  %s4 = sld [smem:[#allocation0]]
  $region45: #{fe_forward.5} parent=0
    _
  %s6 = ssub.s32 1, %s4
  %s7 = scalar_select 0, %s6, %s4
  $region1: #{fe_forward.5} parent=0
    #allocation2 [shape = 'u8[131072]{0}', space=vmem, size = 0x20000, scoped, tag = 'output window, operand 0']
    #allocation3 [shape = 's32[2]{0}', space=sflag, size = 0x8, scoped, tag = 'scoped memory for fe_forward.5']
    %8 = vsyncpa [#allocation3], 0
    %s9 = scalar_lea.sflag [#allocation3], 1
    %10 = vsyncpa %s9, 0
    loop: start=0, step=1, limit=4
    $region2: #{fe_forward.5} parent=1 // loop_pre_header
      _
    $region3: #{fe_forward.5} parent=1 // loop_header
      %s12 = sphi 0, %s16
      %p13 = scmp.ge.s32.totalorder %s12, 4
      %s22 = sphi 0, %s24
      %s25 = sphi 0, %s22
      %s26 = sphi 0, %s25
      %s42 = sphi 0, %s26
      %s46 = sphi 0, %s46
      %s48 = sphi 0, %s46
      %s49 = sphi 0, %s48
      %s63 = sphi 0, %s49
      %s67 = sphi 0, %s67
      %s69 = sphi 0, %s67
      %s70 = sphi 0, %s69
      %s84 = sphi 0, %s70
      %s90 = sphi 0, %s92
      %s93 = sphi 0, %s90
      %s94 = sphi 0, %s93
      %s110 = sphi 0, %s94
    $region4: #{fe_forward.5} parent=1 // loop_header_branch
      %15 = sbr.rel (%p13) target = $region8
    $region5: #{fe_forward.5} parent=1 // loop_body
      %s17 = ssub.s32 %s12, 1
      %s18 = ssub.s32 %s12, 2
      %s19 = sadd.s32 %s12, 1
      %s20 = ssub.s32 %s12, %s19
      %p21 = scmp.eq.s32.totalorder %s20, 0
      %s23 = sadd.s32 %s22, 1
      %s24 = scalar_select %p21, %s22, %s23
      %p27 = pneg %p21
      %p28 = scmp.eq.s32.totalorder %s12, 1
      %p29 = por %p27, %p28
      %p30 = scmp.ne.s32.totalorder %s22, %s25
      %p31 = scmp.eq.s32.totalorder %s12, 0
      %p32 = por %p30, %p31
      %p33 = scmp.ne.s32.totalorder %s22, %s25
      %p34 = scmp.eq.s32.totalorder %s17, 1
      %p35 = por %p33, %p34
      %p36 = scmp.ne.s32.totalorder %s25, %s26
      %p37 = scmp.eq.s32.totalorder %s17, 0
      %p38 = por %p36, %p37
      %p39 = scmp.ne.s32.totalorder %s25, %s26
      %p40 = scmp.eq.s32.totalorder %s18, 1
      %p41 = por %p39, %p40
      %p43 = scmp.ne.s32.totalorder %s26, %s42
      %p44 = scmp.eq.s32.totalorder %s18, 0
      %p45 = por %p43, %p44
      %s47 = sadd.s32 %s46, 1
      %p50 = scmp.eq.s32.totalorder %s12, 1
      %p51 = scmp.ne.s32.totalorder %s46, %s48
      %p52 = scmp.eq.s32.totalorder %s12, 0
      %p53 = por %p51, %p52
      %p54 = scmp.ne.s32.totalorder %s46, %s48
      %p55 = scmp.eq.s32.totalorder %s17, 1
      %p56 = por %p54, %p55
      %p57 = scmp.ne.s32.totalorder %s48, %s49
      %p58 = scmp.eq.s32.totalorder %s17, 0
      %p59 = por %p57, %p58
      %p60 = scmp.ne.s32.totalorder %s48, %s49
      %p61 = scmp.eq.s32.totalorder %s18, 1
      %p62 = por %p60, %p61
      %p64 = scmp.ne.s32.totalorder %s49, %s63
      %p65 = scmp.eq.s32.totalorder %s18, 0
      %p66 = por %p64, %p65
      %s68 = sadd.s32 %s67, 1
      %p71 = scmp.eq.s32.totalorder %s12, 1
      %p72 = scmp.ne.s32.totalorder %s67, %s69
      %p73 = scmp.eq.s32.totalorder %s12, 0
      %p74 = por %p72, %p73
      %p75 = scmp.ne.s32.totalorder %s67, %s69
      %p76 = scmp.eq.s32.totalorder %s17, 1
      %p77 = por %p75, %p76
      %p78 = scmp.ne.s32.totalorder %s69, %s70
      %p79 = scmp.eq.s32.totalorder %s17, 0
      %p80 = por %p78, %p79
      %p81 = scmp.ne.s32.totalorder %s69, %s70
      %p82 = scmp.eq.s32.totalorder %s18, 1
      %p83 = por %p81, %p82
      %p85 = scmp.ne.s32.totalorder %s70, %s84
      %p86 = scmp.eq.s32.totalorder %s18, 0
      %p87 = por %p85, %p86
      %s88 = ssub.s32 %s12, %s19
      %p89 = scmp.eq.s32.totalorder %s88, 0
      %s91 = sadd.s32 %s90, 1
      %s92 = scalar_select %p89, %s90, %s91
      %p95 = pneg %p89
      %p96 = scmp.eq.s32.totalorder %s12, 1
      %p97 = por %p95, %p96
      %p98 = scmp.ne.s32.totalorder %s90, %s93
      %p99 = scmp.eq.s32.totalorder %s12, 0
      %p100 = por %p98, %p99
      %p101 = scmp.ne.s32.totalorder %s90, %s93
      %p102 = scmp.eq.s32.totalorder %s17, 1
      %p103 = por %p101, %p102
      %p104 = scmp.ne.s32.totalorder %s93, %s94
      %p105 = scmp.eq.s32.totalorder %s17, 0
      %p106 = por %p104, %p105
      %p107 = scmp.ne.s32.totalorder %s93, %s94
      %p108 = scmp.eq.s32.totalorder %s18, 1
      %p109 = por %p107, %p108
      %p111 = scmp.ne.s32.totalorder %s94, %s110
      %p112 = scmp.eq.s32.totalorder %s18, 0
      %p113 = por %p111, %p112
      %p114 = scmp.le.s32.totalorder 1, %s12
      %p115 = scmp.lt.s32.totalorder %s12, 3
      %p116 = pnand %p114, %p115
      %p117 = pneg %p116
      // Predicated region
      $region9: #{fe_forward.5} parent=5 // pred_check
        _
      $region10: #{fe_forward.5} parent=5 // pred_check_branch
        %119 = sbr.rel (%p116) target = $region12
      $region11: #{fe_forward.5} parent=5 // pred_region
        %s120 = ssub.s32 %s12, 1
        // Predicated region
        $region13: #{fe_forward.5} parent=11 // pred_check
          %p121 = pneg %p59
        $region14: #{fe_forward.5} parent=11 // pred_check_branch
          %123 = sbr.rel (%p121) target = $region16
        $region15: #{fe_forward.5} parent=11 // pred_region
          _
        $region16: #{fe_forward.5} parent=11 // pred_fallthru
          _
        // Predicated region
        $region17: #{fe_forward.5} parent=11 // pred_check
          %p124 = pneg %p80
        $region18: #{fe_forward.5} parent=11 // pred_check_branch
          %126 = sbr.rel (%p124) target = $region20
        $region19: #{fe_forward.5} parent=11 // pred_region
          _
        $region20: #{fe_forward.5} parent=11 // pred_fallthru
          _
      $region12: #{fe_forward.5} parent=5 // pred_fallthru
        _
      %p127 = scmp.lt.s32.totalorder %s12, 2
      // Predicated region
      $region21: #{fe_forward.5} parent=5 // pred_check
        %p128 = pneg %p127
      $region22: #{fe_forward.5} parent=5 // pred_check_branch
        %130 = sbr.rel (%p128) target = $region24
      $region23: #{fe_forward.5} parent=5 // pred_region
        // Predicated region
        $region25: #{fe_forward.5} parent=23 // pred_check
          %p131 = pneg %p32
        $region26: #{fe_forward.5} parent=23 // pred_check_branch
          %133 = sbr.rel (%p131) target = $region28
        $region27: #{fe_forward.5} parent=23 // pred_region
          %s134 = smul.u32 16, %s12
          %p135 = scmp.lt.s32.totalorder %s134, 31
          %s136 = scalar_select %p135, %s134, 31
          %s137 = smul.addr %s136, 8
          %s138 = scalar_lea.vmem %s0, %s137
          %s139 = smul.u32 16, %s12
        $region28: #{fe_forward.5} parent=23 // pred_fallthru
          _
      $region24: #{fe_forward.5} parent=5 // pred_fallthru
        _
      %p140 = scmp.le.s32.totalorder 1, %s12
      %p141 = scmp.lt.s32.totalorder %s12, 3
      %p142 = pnand %p140, %p141
      %p143 = pneg %p142
      // Predicated region
      $region29: #{fe_forward.5} parent=5 // pred_check
        _
      $region30: #{fe_forward.5} parent=5 // pred_check_branch
        %145 = sbr.rel (%p142) target = $region32
      $region31: #{fe_forward.5} parent=5 // pred_region
        %s146 = ssub.s32 %s12, 1
        %s147 = smul.u32 16, %s17
        %p148 = scmp.lt.s32.totalorder %s147, 31
        %s149 = scalar_select %p148, %s147, 31
        %s150 = smul.addr %s149, 8
        %s151 = scalar_lea.vmem %s0, %s150
        %p152 = pneg %p38
        %p153 = pneg %p35
        %p154 = pneg %p59
        %p155 = pneg %p56
        %p156 = pneg %p80
        %p157 = pneg %p77
        %p158 = pneg %p106
        %p159 = pneg %p103
        %s160 = sand.u32 %s93, 1
        %s161 = scalar_lea.sflag [#allocation3], %s160
        %s162 = sand.u32 %s93, 1
        %s163 = smul.addr %s162, 128
        %s164 = scalar_lea.vmem [#allocation2], %s163
        %s165 = smul.u32 16, %s17
        %p166 = scmp.lt.s32.totalorder %s165, 31
        %s167 = scalar_select %p166, %s165, 31
        %s168 = smul.addr %s167, 8
        %s169 = scalar_lea.vmem %s0, %s168
        %s170 = smul.u32 16, %s17
        %s171 = smul.u32 16, %s17
        %v172 = vld [vmem:[%s169] sm:$0xff]
        %v173 = vld [vmem:[%s169 + $0x8] sm:$0xff]
        %v174 = vld [vmem:[%s169 + $0x10] sm:$0xff]
        %v175 = vld [vmem:[%s169 + $0x18] sm:$0xff]
        %v176 = vld [vmem:[%s169 + $0x20] sm:$0xff]
        %v177 = vld [vmem:[%s169 + $0x28] sm:$0xff]
        %v178 = vld [vmem:[%s169 + $0x30] sm:$0xff]
        %v179 = vld [vmem:[%s169 + $0x38] sm:$0xff]
        %v180 = vld [vmem:[%s169 + $0x40] sm:$0xff]
        %v181 = vld [vmem:[%s169 + $0x48] sm:$0xff]
        %v182 = vld [vmem:[%s169 + $0x50] sm:$0xff]
        %v183 = vld [vmem:[%s169 + $0x58] sm:$0xff]
        %v184 = vld [vmem:[%s169 + $0x60] sm:$0xff]
        %v185 = vld [vmem:[%s169 + $0x68] sm:$0xff]
        %v186 = vld [vmem:[%s169 + $0x70] sm:$0xff]
        %v187 = vld [vmem:[%s169 + $0x78] sm:$0xff]
        %v188 = vld [vmem:[%s1] sm:$0x1]
        %v190 = vlaneseq
        %v191 = vshrl.u32 %v190, 7
        %v192 = vsub.s32 0, %v191
        %v193 = vrot.slane %v188, %v192
        %v195 = vmul.f32 %v172, %v193
        %v196 = vmul.f32 %v173, %v193
        %v197 = vmul.f32 %v174, %v193
        %v198 = vmul.f32 %v175, %v193
        %v199 = vmul.f32 %v176, %v193
        %v200 = vmul.f32 %v177, %v193
        %v201 = vmul.f32 %v178, %v193
        %v202 = vmul.f32 %v179, %v193
        %v203 = vmul.f32 %v180, %v193
        %v204 = vmul.f32 %v181, %v193
        %v205 = vmul.f32 %v182, %v193
        %v206 = vmul.f32 %v183, %v193
        %v207 = vmul.f32 %v184, %v193
        %v208 = vmul.f32 %v185, %v193
        %v209 = vmul.f32 %v186, %v193
        %v210 = vmul.f32 %v187, %v193
        %v211 = vld [vmem:[%s2] sm:$0x1]
        %v213 = vlaneseq
        %v214 = vshrl.u32 %v213, 7
        %v215 = vsub.s32 0, %v214
        %v216 = vrot.slane %v211, %v215
        %v218 = vadd.f32 %v195, %v216
        %v219 = vadd.f32 %v196, %v216
        %v220 = vadd.f32 %v197, %v216
        %v221 = vadd.f32 %v198, %v216
        %v222 = vadd.f32 %v199, %v216
        %v223 = vadd.f32 %v200, %v216
        %v224 = vadd.f32 %v201, %v216
        %v225 = vadd.f32 %v202, %v216
        %v226 = vadd.f32 %v203, %v216
        %v227 = vadd.f32 %v204, %v216
        %v228 = vadd.f32 %v205, %v216
        %v229 = vadd.f32 %v206, %v216
        %v230 = vadd.f32 %v207, %v216
        %v231 = vadd.f32 %v208, %v216
        %v232 = vadd.f32 %v209, %v216
        %v233 = vadd.f32 %v210, %v216
        %v234 = vmax.f32 %v218, 0.0
        %v235 = vmax.f32 %v219, 0.0
        %v236 = vmax.f32 %v220, 0.0
        %v237 = vmax.f32 %v221, 0.0
        %v238 = vmax.f32 %v222, 0.0
        %v239 = vmax.f32 %v223, 0.0
        %v240 = vmax.f32 %v224, 0.0
        %v241 = vmax.f32 %v225, 0.0
        %v242 = vmax.f32 %v226, 0.0
        %v243 = vmax.f32 %v227, 0.0
        %v244 = vmax.f32 %v228, 0.0
        %v245 = vmax.f32 %v229, 0.0
        %v246 = vmax.f32 %v230, 0.0
        %v247 = vmax.f32 %v231, 0.0
        %v248 = vmax.f32 %v232, 0.0
        %v249 = vmax.f32 %v233, 0.0
        %250 = vst [vmem:[%s164] sm:$0xff] %v234
        %251 = vst [vmem:[%s164 + $0x8] sm:$0xff] %v235
        %252 = vst [vmem:[%s164 + $0x10] sm:$0xff] %v236
        %253 = vst [vmem:[%s164 + $0x18] sm:$0xff] %v237
        %254 = vst [vmem:[%s164 + $0x20] sm:$0xff] %v238
        %255 = vst [vmem:[%s164 + $0x28] sm:$0xff] %v239
        %256 = vst [vmem:[%s164 + $0x30] sm:$0xff] %v240
        %257 = vst [vmem:[%s164 + $0x38] sm:$0xff] %v241
        %258 = vst [vmem:[%s164 + $0x40] sm:$0xff] %v242
        %259 = vst [vmem:[%s164 + $0x48] sm:$0xff] %v243
        %260 = vst [vmem:[%s164 + $0x50] sm:$0xff] %v244
        %261 = vst [vmem:[%s164 + $0x58] sm:$0xff] %v245
        %262 = vst [vmem:[%s164 + $0x60] sm:$0xff] %v246
        %263 = vst [vmem:[%s164 + $0x68] sm:$0xff] %v247
        %264 = vst [vmem:[%s164 + $0x70] sm:$0xff] %v248
        %265 = vst [vmem:[%s164 + $0x78] sm:$0xff] %v249
        %s266 = sand.u32 %s93, 1
        %s267 = scalar_lea.sflag [#allocation3], %s266
        %s268 = sand.u32 %s93, 1
        %s269 = smul.addr %s268, 128
        %s270 = scalar_lea.vmem [#allocation2], %s269
        // Predicated region
        $region33: #{fe_forward.5} parent=31 // pred_check
          %p271 = pneg %p103
        $region34: #{fe_forward.5} parent=31 // pred_check_branch
          %273 = sbr.rel (%p271) target = $region36
        $region35: #{fe_forward.5} parent=31 // pred_region
          %s274 = smul.u32 16, %s17
          %s276 = ssub.s32 2048, 2048
          %277 = vsyncadd %s267, %s276
          %s278 = smul.addr %s274, 128
          %s279 = scalar_lea.hbm %s3, %s278
          %s280 = sshll.u32 %s270, 4
          %s281 = int_to_ptr.vmem [resolvable:$true] %s280
          %286 = dma.vmem_to_hbm [thread:$0]  %s281, 2048, %s279, %s267, 128, 128, 8
        $region36: #{fe_forward.5} parent=31 // pred_fallthru
          _
      $region32: #{fe_forward.5} parent=5 // pred_fallthru
        _
      %p287 = scmp.le.s32.totalorder 2, %s12
      // Predicated region
      $region37: #{fe_forward.5} parent=5 // pred_check
        %p288 = pneg %p287
      $region38: #{fe_forward.5} parent=5 // pred_check_branch
        %290 = sbr.rel (%p288) target = $region40
      $region39: #{fe_forward.5} parent=5 // pred_region
        %s291 = ssub.s32 %s12, 2
        // Predicated region
        $region41: #{fe_forward.5} parent=39 // pred_check
          %p292 = pneg %p109
        $region42: #{fe_forward.5} parent=39 // pred_check_branch
          %294 = sbr.rel (%p292) target = $region44
        $region43: #{fe_forward.5} parent=39 // pred_region
          %s295 = sand.u32 %s94, 1
          %s296 = scalar_lea.sflag [#allocation3], %s295
          %s297 = sand.u32 %s94, 1
          %s298 = smul.addr %s297, 128
          %s299 = scalar_lea.vmem [#allocation2], %s298
          %300 = dma.done %s296, 2048
        $region44: #{fe_forward.5} parent=39 // pred_fallthru
          _
      $region40: #{fe_forward.5} parent=5 // pred_fallthru
        _
    $region6: #{fe_forward.5} parent=1 // loop_footer
      %s16 = sadd.s32 1, %s12
    $region7: #{fe_forward.5} parent=1 // loop_footer_branch
      %11 = sbr.rel target = $region3
    $region8: #{fe_forward.5} parent=1 // loop_exit
      _
    %301 = vsyncpa [#allocation3], 1
    %s302 = scalar_lea.sflag [#allocation3], 1
    %303 = vsyncpa %s302, 1

// kernel: fe_forward.3
$region0: #{fe_forward.3}
  #allocation0 [shape = 'u32[]', space=smem, size = 0x4, offset = 0x4, fixed_abs, tag = 'smem constant byte address 0x4 - core index']
  #allocation1 [shape = 'u32[144,128]{1,0:T(1,128)}', space=vmem, size = 0x12000, scoped, tag = 'internal scratch']
  %s0 = inlined_call_operand.vmem [shape: f32[256,128], index: 0, kind: input, shape index: {}]
  %s1 = inlined_call_operand.vmem [shape: bf16[128,512], index: 1, kind: input, shape index: {}]
  %s2 = inlined_call_operand.vmem [shape: f32[256,512], index: 2, kind: output, shape index: {0}]
  %s3 = inlined_call_operand.vmem [shape: f32[2,1,512], index: 3, kind: output, shape index: {1}]
  %s4 = inlined_call_operand.vmem [shape: f32[2,1,512], index: 4, kind: output, shape index: {2}]
  %5 = xla_tuple %s2, %s3, %s4
  %s6 = sld [smem:[#allocation0]]
  $region57: #{fe_forward.3} parent=0
    _
  %s8 = ssub.s32 1, %s6
  %s9 = scalar_select 0, %s8, %s6
  loop: start=0, step=1, limit=4
  $region2: #{fe_forward.3} parent=0 // loop_pre_header
    _
  $region3: #{fe_forward.3} parent=0 // loop_header
    %s11 = sphi 0, %s15
    %p12 = scmp.ge.s32.totalorder %s11, 4
    %s21 = sphi 0, %s23
    %s24 = sphi 0, %s21
    %s25 = sphi 0, %s24
    %s41 = sphi 0, %s25
    %s45 = sphi 0, %s45
    %s47 = sphi 0, %s45
    %s48 = sphi 0, %s47
    %s62 = sphi 0, %s48
    %s68 = sphi 0, %s70
    %s71 = sphi 0, %s68
    %s72 = sphi 0, %s71
    %s88 = sphi 0, %s72
    %s94 = sphi 0, %s96
    %s97 = sphi 0, %s94
    %s98 = sphi 0, %s97
    %s114 = sphi 0, %s98
    %s120 = sphi 0, %s122
    %s123 = sphi 0, %s120
    %s124 = sphi 0, %s123
    %s140 = sphi 0, %s124
  $region4: #{fe_forward.3} parent=0 // loop_header_branch
    %14 = sbr.rel (%p12) target = $region8
  $region5: #{fe_forward.3} parent=0 // loop_body
    %s16 = ssub.s32 %s11, 1
    %s17 = ssub.s32 %s11, 2
    %s18 = sadd.s32 %s11, 1
    %s19 = ssub.s32 %s11, %s18
    %p20 = scmp.eq.s32.totalorder %s19, 0
    %s22 = sadd.s32 %s21, 1
    %s23 = scalar_select %p20, %s21, %s22
    %p26 = pneg %p20
    %p27 = scmp.eq.s32.totalorder %s11, 1
    %p28 = por %p26, %p27
    %p29 = scmp.ne.s32.totalorder %s21, %s24
    %p30 = scmp.eq.s32.totalorder %s11, 0
    %p31 = por %p29, %p30
    %p32 = scmp.ne.s32.totalorder %s21, %s24
    %p33 = scmp.eq.s32.totalorder %s16, 1
    %p34 = por %p32, %p33
    %p35 = scmp.ne.s32.totalorder %s24, %s25
    %p36 = scmp.eq.s32.totalorder %s16, 0
    %p37 = por %p35, %p36
    %p38 = scmp.ne.s32.totalorder %s24, %s25
    %p39 = scmp.eq.s32.totalorder %s17, 1
    %p40 = por %p38, %p39
    %p42 = scmp.ne.s32.totalorder %s25, %s41
    %p43 = scmp.eq.s32.totalorder %s17, 0
    %p44 = por %p42, %p43
    %s46 = sadd.s32 %s45, 1
    %p49 = scmp.eq.s32.totalorder %s11, 1
    %p50 = scmp.ne.s32.totalorder %s45, %s47
    %p51 = scmp.eq.s32.totalorder %s11, 0
    %p52 = por %p50, %p51
    %p53 = scmp.ne.s32.totalorder %s45, %s47
    %p54 = scmp.eq.s32.totalorder %s16, 1
    %p55 = por %p53, %p54
    %p56 = scmp.ne.s32.totalorder %s47, %s48
    %p57 = scmp.eq.s32.totalorder %s16, 0
    %p58 = por %p56, %p57
    %p59 = scmp.ne.s32.totalorder %s47, %s48
    %p60 = scmp.eq.s32.totalorder %s17, 1
    %p61 = por %p59, %p60
    %p63 = scmp.ne.s32.totalorder %s48, %s62
    %p64 = scmp.eq.s32.totalorder %s17, 0
    %p65 = por %p63, %p64
    %s66 = ssub.s32 %s11, %s18
    %p67 = scmp.eq.s32.totalorder %s66, 0
    %s69 = sadd.s32 %s68, 1
    %s70 = scalar_select %p67, %s68, %s69
    %p73 = pneg %p67
    %p74 = scmp.eq.s32.totalorder %s11, 1
    %p75 = por %p73, %p74
    %p76 = scmp.ne.s32.totalorder %s68, %s71
    %p77 = scmp.eq.s32.totalorder %s11, 0
    %p78 = por %p76, %p77
    %p79 = scmp.ne.s32.totalorder %s68, %s71
    %p80 = scmp.eq.s32.totalorder %s16, 1
    %p81 = por %p79, %p80
    %p82 = scmp.ne.s32.totalorder %s71, %s72
    %p83 = scmp.eq.s32.totalorder %s16, 0
    %p84 = por %p82, %p83
    %p85 = scmp.ne.s32.totalorder %s71, %s72
    %p86 = scmp.eq.s32.totalorder %s17, 1
    %p87 = por %p85, %p86
    %p89 = scmp.ne.s32.totalorder %s72, %s88
    %p90 = scmp.eq.s32.totalorder %s17, 0
    %p91 = por %p89, %p90
    %s92 = ssub.s32 %s11, %s18
    %p93 = scmp.eq.s32.totalorder %s92, 0
    %s95 = sadd.s32 %s94, 1
    %s96 = scalar_select %p93, %s94, %s95
    %p99 = pneg %p93
    %p100 = scmp.eq.s32.totalorder %s11, 1
    %p101 = por %p99, %p100
    %p102 = scmp.ne.s32.totalorder %s94, %s97
    %p103 = scmp.eq.s32.totalorder %s11, 0
    %p104 = por %p102, %p103
    %p105 = scmp.ne.s32.totalorder %s94, %s97
    %p106 = scmp.eq.s32.totalorder %s16, 1
    %p107 = por %p105, %p106
    %p108 = scmp.ne.s32.totalorder %s97, %s98
    %p109 = scmp.eq.s32.totalorder %s16, 0
    %p110 = por %p108, %p109
    %p111 = scmp.ne.s32.totalorder %s97, %s98
    %p112 = scmp.eq.s32.totalorder %s17, 1
    %p113 = por %p111, %p112
    %p115 = scmp.ne.s32.totalorder %s98, %s114
    %p116 = scmp.eq.s32.totalorder %s17, 0
    %p117 = por %p115, %p116
    %s118 = ssub.s32 %s11, %s18
    %p119 = scmp.eq.s32.totalorder %s118, 0
    %s121 = sadd.s32 %s120, 1
    %s122 = scalar_select %p119, %s120, %s121
    %p125 = pneg %p119
    %p126 = scmp.eq.s32.totalorder %s11, 1
    %p127 = por %p125, %p126
    %p128 = scmp.ne.s32.totalorder %s120, %s123
    %p129 = scmp.eq.s32.totalorder %s11, 0
    %p130 = por %p128, %p129
    %p131 = scmp.ne.s32.totalorder %s120, %s123
    %p132 = scmp.eq.s32.totalorder %s16, 1
    %p133 = por %p131, %p132
    %p134 = scmp.ne.s32.totalorder %s123, %s124
    %p135 = scmp.eq.s32.totalorder %s16, 0
    %p136 = por %p134, %p135
    %p137 = scmp.ne.s32.totalorder %s123, %s124
    %p138 = scmp.eq.s32.totalorder %s17, 1
    %p139 = por %p137, %p138
    %p141 = scmp.ne.s32.totalorder %s124, %s140
    %p142 = scmp.eq.s32.totalorder %s17, 0
    %p143 = por %p141, %p142
    %p144 = scmp.le.s32.totalorder 1, %s11
    %p145 = scmp.lt.s32.totalorder %s11, 3
    %p146 = pnand %p144, %p145
    %p147 = pneg %p146
    // Predicated region
    $region9: #{fe_forward.3} parent=5 // pred_check
      _
    $region10: #{fe_forward.3} parent=5 // pred_check_branch
      %149 = sbr.rel (%p146) target = $region12
    $region11: #{fe_forward.3} parent=5 // pred_region
      %s150 = ssub.s32 %s11, 1
      // Predicated region
      $region13: #{fe_forward.3} parent=11 // pred_check
        %p151 = pneg %p58
      $region14: #{fe_forward.3} parent=11 // pred_check_branch
        %153 = sbr.rel (%p151) target = $region16
      $region15: #{fe_forward.3} parent=11 // pred_region
        _
      $region16: #{fe_forward.3} parent=11 // pred_fallthru
        _
    $region12: #{fe_forward.3} parent=5 // pred_fallthru
      _
    %p154 = scmp.lt.s32.totalorder %s11, 2
    // Predicated region
    $region17: #{fe_forward.3} parent=5 // pred_check
      %p155 = pneg %p154
    $region18: #{fe_forward.3} parent=5 // pred_check_branch
      %157 = sbr.rel (%p155) target = $region20
    $region19: #{fe_forward.3} parent=5 // pred_region
      // Predicated region
      $region21: #{fe_forward.3} parent=19 // pred_check
        %p158 = pneg %p31
      $region22: #{fe_forward.3} parent=19 // pred_check_branch
        %160 = sbr.rel (%p158) target = $region24
      $region23: #{fe_forward.3} parent=19 // pred_region
        %s161 = smul.u32 16, %s11
        %p162 = scmp.lt.s32.totalorder %s161, 31
        %s163 = scalar_select %p162, %s161, 31
        %s164 = smul.addr %s163, 8
        %s165 = scalar_lea.vmem %s0, %s164
        %s166 = smul.u32 16, %s11
      $region24: #{fe_forward.3} parent=19 // pred_fallthru
        _
    $region20: #{fe_forward.3} parent=5 // pred_fallthru
      _
    %p167 = scmp.le.s32.totalorder 1, %s11
    %p168 = scmp.lt.s32.totalorder %s11, 3
    %p169 = pnand %p167, %p168
    %p170 = pneg %p169
    // Predicated region
    $region25: #{fe_forward.3} parent=5 // pred_check
      _
    $region26: #{fe_forward.3} parent=5 // pred_check_branch
      %172 = sbr.rel (%p169) target = $region28
    $region27: #{fe_forward.3} parent=5 // pred_region
      %s173 = ssub.s32 %s11, 1
      %s174 = smul.u32 16, %s16
      %p175 = scmp.lt.s32.totalorder %s174, 31
      %s176 = scalar_select %p175, %s174, 31
      %s177 = smul.addr %s176, 8
      %s178 = scalar_lea.vmem %s0, %s177
      %p179 = pneg %p37
      %p180 = pneg %p34
      %p181 = pneg %p58
      %p182 = pneg %p55
      %p183 = pneg %p84
      %p184 = pneg %p81
      %s185 = smul.u32 16, %s16
      %p186 = scmp.lt.s32.totalorder %s185, 31
      %s187 = scalar_select %p186, %s185, 31
      %s188 = smul.addr %s187, 4
      %s189 = smul.addr %s188, 8
      %s190 = scalar_lea.vmem %s2, %s189
      %p191 = pneg %p110
      %p192 = pneg %p107
      %p193 = scmp.lt.s32.totalorder %s16, 1
      %s194 = scalar_select %p193, %s16, 1
      %s195 = smul.addr %s194, 4
      %s196 = scalar_lea.vmem %s3, %s195
      %p197 = pneg %p136
      %p198 = pneg %p133
      %p199 = scmp.lt.s32.totalorder %s16, 1
      %s200 = scalar_select %p199, %s16, 1
      %s201 = smul.addr %s200, 4
      %s202 = scalar_lea.vmem %s4, %s201
      %s203 = smul.u32 16, %s16
      %p204 = scmp.lt.s32.totalorder %s203, 31
      %s205 = scalar_select %p204, %s203, 31
      %s206 = smul.addr %s205, 8
      %s207 = scalar_lea.vmem %s0, %s206
      %s208 = smul.u32 16, %s16
      %s209 = smul.u32 16, %s16
      %p210 = scmp.lt.s32.totalorder %s209, 31
      %s211 = scalar_select %p210, %s209, 31
      %s212 = smul.addr %s211, 4
      %s213 = smul.addr %s212, 8
      %s214 = scalar_lea.vmem %s2, %s213
      %s215 = smul.u32 16, %s16
      %p216 = scmp.lt.s32.totalorder %s16, 1
      %s217 = scalar_select %p216, %s16, 1
      %s218 = smul.addr %s217, 4
      %s219 = scalar_lea.vmem %s3, %s218
      %p220 = scmp.lt.s32.totalorder %s16, 1
      %s221 = scalar_select %p220, %s16, 1
      %s222 = smul.addr %s221, 4
      %s223 = scalar_lea.vmem %s4, %s222
      %v225 = vld [vmem:[%s207] sm:$0xff]
      %v226 = vld [vmem:[%s207 + $0x8] sm:$0xff]
      %v227 = vld [vmem:[%s207 + $0x10] sm:$0xff]
      %v228 = vld [vmem:[%s207 + $0x18] sm:$0xff]
      %v229 = vld [vmem:[%s207 + $0x20] sm:$0xff]
      %v230 = vld [vmem:[%s207 + $0x28] sm:$0xff]
      %v231 = vld [vmem:[%s207 + $0x30] sm:$0xff]
      %v232 = vld [vmem:[%s207 + $0x38] sm:$0xff]
      %v233 = vld [vmem:[%s207 + $0x40] sm:$0xff]
      %v234 = vld [vmem:[%s207 + $0x48] sm:$0xff]
      %v235 = vld [vmem:[%s207 + $0x50] sm:$0xff]
      %v236 = vld [vmem:[%s207 + $0x58] sm:$0xff]
      %v237 = vld [vmem:[%s207 + $0x60] sm:$0xff]
      %v238 = vld [vmem:[%s207 + $0x68] sm:$0xff]
      %v239 = vld [vmem:[%s207 + $0x70] sm:$0xff]
      %v240 = vld [vmem:[%s207 + $0x78] sm:$0xff]
      %v241 = vpack.c.bf16 %v226, %v225
      %v242 = vpack.c.bf16 %v228, %v227
      %v243 = vpack.c.bf16 %v230, %v229
      %v244 = vpack.c.bf16 %v232, %v231
      %v245 = vpack.c.bf16 %v234, %v233
      %v246 = vpack.c.bf16 %v236, %v235
      %v247 = vpack.c.bf16 %v238, %v237
      %v248 = vpack.c.bf16 %v240, %v239
      %v249 = vld [vmem:[%s1] sm:$0xff]
      %v250 = vld [vmem:[%s1 + $0x8] sm:$0xff]
      %v251 = vld [vmem:[%s1 + $0x10] sm:$0xff]
      %v252 = vld [vmem:[%s1 + $0x18] sm:$0xff]
      %v253 = vld [vmem:[%s1 + $0x20] sm:$0xff]
      %v254 = vld [vmem:[%s1 + $0x28] sm:$0xff]
      %v255 = vld [vmem:[%s1 + $0x30] sm:$0xff]
      %v256 = vld [vmem:[%s1 + $0x38] sm:$0xff]
      %v257 = vld [vmem:[%s1 + $0x40] sm:$0xff]
      %v258 = vld [vmem:[%s1 + $0x48] sm:$0xff]
      %v259 = vld [vmem:[%s1 + $0x50] sm:$0xff]
      %v260 = vld [vmem:[%s1 + $0x58] sm:$0xff]
      %v261 = vld [vmem:[%s1 + $0x60] sm:$0xff]
      %v262 = vld [vmem:[%s1 + $0x68] sm:$0xff]
      %v263 = vld [vmem:[%s1 + $0x70] sm:$0xff]
      %v264 = vld [vmem:[%s1 + $0x78] sm:$0xff]
      %v265 = vld [vmem:[%s1 + $0x80] sm:$0xff]
      %v266 = vld [vmem:[%s1 + $0x88] sm:$0xff]
      %v267 = vld [vmem:[%s1 + $0x90] sm:$0xff]
      %v268 = vld [vmem:[%s1 + $0x98] sm:$0xff]
      %v269 = vld [vmem:[%s1 + $0xa0] sm:$0xff]
      %v270 = vld [vmem:[%s1 + $0xa8] sm:$0xff]
      %v271 = vld [vmem:[%s1 + $0xb0] sm:$0xff]
      %v272 = vld [vmem:[%s1 + $0xb8] sm:$0xff]
      %v273 = vld [vmem:[%s1 + $0xc0] sm:$0xff]
      %v274 = vld [vmem:[%s1 + $0xc8] sm:$0xff]
      %v275 = vld [vmem:[%s1 + $0xd0] sm:$0xff]
      %v276 = vld [vmem:[%s1 + $0xd8] sm:$0xff]
      %v277 = vld [vmem:[%s1 + $0xe0] sm:$0xff]
      %v278 = vld [vmem:[%s1 + $0xe8] sm:$0xff]
      %v279 = vld [vmem:[%s1 + $0xf0] sm:$0xff]
      %v280 = vld [vmem:[%s1 + $0xf8] sm:$0xff]
      %v313 = vunpack.c.l.b16 %v249
      %v314 = vunpack.c.h.b16 %v249
      %v315 = vunpack.c.l.b16 %v250
      %v316 = vunpack.c.h.b16 %v250
      %v317 = vunpack.c.l.b16 %v251
      %v318 = vunpack.c.h.b16 %v251
      %v319 = vunpack.c.l.b16 %v252
      %v320 = vunpack.c.h.b16 %v252
      %v321 = vunpack.c.l.b16 %v253
      %v322 = vunpack.c.h.b16 %v253
      %v323 = vunpack.c.l.b16 %v254
      %v324 = vunpack.c.h.b16 %v254
      %v325 = vunpack.c.l.b16 %v255
      %v326 = vunpack.c.h.b16 %v255
      %v327 = vunpack.c.l.b16 %v256
      %v328 = vunpack.c.h.b16 %v256
      %v329 = vunpack.c.l.b16 %v257
      %v330 = vunpack.c.h.b16 %v257
      %v331 = vunpack.c.l.b16 %v258
      %v332 = vunpack.c.h.b16 %v258
      %v333 = vunpack.c.l.b16 %v259
      %v334 = vunpack.c.h.b16 %v259
      %v335 = vunpack.c.l.b16 %v260
      %v336 = vunpack.c.h.b16 %v260
      %v337 = vunpack.c.l.b16 %v261
      %v338 = vunpack.c.h.b16 %v261
      %v339 = vunpack.c.l.b16 %v262
      %v340 = vunpack.c.h.b16 %v262
      %v341 = vunpack.c.l.b16 %v263
      %v342 = vunpack.c.h.b16 %v263
      %v343 = vunpack.c.l.b16 %v264
      %v344 = vunpack.c.h.b16 %v264
      %v345 = vunpack.c.l.b16 %v265
      %v346 = vunpack.c.h.b16 %v265
      %v347 = vunpack.c.l.b16 %v266
      %v348 = vunpack.c.h.b16 %v266
      %v349 = vunpack.c.l.b16 %v267
      %v350 = vunpack.c.h.b16 %v267
      %v351 = vunpack.c.l.b16 %v268
      %v352 = vunpack.c.h.b16 %v268
      %v353 = vunpack.c.l.b16 %v269
      %v354 = vunpack.c.h.b16 %v269
      %v355 = vunpack.c.l.b16 %v270
      %v356 = vunpack.c.h.b16 %v270
      %v357 = vunpack.c.l.b16 %v271
      %v358 = vunpack.c.h.b16 %v271
      %v359 = vunpack.c.l.b16 %v272
      %v360 = vunpack.c.h.b16 %v272
      %v361 = vunpack.c.l.b16 %v273
      %v362 = vunpack.c.h.b16 %v273
      %v363 = vunpack.c.l.b16 %v274
      %v364 = vunpack.c.h.b16 %v274
      %v365 = vunpack.c.l.b16 %v275
      %v366 = vunpack.c.h.b16 %v275
      %v367 = vunpack.c.l.b16 %v276
      %v368 = vunpack.c.h.b16 %v276
      %v369 = vunpack.c.l.b16 %v277
      %v370 = vunpack.c.h.b16 %v277
      %v371 = vunpack.c.l.b16 %v278
      %v372 = vunpack.c.h.b16 %v278
      %v373 = vunpack.c.l.b16 %v279
      %v374 = vunpack.c.h.b16 %v279
      %v375 = vunpack.c.l.b16 %v280
      %v376 = vunpack.c.h.b16 %v280
      %v377 = vpack.c.b16 %v317, %v313
      %v378 = vpack.c.b16 %v318, %v314
      %v379 = vpack.c.b16 %v319, %v315
      %v380 = vpack.c.b16 %v320, %v316
      %v381 = vpack.c.b16 %v325, %v321
      %v382 = vpack.c.b16 %v326, %v322
      %v383 = vpack.c.b16 %v327, %v323
      %v384 = vpack.c.b16 %v328, %v324
      %v385 = vpack.c.b16 %v333, %v329
      %v386 = vpack.c.b16 %v334, %v330
      %v387 = vpack.c.b16 %v335, %v331
      %v388 = vpack.c.b16 %v336, %v332
      %v389 = vpack.c.b16 %v341, %v337
      %v390 = vpack.c.b16 %v342, %v338
      %v391 = vpack.c.b16 %v343, %v339
      %v392 = vpack.c.b16 %v344, %v340
      %v393 = vpack.c.b16 %v349, %v345
      %v394 = vpack.c.b16 %v350, %v346
      %v395 = vpack.c.b16 %v351, %v347
      %v396 = vpack.c.b16 %v352, %v348
      %v397 = vpack.c.b16 %v357, %v353
      %v398 = vpack.c.b16 %v358, %v354
      %v399 = vpack.c.b16 %v359, %v355
      %v400 = vpack.c.b16 %v360, %v356
      %v401 = vpack.c.b16 %v365, %v361
      %v402 = vpack.c.b16 %v366, %v362
      %v403 = vpack.c.b16 %v367, %v363
      %v404 = vpack.c.b16 %v368, %v364
      %v405 = vpack.c.b16 %v373, %v369
      %v406 = vpack.c.b16 %v374, %v370
      %v407 = vpack.c.b16 %v375, %v371
      %v408 = vpack.c.b16 %v376, %v372
      %441 = vmatprep.subr.bf16.mxu0 %v378
      %442 = vmatpush1.bf16.msra.mxu0 %v377
      %443 = vmatprep.subr.bf16.mxu0 %v382
      %444 = vmatpush1.bf16.msra.mxu0 %v381
      %445 = vmatprep.subr.bf16.mxu0 %v386
      %446 = vmatpush1.bf16.msra.mxu0 %v385
      %447 = vmatprep.subr.bf16.mxu0 %v390
      %448 = vmatpush1.bf16.msra.mxu0 %v389
      %449 = vmatprep.subr.bf16.mxu0 %v394
      %450 = vmatpush1.bf16.msra.mxu0 %v393
      %451 = vmatprep.subr.bf16.mxu0 %v398
      %452 = vmatpush1.bf16.msra.mxu0 %v397
      %453 = vmatprep.subr.bf16.mxu0 %v402
      %454 = vmatpush1.bf16.msra.mxu0 %v401
      %455 = vmatprep.subr.bf16.mxu0 %v406
      %456 = vmatpush1.bf16.msra.mxu0 %v405
      %457 = vmatprep.subr.bf16.mxu0 0
      %458 = vmatpush1.bf16.msra.mxu0 0
      %459 = vmatprep.subr.bf16.mxu0 0
      %460 = vmatpush1.bf16.msra.mxu0 0
      %461 = vmatprep.subr.bf16.mxu0 0
      %462 = vmatpush1.bf16.msra.mxu0 0
      %463 = vmatprep.subr.bf16.mxu0 0
      %464 = vmatpush1.bf16.msra.mxu0 0
      %465 = vmatprep.subr.bf16.mxu0 0
      %466 = vmatpush1.bf16.msra.mxu0 0
      %467 = vmatprep.subr.bf16.mxu0 0
      %468 = vmatpush1.bf16.msra.mxu0 0
      %469 = vmatprep.subr.bf16.mxu0 0
      %470 = vmatpush1.bf16.msra.mxu0 0
      %471 = vmatprep.subr.bf16.mxu0 0
      %472 = vmatpush1.bf16.msra.mxu0 0
      %473 = vmatprep.mubr.bf16.mxu0 0
      %474 = vmatmul.mubr.bf16.gmra.mrb[0].mxu0 %v241
      %v475 = vpop.f32.mrb[0].mxu0
      %v476 = vadd.f32 0.0, %v475
      %v477 = vpop.f32.mrb[0].mxu0
      %v478 = vadd.f32 0.0, %v477
      %v479 = vpop.f32.mrb[0].mxu0
      %v480 = vadd.f32 0.0, %v479
      %v481 = vpop.f32.mrb[0].mxu0
      %v482 = vadd.f32 0.0, %v481
      %483 = vmatprep.mubr.bf16.mxu0 0
      %484 = vmatmul.mubr.bf16.gmra.mrb[0].mxu0 %v242
      %v485 = vpop.f32.mrb[0].mxu0
      %v486 = vadd.f32 0.0, %v485
      %v487 = vpop.f32.mrb[0].mxu0
      %v488 = vadd.f32 0.0, %v487
      %v489 = vpop.f32.mrb[0].mxu0
      %v490 = vadd.f32 0.0, %v489
      %v491 = vpop.f32.mrb[0].mxu0
      %v492 = vadd.f32 0.0, %v491
      %493 = vmatprep.mubr.bf16.mxu0 0
      %494 = vmatmul.mubr.bf16.gmra.mrb[0].mxu0 %v243
      %v495 = vpop.f32.mrb[0].mxu0
      %v496 = vadd.f32 0.0, %v495
      %v497 = vpop.f32.mrb[0].mxu0
      %v498 = vadd.f32 0.0, %v497
      %v499 = vpop.f32.mrb[0].mxu0
      %v500 = vadd.f32 0.0, %v499
      %v501 = vpop.f32.mrb[0].mxu0
      %v502 = vadd.f32 0.0, %v501
      %503 = vmatprep.mubr.bf16.mxu0 0
      %504 = vmatmul.mubr.bf16.gmra.mrb[0].mxu0 %v244
      %v505 = vpop.f32.mrb[0].mxu0
      %v506 = vadd.f32 0.0, %v505
      %v507 = vpop.f32.mrb[0].mxu0
      %v508 = vadd.f32 0.0, %v507
      %v509 = vpop.f32.mrb[0].mxu0
      %v510 = vadd.f32 0.0, %v509
      %v511 = vpop.f32.mrb[0].mxu0
      %v512 = vadd.f32 0.0, %v511
      %513 = vmatprep.mubr.bf16.mxu0 0
      %514 = vmatmul.mubr.bf16.gmra.mrb[0].mxu0 %v245
      %v515 = vpop.f32.mrb[0].mxu0
      %v516 = vadd.f32 0.0, %v515
      %v517 = vpop.f32.mrb[0].mxu0
      %v518 = vadd.f32 0.0, %v517
      %v519 = vpop.f32.mrb[0].mxu0
      %v520 = vadd.f32 0.0, %v519
      %v521 = vpop.f32.mrb[0].mxu0
      %v522 = vadd.f32 0.0, %v521
      %523 = vmatprep.mubr.bf16.mxu0 0
      %524 = vmatmul.mubr.bf16.gmra.mrb[0].mxu0 %v246
      %v525 = vpop.f32.mrb[0].mxu0
      %v526 = vadd.f32 0.0, %v525
      %v527 = vpop.f32.mrb[0].mxu0
      %v528 = vadd.f32 0.0, %v527
      %v529 = vpop.f32.mrb[0].mxu0
      %v530 = vadd.f32 0.0, %v529
      %v531 = vpop.f32.mrb[0].mxu0
      %v532 = vadd.f32 0.0, %v531
      %533 = vmatprep.mubr.bf16.mxu0 0
      %534 = vmatmul.mubr.bf16.gmra.mrb[0].mxu0 %v247
      %v535 = vpop.f32.mrb[0].mxu0
      %v536 = vadd.f32 0.0, %v535
      %v537 = vpop.f32.mrb[0].mxu0
      %v538 = vadd.f32 0.0, %v537
      %v539 = vpop.f32.mrb[0].mxu0
      %v540 = vadd.f32 0.0, %v539
      %v541 = vpop.f32.mrb[0].mxu0
      %v542 = vadd.f32 0.0, %v541
      %543 = vmatprep.mubr.bf16.mxu0 0
      %544 = vmatmul.mubr.bf16.gmra.mrb[0].mxu0 %v248
      %v545 = vpop.f32.mrb[0].mxu0
      %v546 = vadd.f32 0.0, %v545
      %v547 = vpop.f32.mrb[0].mxu0
      %v548 = vadd.f32 0.0, %v547
      %v549 = vpop.f32.mrb[0].mxu0
      %v550 = vadd.f32 0.0, %v549
      %v551 = vpop.f32.mrb[0].mxu0
      %v552 = vadd.f32 0.0, %v551
      %553 = vdwg.mxu0
      %554 = vmatprep.subr.bf16.mxu0 %v380
      %555 = vmatpush1.bf16.msra.mxu0 %v379
      %556 = vmatprep.subr.bf16.mxu0 %v384
      %557 = vmatpush1.bf16.msra.mxu0 %v383
      %558 = vmatprep.subr.bf16.mxu0 %v388
      %559 = vmatpush1.bf16.msra.mxu0 %v387
      %560 = vmatprep.subr.bf16.mxu0 %v392
      %561 = vmatpush1.bf16.msra.mxu0 %v391
      %562 = vmatprep.subr.bf16.mxu0 %v396
      %563 = vmatpush1.bf16.msra.mxu0 %v395
      %564 = vmatprep.subr.bf16.mxu0 %v400
      %565 = vmatpush1.bf16.msra.mxu0 %v399
      %566 = vmatprep.subr.bf16.mxu0 %v404
      %567 = vmatpush1.bf16.msra.mxu0 %v403
      %568 = vmatprep.subr.bf16.mxu0 %v408
      %569 = vmatpush1.bf16.msra.mxu0 %v407
      %570 = vmatprep.subr.bf16.mxu0 0
      %571 = vmatpush1.bf16.msra.mxu0 0
      %572 = vmatprep.subr.bf16.mxu0 0
      %573 = vmatpush1.bf16.msra.mxu0 0
      %574 = vmatprep.subr.bf16.mxu0 0
      %575 = vmatpush1.bf16.msra.mxu0 0
      %576 = vmatprep.subr.bf16.mxu0 0
      %577 = vmatpush1.bf16.msra.mxu0 0
      %578 = vmatprep.subr.bf16.mxu0 0
      %579 = vmatpush1.bf16.msra.mxu0 0
      %580 = vmatprep.subr.bf16.mxu0 0
      %581 = vmatpush1.bf16.msra.mxu0 0
      %582 = vmatprep.subr.bf16.mxu0 0
      %583 = vmatpush1.bf16.msra.mxu0 0
      %584 = vmatprep.subr.bf16.mxu0 0
      %585 = vmatpush1.bf16.msra.mxu0 0
      %586 = vmatprep.mubr.bf16.mxu0 0
      %587 = vmatmul.mubr.bf16.gmra.mrb[0].mxu0 %v241
      %v588 = vpop.f32.mrb[0].mxu0
      %v589 = vadd.f32 0.0, %v588
      %v590 = vpop.f32.mrb[0].mxu0
      %v591 = vadd.f32 0.0, %v590
      %v592 = vpop.f32.mrb[0].mxu0
      %v593 = vadd.f32 0.0, %v592
      %v594 = vpop.f32.mrb[0].mxu0
      %v595 = vadd.f32 0.0, %v594
      %596 = vmatprep.mubr.bf16.mxu0 0
      %597 = vmatmul.mubr.bf16.gmra.mrb[0].mxu0 %v242
      %v598 = vpop.f32.mrb[0].mxu0
      %v599 = vadd.f32 0.0, %v598
      %v600 = vpop.f32.mrb[0].mxu0
      %v601 = vadd.f32 0.0, %v600
      %v602 = vpop.f32.mrb[0].mxu0
      %v603 = vadd.f32 0.0, %v602
      %v604 = vpop.f32.mrb[0].mxu0
      %v605 = vadd.f32 0.0, %v604
      %606 = vmatprep.mubr.bf16.mxu0 0
      %607 = vmatmul.mubr.bf16.gmra.mrb[0].mxu0 %v243
      %v608 = vpop.f32.mrb[0].mxu0
      %v609 = vadd.f32 0.0, %v608
      %v610 = vpop.f32.mrb[0].mxu0
      %v611 = vadd.f32 0.0, %v610
      %v612 = vpop.f32.mrb[0].mxu0
      %v613 = vadd.f32 0.0, %v612
      %v614 = vpop.f32.mrb[0].mxu0
      %v615 = vadd.f32 0.0, %v614
      %616 = vmatprep.mubr.bf16.mxu0 0
      %617 = vmatmul.mubr.bf16.gmra.mrb[0].mxu0 %v244
      %v618 = vpop.f32.mrb[0].mxu0
      %v619 = vadd.f32 0.0, %v618
      %v620 = vpop.f32.mrb[0].mxu0
      %v621 = vadd.f32 0.0, %v620
      %v622 = vpop.f32.mrb[0].mxu0
      %v623 = vadd.f32 0.0, %v622
      %v624 = vpop.f32.mrb[0].mxu0
      %v625 = vadd.f32 0.0, %v624
      %626 = vmatprep.mubr.bf16.mxu0 0
      %627 = vmatmul.mubr.bf16.gmra.mrb[0].mxu0 %v245
      %v628 = vpop.f32.mrb[0].mxu0
      %v629 = vadd.f32 0.0, %v628
      %v630 = vpop.f32.mrb[0].mxu0
      %v631 = vadd.f32 0.0, %v630
      %v632 = vpop.f32.mrb[0].mxu0
      %v633 = vadd.f32 0.0, %v632
      %v634 = vpop.f32.mrb[0].mxu0
      %v635 = vadd.f32 0.0, %v634
      %636 = vmatprep.mubr.bf16.mxu0 0
      %637 = vmatmul.mubr.bf16.gmra.mrb[0].mxu0 %v246
      %v638 = vpop.f32.mrb[0].mxu0
      %v639 = vadd.f32 0.0, %v638
      %v640 = vpop.f32.mrb[0].mxu0
      %v641 = vadd.f32 0.0, %v640
      %v642 = vpop.f32.mrb[0].mxu0
      %v643 = vadd.f32 0.0, %v642
      %v644 = vpop.f32.mrb[0].mxu0
      %v645 = vadd.f32 0.0, %v644
      %646 = vmatprep.mubr.bf16.mxu0 0
      %647 = vmatmul.mubr.bf16.gmra.mrb[0].mxu0 %v247
      %v648 = vpop.f32.mrb[0].mxu0
      %v649 = vadd.f32 0.0, %v648
      %v650 = vpop.f32.mrb[0].mxu0
      %v651 = vadd.f32 0.0, %v650
      %v652 = vpop.f32.mrb[0].mxu0
      %v653 = vadd.f32 0.0, %v652
      %v654 = vpop.f32.mrb[0].mxu0
      %v655 = vadd.f32 0.0, %v654
      %656 = vmatprep.mubr.bf16.mxu0 0
      %657 = vmatmul.mubr.bf16.gmra.mrb[0].mxu0 %v248
      %v658 = vpop.f32.mrb[0].mxu0
      %v659 = vadd.f32 0.0, %v658
      %v660 = vpop.f32.mrb[0].mxu0
      %v661 = vadd.f32 0.0, %v660
      %v662 = vpop.f32.mrb[0].mxu0
      %v663 = vadd.f32 0.0, %v662
      %v664 = vpop.f32.mrb[0].mxu0
      %v665 = vadd.f32 0.0, %v664
      %666 = vdwg.mxu0
      %667 = vst [vmem:[%s214] sm:$0xff] %v476
      %668 = vst [vmem:[%s214 + $0x8] sm:$0xff] %v478
      %669 = vst [vmem:[%s214 + $0x10] sm:$0xff] %v589
      %670 = vst [vmem:[%s214 + $0x18] sm:$0xff] %v591
      %671 = vst [vmem:[%s214 + $0x20] sm:$0xff] %v480
      %672 = vst [vmem:[%s214 + $0x28] sm:$0xff] %v482
      %673 = vst [vmem:[%s214 + $0x30] sm:$0xff] %v593
      %674 = vst [vmem:[%s214 + $0x38] sm:$0xff] %v595
      %675 = vst [vmem:[%s214 + $0x40] sm:$0xff] %v486
      %676 = vst [vmem:[%s214 + $0x48] sm:$0xff] %v488
      %677 = vst [vmem:[%s214 + $0x50] sm:$0xff] %v599
      %678 = vst [vmem:[%s214 + $0x58] sm:$0xff] %v601
      %679 = vst [vmem:[%s214 + $0x60] sm:$0xff] %v490
      %680 = vst [vmem:[%s214 + $0x68] sm:$0xff] %v492
      %681 = vst [vmem:[%s214 + $0x70] sm:$0xff] %v603
      %682 = vst [vmem:[%s214 + $0x78] sm:$0xff] %v605
      %683 = vst [vmem:[%s214 + $0x80] sm:$0xff] %v496
      %684 = vst [vmem:[%s214 + $0x88] sm:$0xff] %v498
      %685 = vst [vmem:[%s214 + $0x90] sm:$0xff] %v609
      %686 = vst [vmem:[%s214 + $0x98] sm:$0xff] %v611
      %687 = vst [vmem:[%s214 + $0xa0] sm:$0xff] %v500
      %688 = vst [vmem:[%s214 + $0xa8] sm:$0xff] %v502
      %689 = vst [vmem:[%s214 + $0xb0] sm:$0xff] %v613
      %690 = vst [vmem:[%s214 + $0xb8] sm:$0xff] %v615
      %691 = vst [vmem:[%s214 + $0xc0] sm:$0xff] %v506
      %692 = vst [vmem:[%s214 + $0xc8] sm:$0xff] %v508
      %693 = vst [vmem:[%s214 + $0xd0] sm:$0xff] %v619
      %694 = vst [vmem:[%s214 + $0xd8] sm:$0xff] %v621
      %695 = vst [vmem:[%s214 + $0xe0] sm:$0xff] %v510
      %696 = vst [vmem:[%s214 + $0xe8] sm:$0xff] %v512
      %697 = vst [vmem:[%s214 + $0xf0] sm:$0xff] %v623
      %698 = vst [vmem:[%s214 + $0xf8] sm:$0xff] %v625
      %699 = vst [vmem:[%s214 + $0x100] sm:$0xff] %v516
      %700 = vst [vmem:[%s214 + $0x108] sm:$0xff] %v518
      %701 = vst [vmem:[%s214 + $0x110] sm:$0xff] %v629
      %702 = vst [vmem:[%s214 + $0x118] sm:$0xff] %v631
      %703 = vst [vmem:[%s214 + $0x120] sm:$0xff] %v520
      %704 = vst [vmem:[%s214 + $0x128] sm:$0xff] %v522
      %705 = vst [vmem:[%s214 + $0x130] sm:$0xff] %v633
      %706 = vst [vmem:[%s214 + $0x138] sm:$0xff] %v635
      %707 = vst [vmem:[%s214 + $0x140] sm:$0xff] %v526
      %708 = vst [vmem:[%s214 + $0x148] sm:$0xff] %v528
      %709 = vst [vmem:[%s214 + $0x150] sm:$0xff] %v639
      %710 = vst [vmem:[%s214 + $0x158] sm:$0xff] %v641
      %711 = vst [vmem:[%s214 + $0x160] sm:$0xff] %v530
      %712 = vst [vmem:[%s214 + $0x168] sm:$0xff] %v532
      %713 = vst [vmem:[%s214 + $0x170] sm:$0xff] %v643
      %714 = vst [vmem:[%s214 + $0x178] sm:$0xff] %v645
      %715 = vst [vmem:[%s214 + $0x180] sm:$0xff] %v536
      %716 = vst [vmem:[%s214 + $0x188] sm:$0xff] %v538
      %717 = vst [vmem:[%s214 + $0x190] sm:$0xff] %v649
      %718 = vst [vmem:[%s214 + $0x198] sm:$0xff] %v651
      %719 = vst [vmem:[%s214 + $0x1a0] sm:$0xff] %v540
      %720 = vst [vmem:[%s214 + $0x1a8] sm:$0xff] %v542
      %721 = vst [vmem:[%s214 + $0x1b0] sm:$0xff] %v653
      %722 = vst [vmem:[%s214 + $0x1b8] sm:$0xff] %v655
      %723 = vst [vmem:[%s214 + $0x1c0] sm:$0xff] %v546
      %724 = vst [vmem:[%s214 + $0x1c8] sm:$0xff] %v548
      %725 = vst [vmem:[%s214 + $0x1d0] sm:$0xff] %v659
      %726 = vst [vmem:[%s214 + $0x1d8] sm:$0xff] %v661
      %727 = vst [vmem:[%s214 + $0x1e0] sm:$0xff] %v550
      %728 = vst [vmem:[%s214 + $0x1e8] sm:$0xff] %v552
      %729 = vst [vmem:[%s214 + $0x1f0] sm:$0xff] %v663
      %730 = vst [vmem:[%s214 + $0x1f8] sm:$0xff] %v665
      %v731 = vadd.f32 %v476, %v480
      %v732 = vadd.f32 %v731, %v486
      %v733 = vadd.f32 %v732, %v490
      %v734 = vadd.f32 %v733, %v496
      %v735 = vadd.f32 %v734, %v500
      %v736 = vadd.f32 %v735, %v506
      %v737 = vadd.f32 %v736, %v510
      %v738 = vadd.f32 %v737, %v516
      %v739 = vadd.f32 %v738, %v520
      %v740 = vadd.f32 %v739, %v526
      %v741 = vadd.f32 %v740, %v530
      %v742 = vadd.f32 %v741, %v536
      %v743 = vadd.f32 %v742, %v540
      %v744 = vadd.f32 %v743, %v546
      %v745 = vadd.f32 %v744, %v550
      %v746 = vrot.slane %v745, 4
      %v747 = vadd.f32 %v745, %v746
      %v748 = vrot.slane %v747, 2
      %v749 = vadd.f32 %v747, %v748
      %v750 = vrot.slane %v749, 1
      %v751 = vadd.f32 %v749, %v750
      %v752 = vadd.f32 %v478, %v482
      %v753 = vadd.f32 %v752, %v488
      %v754 = vadd.f32 %v753, %v492
      %v755 = vadd.f32 %v754, %v498
      %v756 = vadd.f32 %v755, %v502
      %v757 = vadd.f32 %v756, %v508
      %v758 = vadd.f32 %v757, %v512
      %v759 = vadd.f32 %v758, %v518
      %v760 = vadd.f32 %v759, %v522
      %v761 = vadd.f32 %v760, %v528
      %v762 = vadd.f32 %v761, %v532
      %v763 = vadd.f32 %v762, %v538
      %v764 = vadd.f32 %v763, %v542
      %v765 = vadd.f32 %v764, %v548
      %v766 = vadd.f32 %v765, %v552
      %v767 = vrot.slane %v766, 4
      %v768 = vadd.f32 %v766, %v767
      %v769 = vrot.slane %v768, 2
      %v770 = vadd.f32 %v768, %v769
      %v771 = vrot.slane %v770, 1
      %v772 = vadd.f32 %v770, %v771
      %v773 = vadd.f32 %v589, %v593
      %v774 = vadd.f32 %v773, %v599
      %v775 = vadd.f32 %v774, %v603
      %v776 = vadd.f32 %v775, %v609
      %v777 = vadd.f32 %v776, %v613
      %v778 = vadd.f32 %v777, %v619
      %v779 = vadd.f32 %v778, %v623
      %v780 = vadd.f32 %v779, %v629
      %v781 = vadd.f32 %v780, %v633
      %v782 = vadd.f32 %v781, %v639
      %v783 = vadd.f32 %v782, %v643
      %v784 = vadd.f32 %v783, %v649
      %v785 = vadd.f32 %v784, %v653
      %v786 = vadd.f32 %v785, %v659
      %v787 = vadd.f32 %v786, %v663
      %v788 = vrot.slane %v787, 4
      %v789 = vadd.f32 %v787, %v788
      %v790 = vrot.slane %v789, 2
      %v791 = vadd.f32 %v789, %v790
      %v792 = vrot.slane %v791, 1
      %v793 = vadd.f32 %v791, %v792
      %v794 = vadd.f32 %v591, %v595
      %v795 = vadd.f32 %v794, %v601
      %v796 = vadd.f32 %v795, %v605
      %v797 = vadd.f32 %v796, %v611
      %v798 = vadd.f32 %v797, %v615
      %v799 = vadd.f32 %v798, %v621
      %v800 = vadd.f32 %v799, %v625
      %v801 = vadd.f32 %v800, %v631
      %v802 = vadd.f32 %v801, %v635
      %v803 = vadd.f32 %v802, %v641
      %v804 = vadd.f32 %v803, %v645
      %v805 = vadd.f32 %v804, %v651
      %v806 = vadd.f32 %v805, %v655
      %v807 = vadd.f32 %v806, %v661
      %v808 = vadd.f32 %v807, %v665
      %v809 = vrot.slane %v808, 4
      %v810 = vadd.f32 %v808, %v809
      %v811 = vrot.slane %v810, 2
      %v812 = vadd.f32 %v810, %v811
      %v813 = vrot.slane %v812, 1
      %v814 = vadd.f32 %v812, %v813
      %v819 = vcombine.low %v751, %v772
      %v820 = vcombine.low %v793, %v814
      %v822 = vunpack.c.l.s4 1966171168
      %v823 = vunpack.c.0.s8 %v822
      %v824 = vlaneseq
      %v825 = vshrl.u32 %v824, 7
      %v826 = vsub.s32 %v823, %v825
      %v827 = vrot.slane %v819, %v826
      %v829 = vunpack.c.l.s4 1966171168
      %v830 = vunpack.c.0.s8 %v829
      %v831 = vlaneseq
      %v832 = vshrl.u32 %v831, 7
      %v833 = vsub.s32 %v830, %v832
      %v834 = vrot.slane %v820, %v833
      %v835 = vcombine.low %v827, %v834
      %v837 = vunpack.c.l.s4 1966171168
      %v838 = vunpack.c.0.s8 %v837
      %v839 = vlaneseq
      %v840 = vshrl.u32 %v839, 7
      %v841 = vsub.s32 %v838, %v840
      %v842 = vrot.slane %v835, %v841
      %v844 = vlaneseq
      %vm845 = vcmp.ge.s32.totalorder %v844, 0
      %vm846 = vcmp.lt.s32.totalorder %v844, 512
      %vm847 = vmand %vm845, %vm846
      %848 = vst.msk [vmem:[%s219] sm:$0xf] %vm847, %v842
      %v849 = vmul.f32 %v476, %v476
      %v850 = vmul.f32 %v478, %v478
      %v851 = vmul.f32 %v589, %v589
      %v852 = vmul.f32 %v591, %v591
      %v853 = vmul.f32 %v480, %v480
      %v854 = vmul.f32 %v482, %v482
      %v855 = vmul.f32 %v593, %v593
      %v856 = vmul.f32 %v595, %v595
      %v857 = vmul.f32 %v486, %v486
      %v858 = vmul.f32 %v488, %v488
      %v859 = vmul.f32 %v599, %v599
      %v860 = vmul.f32 %v601, %v601
      %v861 = vmul.f32 %v490, %v490
      %v862 = vmul.f32 %v492, %v492
      %v863 = vmul.f32 %v603, %v603
      %v864 = vmul.f32 %v605, %v605
      %v865 = vmul.f32 %v496, %v496
      %v866 = vmul.f32 %v498, %v498
      %v867 = vmul.f32 %v609, %v609
      %v868 = vmul.f32 %v611, %v611
      %v869 = vmul.f32 %v500, %v500
      %v870 = vmul.f32 %v502, %v502
      %v871 = vmul.f32 %v613, %v613
      %v872 = vmul.f32 %v615, %v615
      %v873 = vmul.f32 %v506, %v506
      %v874 = vmul.f32 %v508, %v508
      %v875 = vmul.f32 %v619, %v619
      %v876 = vmul.f32 %v621, %v621
      %v877 = vmul.f32 %v510, %v510
      %v878 = vmul.f32 %v512, %v512
      %v879 = vmul.f32 %v623, %v623
      %v880 = vmul.f32 %v625, %v625
      %v881 = vmul.f32 %v516, %v516
      %v882 = vmul.f32 %v518, %v518
      %v883 = vmul.f32 %v629, %v629
      %v884 = vmul.f32 %v631, %v631
      %v885 = vmul.f32 %v520, %v520
      %v886 = vmul.f32 %v522, %v522
      %v887 = vmul.f32 %v633, %v633
      %v888 = vmul.f32 %v635, %v635
      %v889 = vmul.f32 %v526, %v526
      %v890 = vmul.f32 %v528, %v528
      %v891 = vmul.f32 %v639, %v639
      %v892 = vmul.f32 %v641, %v641
      %v893 = vmul.f32 %v530, %v530
      %v894 = vmul.f32 %v532, %v532
      %v895 = vmul.f32 %v643, %v643
      %v896 = vmul.f32 %v645, %v645
      %v897 = vmul.f32 %v536, %v536
      %v898 = vmul.f32 %v538, %v538
      %v899 = vmul.f32 %v649, %v649
      %v900 = vmul.f32 %v651, %v651
      %v901 = vmul.f32 %v540, %v540
      %v902 = vmul.f32 %v542, %v542
      %v903 = vmul.f32 %v653, %v653
      %v904 = vmul.f32 %v655, %v655
      %v905 = vmul.f32 %v546, %v546
      %v906 = vmul.f32 %v548, %v548
      %v907 = vmul.f32 %v659, %v659
      %v908 = vmul.f32 %v661, %v661
      %v909 = vmul.f32 %v550, %v550
      %v910 = vmul.f32 %v552, %v552
      %v911 = vmul.f32 %v663, %v663
      %v912 = vmul.f32 %v665, %v665
      %v913 = vadd.f32 %v849, %v853
      %v914 = vadd.f32 %v913, %v857
      %v915 = vadd.f32 %v914, %v861
      %v916 = vadd.f32 %v915, %v865
      %v917 = vadd.f32 %v916, %v869
      %v918 = vadd.f32 %v917, %v873
      %v919 = vadd.f32 %v918, %v877
      %v920 = vadd.f32 %v919, %v881
      %v921 = vadd.f32 %v920, %v885
      %v922 = vadd.f32 %v921, %v889
      %v923 = vadd.f32 %v922, %v893
      %v924 = vadd.f32 %v923, %v897
      %v925 = vadd.f32 %v924, %v901
      %v926 = vadd.f32 %v925, %v905
      %v927 = vadd.f32 %v926, %v909
      %v928 = vrot.slane %v927, 4
      %v929 = vadd.f32 %v927, %v928
      %v930 = vrot.slane %v929, 2
      %v931 = vadd.f32 %v929, %v930
      %v932 = vrot.slane %v931, 1
      %v933 = vadd.f32 %v931, %v932
      %v934 = vadd.f32 %v850, %v854
      %v935 = vadd.f32 %v934, %v858
      %v936 = vadd.f32 %v935, %v862
      %v937 = vadd.f32 %v936, %v866
      %v938 = vadd.f32 %v937, %v870
      %v939 = vadd.f32 %v938, %v874
      %v940 = vadd.f32 %v939, %v878
      %v941 = vadd.f32 %v940, %v882
      %v942 = vadd.f32 %v941, %v886
      %v943 = vadd.f32 %v942, %v890
      %v944 = vadd.f32 %v943, %v894
      %v945 = vadd.f32 %v944, %v898
      %v946 = vadd.f32 %v945, %v902
      %v947 = vadd.f32 %v946, %v906
      %v948 = vadd.f32 %v947, %v910
      %v949 = vrot.slane %v948, 4
      %v950 = vadd.f32 %v948, %v949
      %v951 = vrot.slane %v950, 2
      %v952 = vadd.f32 %v950, %v951
      %v953 = vrot.slane %v952, 1
      %v954 = vadd.f32 %v952, %v953
      %v955 = vadd.f32 %v851, %v855
      %v956 = vadd.f32 %v955, %v859
      %v957 = vadd.f32 %v956, %v863
      %v958 = vadd.f32 %v957, %v867
      %v959 = vadd.f32 %v958, %v871
      %v960 = vadd.f32 %v959, %v875
      %v961 = vadd.f32 %v960, %v879
      %v962 = vadd.f32 %v961, %v883
      %v963 = vadd.f32 %v962, %v887
      %v964 = vadd.f32 %v963, %v891
      %v965 = vadd.f32 %v964, %v895
      %v966 = vadd.f32 %v965, %v899
      %v967 = vadd.f32 %v966, %v903
      %v968 = vadd.f32 %v967, %v907
      %v969 = vadd.f32 %v968, %v911
      %v970 = vrot.slane %v969, 4
      %v971 = vadd.f32 %v969, %v970
      %v972 = vrot.slane %v971, 2
      %v973 = vadd.f32 %v971, %v972
      %v974 = vrot.slane %v973, 1
      %v975 = vadd.f32 %v973, %v974
      %v976 = vadd.f32 %v852, %v856
      %v977 = vadd.f32 %v976, %v860
      %v978 = vadd.f32 %v977, %v864
      %v979 = vadd.f32 %v978, %v868
      %v980 = vadd.f32 %v979, %v872
      %v981 = vadd.f32 %v980, %v876
      %v982 = vadd.f32 %v981, %v880
      %v983 = vadd.f32 %v982, %v884
      %v984 = vadd.f32 %v983, %v888
      %v985 = vadd.f32 %v984, %v892
      %v986 = vadd.f32 %v985, %v896
      %v987 = vadd.f32 %v986, %v900
      %v988 = vadd.f32 %v987, %v904
      %v989 = vadd.f32 %v988, %v908
      %v990 = vadd.f32 %v989, %v912
      %v991 = vrot.slane %v990, 4
      %v992 = vadd.f32 %v990, %v991
      %v993 = vrot.slane %v992, 2
      %v994 = vadd.f32 %v992, %v993
      %v995 = vrot.slane %v994, 1
      %v996 = vadd.f32 %v994, %v995
      %v1001 = vcombine.low %v933, %v954
      %v1002 = vcombine.low %v975, %v996
      %v1004 = vunpack.c.l.s4 1966171168
      %v1005 = vunpack.c.0.s8 %v1004
      %v1006 = vlaneseq
      %v1007 = vshrl.u32 %v1006, 7
      %v1008 = vsub.s32 %v1005, %v1007
      %v1009 = vrot.slane %v1001, %v1008
      %v1011 = vunpack.c.l.s4 1966171168
      %v1012 = vunpack.c.0.s8 %v1011
      %v1013 = vlaneseq
      %v1014 = vshrl.u32 %v1013, 7
      %v1015 = vsub.s32 %v1012, %v1014
      %v1016 = vrot.slane %v1002, %v1015
      %v1017 = vcombine.low %v1009, %v1016
      %v1019 = vunpack.c.l.s4 1966171168
      %v1020 = vunpack.c.0.s8 %v1019
      %v1021 = vlaneseq
      %v1022 = vshrl.u32 %v1021, 7
      %v1023 = vsub.s32 %v1020, %v1022
      %v1024 = vrot.slane %v1017, %v1023
      %1026 = vst.msk [vmem:[%s223] sm:$0xf] %vm847, %v1024
      %s1027 = smul.u32 16, %s16
      %p1028 = scmp.lt.s32.totalorder %s1027, 31
      %s1029 = scalar_select %p1028, %s1027, 31
      %s1030 = smul.addr %s1029, 4
      %s1031 = smul.addr %s1030, 8
      %s1032 = scalar_lea.vmem %s2, %s1031
      %p1033 = scmp.lt.s32.totalorder %s16, 1
      %s1034 = scalar_select %p1033, %s16, 1
      %s1035 = smul.addr %s1034, 4
      %s1036 = scalar_lea.vmem %s3, %s1035
      %p1037 = scmp.lt.s32.totalorder %s16, 1
      %s1038 = scalar_select %p1037, %s16, 1
      %s1039 = smul.addr %s1038, 4
      %s1040 = scalar_lea.vmem %s4, %s1039
      // Predicated region
      $region29: #{fe_forward.3} parent=27 // pred_check
        %p1041 = pneg %p81
      $region30: #{fe_forward.3} parent=27 // pred_check_branch
        %1043 = sbr.rel (%p1041) target = $region32
      $region31: #{fe_forward.3} parent=27 // pred_region
        %s1044 = smul.u32 16, %s16
      $region32: #{fe_forward.3} parent=27 // pred_fallthru
        _
      // Predicated region
      $region33: #{fe_forward.3} parent=27 // pred_check
        %p1045 = pneg %p107
      $region34: #{fe_forward.3} parent=27 // pred_check_branch
        %1047 = sbr.rel (%p1045) target = $region36
      $region35: #{fe_forward.3} parent=27 // pred_region
        _
      $region36: #{fe_forward.3} parent=27 // pred_fallthru
        _
      // Predicated region
      $region37: #{fe_forward.3} parent=27 // pred_check
        %p1048 = pneg %p133
      $region38: #{fe_forward.3} parent=27 // pred_check_branch
        %1050 = sbr.rel (%p1048) target = $region40
      $region39: #{fe_forward.3} parent=27 // pred_region
        _
      $region40: #{fe_forward.3} parent=27 // pred_fallthru
        _
    $region28: #{fe_forward.3} parent=5 // pred_fallthru
      _
    %p1051 = scmp.le.s32.totalorder 2, %s11
    // Predicated region
    $region41: #{fe_forward.3} parent=5 // pred_check
      %p1052 = pneg %p1051
    $region42: #{fe_forward.3} parent=5 // pred_check_branch
      %1054 = sbr.rel (%p1052) target = $region44
    $region43: #{fe_forward.3} parent=5 // pred_region
      %s1055 = ssub.s32 %s11, 2
      // Predicated region
      $region45: #{fe_forward.3} parent=43 // pred_check
        %p1056 = pneg %p87
      $region46: #{fe_forward.3} parent=43 // pred_check_branch
        %1058 = sbr.rel (%p1056) target = $region48
      $region47: #{fe_forward.3} parent=43 // pred_region
        %s1059 = smul.u32 16, %s17
        %p1060 = scmp.lt.s32.totalorder %s1059, 31
        %s1061 = scalar_select %p1060, %s1059, 31
        %s1062 = smul.addr %s1061, 4
        %s1063 = smul.addr %s1062, 8
        %s1064 = scalar_lea.vmem %s2, %s1063
      $region48: #{fe_forward.3} parent=43 // pred_fallthru
        _
      // Predicated region
      $region49: #{fe_forward.3} parent=43 // pred_check
        %p1065 = pneg %p113
      $region50: #{fe_forward.3} parent=43 // pred_check_branch
        %1067 = sbr.rel (%p1065) target = $region52
      $region51: #{fe_forward.3} parent=43 // pred_region
        %p1068 = scmp.lt.s32.totalorder %s17, 1
        %s1069 = scalar_select %p1068, %s17, 1
        %s1070 = smul.addr %s1069, 4
        %s1071 = scalar_lea.vmem %s3, %s1070
      $region52: #{fe_forward.3} parent=43 // pred_fallthru
        _
      // Predicated region
      $region53: #{fe_forward.3} parent=43 // pred_check
        %p1072 = pneg %p139
      $region54: #{fe_forward.3} parent=43 // pred_check_branch
        %1074 = sbr.rel (%p1072) target = $region56
      $region55: #{fe_forward.3} parent=43 // pred_region
        %p1075 = scmp.lt.s32.totalorder %s17, 1
        %s1076 = scalar_select %p1075, %s17, 1
        %s1077 = smul.addr %s1076, 4
        %s1078 = scalar_lea.vmem %s4, %s1077
      $region56: #{fe_forward.3} parent=43 // pred_fallthru
        _
    $region44: #{fe_forward.3} parent=5 // pred_fallthru
      _
  $region6: #{fe_forward.3} parent=0 // loop_footer
    %s15 = sadd.s32 1, %s11
  $region7: #{fe_forward.3} parent=0 // loop_footer_branch
    %10 = sbr.rel target = $region3
  $region8: #{fe_forward.3} parent=0 // loop_exit
    _

// kernel: fe_forward.4
$region0: #{fe_forward.4}
  #allocation0 [shape = 'u32[]', space=smem, size = 0x4, offset = 0x4, fixed_abs, tag = 'smem constant byte address 0x4 - core index']
  #allocation1 [shape = 'u32[144,128]{1,0:T(1,128)}', space=vmem, size = 0x12000, scoped, tag = 'internal scratch']
  %s0 = inlined_call_operand.vmem [shape: f32[256,512], index: 0, kind: input, shape index: {}]
  %s1 = inlined_call_operand.vmem [shape: f32[1,512], index: 1, kind: input, shape index: {}]
  %s2 = inlined_call_operand.vmem [shape: f32[1,512], index: 2, kind: input, shape index: {}]
  %s3 = inlined_call_operand.vmem [shape: s32[256,512], index: 3, kind: input, shape index: {}]
  %s4 = inlined_call_operand.vmem [shape: bf16[512,128], index: 4, kind: input, shape index: {}]
  %s5 = inlined_call_operand.hbm [shape: f32[256,512], index: 5, kind: output, shape index: {0}]
  %s6 = inlined_call_operand.vmem [shape: f32[256,128], index: 6, kind: output, shape index: {1}]
  %s7 = inlined_call_operand.vmem [shape: f32[2,1,128], index: 7, kind: output, shape index: {2}]
  %s8 = inlined_call_operand.vmem [shape: f32[2,1,128], index: 8, kind: output, shape index: {3}]
  %9 = xla_tuple %s5, %s6, %s7, %s8
  %s10 = sld [smem:[#allocation0]]
  $region77: #{fe_forward.4} parent=0
    _
  %s12 = ssub.s32 1, %s10
  %s13 = scalar_select 0, %s12, %s10
  $region1: #{fe_forward.4} parent=0
    #allocation2 [shape = 'u8[524288]{0}', space=vmem, size = 0x80000, scoped, tag = 'output window, operand 0']
    #allocation3 [shape = 's32[2]{0}', space=sflag, size = 0x8, scoped, tag = 'scoped memory for fe_forward.4']
    %14 = vsyncpa [#allocation3], 0
    %s15 = scalar_lea.sflag [#allocation3], 1
    %16 = vsyncpa %s15, 0
    loop: start=0, step=1, limit=4
    $region2: #{fe_forward.4} parent=1 // loop_pre_header
      _
    $region3: #{fe_forward.4} parent=1 // loop_header
      %s18 = sphi 0, %s22
      %p19 = scmp.ge.s32.totalorder %s18, 4
      %s28 = sphi 0, %s30
      %s31 = sphi 0, %s28
      %s32 = sphi 0, %s31
      %s48 = sphi 0, %s32
      %s52 = sphi 0, %s52
      %s54 = sphi 0, %s52
      %s55 = sphi 0, %s54
      %s69 = sphi 0, %s55
      %s73 = sphi 0, %s73
      %s75 = sphi 0, %s73
      %s76 = sphi 0, %s75
      %s90 = sphi 0, %s76
      %s96 = sphi 0, %s98
      %s99 = sphi 0, %s96
      %s100 = sphi 0, %s99
      %s116 = sphi 0, %s100
      %s120 = sphi 0, %s120
      %s122 = sphi 0, %s120
      %s123 = sphi 0, %s122
      %s137 = sphi 0, %s123
      %s143 = sphi 0, %s145
      %s146 = sphi 0, %s143
      %s147 = sphi 0, %s146
      %s163 = sphi 0, %s147
      %s169 = sphi 0, %s171
      %s172 = sphi 0, %s169
      %s173 = sphi 0, %s172
      %s189 = sphi 0, %s173
      %s195 = sphi 0, %s197
      %s198 = sphi 0, %s195
      %s199 = sphi 0, %s198
      %s215 = sphi 0, %s199
      %s221 = sphi 0, %s223
      %s224 = sphi 0, %s221
      %s225 = sphi 0, %s224
      %s241 = sphi 0, %s225
    $region4: #{fe_forward.4} parent=1 // loop_header_branch
      %21 = sbr.rel (%p19) target = $region8
    $region5: #{fe_forward.4} parent=1 // loop_body
      %s23 = ssub.s32 %s18, 1
      %s24 = ssub.s32 %s18, 2
      %s25 = sadd.s32 %s18, 1
      %s26 = ssub.s32 %s18, %s25
      %p27 = scmp.eq.s32.totalorder %s26, 0
      %s29 = sadd.s32 %s28, 1
      %s30 = scalar_select %p27, %s28, %s29
      %p33 = pneg %p27
      %p34 = scmp.eq.s32.totalorder %s18, 1
      %p35 = por %p33, %p34
      %p36 = scmp.ne.s32.totalorder %s28, %s31
      %p37 = scmp.eq.s32.totalorder %s18, 0
      %p38 = por %p36, %p37
      %p39 = scmp.ne.s32.totalorder %s28, %s31
      %p40 = scmp.eq.s32.totalorder %s23, 1
      %p41 = por %p39, %p40
      %p42 = scmp.ne.s32.totalorder %s31, %s32
      %p43 = scmp.eq.s32.totalorder %s23, 0
      %p44 = por %p42, %p43
      %p45 = scmp.ne.s32.totalorder %s31, %s32
      %p46 = scmp.eq.s32.totalorder %s24, 1
      %p47 = por %p45, %p46
      %p49 = scmp.ne.s32.totalorder %s32, %s48
      %p50 = scmp.eq.s32.totalorder %s24, 0
      %p51 = por %p49, %p50
      %s53 = sadd.s32 %s52, 1
      %p56 = scmp.eq.s32.totalorder %s18, 1
      %p57 = scmp.ne.s32.totalorder %s52, %s54
      %p58 = scmp.eq.s32.totalorder %s18, 0
      %p59 = por %p57, %p58
      %p60 = scmp.ne.s32.totalorder %s52, %s54
      %p61 = scmp.eq.s32.totalorder %s23, 1
      %p62 = por %p60, %p61
      %p63 = scmp.ne.s32.totalorder %s54, %s55
      %p64 = scmp.eq.s32.totalorder %s23, 0
      %p65 = por %p63, %p64
      %p66 = scmp.ne.s32.totalorder %s54, %s55
      %p67 = scmp.eq.s32.totalorder %s24, 1
      %p68 = por %p66, %p67
      %p70 = scmp.ne.s32.totalorder %s55, %s69
      %p71 = scmp.eq.s32.totalorder %s24, 0
      %p72 = por %p70, %p71
      %s74 = sadd.s32 %s73, 1
      %p77 = scmp.eq.s32.totalorder %s18, 1
      %p78 = scmp.ne.s32.totalorder %s73, %s75
      %p79 = scmp.eq.s32.totalorder %s18, 0
      %p80 = por %p78, %p79
      %p81 = scmp.ne.s32.totalorder %s73, %s75
      %p82 = scmp.eq.s32.totalorder %s23, 1
      %p83 = por %p81, %p82
      %p84 = scmp.ne.s32.totalorder %s75, %s76
      %p85 = scmp.eq.s32.totalorder %s23, 0
      %p86 = por %p84, %p85
      %p87 = scmp.ne.s32.totalorder %s75, %s76
      %p88 = scmp.eq.s32.totalorder %s24, 1
      %p89 = por %p87, %p88
      %p91 = scmp.ne.s32.totalorder %s76, %s90
      %p92 = scmp.eq.s32.totalorder %s24, 0
      %p93 = por %p91, %p92
      %s94 = ssub.s32 %s18, %s25
      %p95 = scmp.eq.s32.totalorder %s94, 0
      %s97 = sadd.s32 %s96, 1
      %s98 = scalar_select %p95, %s96, %s97
      %p101 = pneg %p95
      %p102 = scmp.eq.s32.totalorder %s18, 1
      %p103 = por %p101, %p102
      %p104 = scmp.ne.s32.totalorder %s96, %s99
      %p105 = scmp.eq.s32.totalorder %s18, 0
      %p106 = por %p104, %p105
      %p107 = scmp.ne.s32.totalorder %s96, %s99
      %p108 = scmp.eq.s32.totalorder %s23, 1
      %p109 = por %p107, %p108
      %p110 = scmp.ne.s32.totalorder %s99, %s100
      %p111 = scmp.eq.s32.totalorder %s23, 0
      %p112 = por %p110, %p111
      %p113 = scmp.ne.s32.totalorder %s99, %s100
      %p114 = scmp.eq.s32.totalorder %s24, 1
      %p115 = por %p113, %p114
      %p117 = scmp.ne.s32.totalorder %s100, %s116
      %p118 = scmp.eq.s32.totalorder %s24, 0
      %p119 = por %p117, %p118
      %s121 = sadd.s32 %s120, 1
      %p124 = scmp.eq.s32.totalorder %s18, 1
      %p125 = scmp.ne.s32.totalorder %s120, %s122
      %p126 = scmp.eq.s32.totalorder %s18, 0
      %p127 = por %p125, %p126
      %p128 = scmp.ne.s32.totalorder %s120, %s122
      %p129 = scmp.eq.s32.totalorder %s23, 1
      %p130 = por %p128, %p129
      %p131 = scmp.ne.s32.totalorder %s122, %s123
      %p132 = scmp.eq.s32.totalorder %s23, 0
      %p133 = por %p131, %p132
      %p134 = scmp.ne.s32.totalorder %s122, %s123
      %p135 = scmp.eq.s32.totalorder %s24, 1
      %p136 = por %p134, %p135
      %p138 = scmp.ne.s32.totalorder %s123, %s137
      %p139 = scmp.eq.s32.totalorder %s24, 0
      %p140 = por %p138, %p139
      %s141 = ssub.s32 %s18, %s25
      %p142 = scmp.eq.s32.totalorder %s141, 0
      %s144 = sadd.s32 %s143, 1
      %s145 = scalar_select %p142, %s143, %s144
      %p148 = pneg %p142
      %p149 = scmp.eq.s32.totalorder %s18, 1
      %p150 = por %p148, %p149
      %p151 = scmp.ne.s32.totalorder %s143, %s146
      %p152 = scmp.eq.s32.totalorder %s18, 0
      %p153 = por %p151, %p152
      %p154 = scmp.ne.s32.totalorder %s143, %s146
      %p155 = scmp.eq.s32.totalorder %s23, 1
      %p156 = por %p154, %p155
      %p157 = scmp.ne.s32.totalorder %s146, %s147
      %p158 = scmp.eq.s32.totalorder %s23, 0
      %p159 = por %p157, %p158
      %p160 = scmp.ne.s32.totalorder %s146, %s147
      %p161 = scmp.eq.s32.totalorder %s24, 1
      %p162 = por %p160, %p161
      %p164 = scmp.ne.s32.totalorder %s147, %s163
      %p165 = scmp.eq.s32.totalorder %s24, 0
      %p166 = por %p164, %p165
      %s167 = ssub.s32 %s18, %s25
      %p168 = scmp.eq.s32.totalorder %s167, 0
      %s170 = sadd.s32 %s169, 1
      %s171 = scalar_select %p168, %s169, %s170
      %p174 = pneg %p168
      %p175 = scmp.eq.s32.totalorder %s18, 1
      %p176 = por %p174, %p175
      %p177 = scmp.ne.s32.totalorder %s169, %s172
      %p178 = scmp.eq.s32.totalorder %s18, 0
      %p179 = por %p177, %p178
      %p180 = scmp.ne.s32.totalorder %s169, %s172
      %p181 = scmp.eq.s32.totalorder %s23, 1
      %p182 = por %p180, %p181
      %p183 = scmp.ne.s32.totalorder %s172, %s173
      %p184 = scmp.eq.s32.totalorder %s23, 0
      %p185 = por %p183, %p184
      %p186 = scmp.ne.s32.totalorder %s172, %s173
      %p187 = scmp.eq.s32.totalorder %s24, 1
      %p188 = por %p186, %p187
      %p190 = scmp.ne.s32.totalorder %s173, %s189
      %p191 = scmp.eq.s32.totalorder %s24, 0
      %p192 = por %p190, %p191
      %s193 = ssub.s32 %s18, %s25
      %p194 = scmp.eq.s32.totalorder %s193, 0
      %s196 = sadd.s32 %s195, 1
      %s197 = scalar_select %p194, %s195, %s196
      %p200 = pneg %p194
      %p201 = scmp.eq.s32.totalorder %s18, 1
      %p202 = por %p200, %p201
      %p203 = scmp.ne.s32.totalorder %s195, %s198
      %p204 = scmp.eq.s32.totalorder %s18, 0
      %p205 = por %p203, %p204
      %p206 = scmp.ne.s32.totalorder %s195, %s198
      %p207 = scmp.eq.s32.totalorder %s23, 1
      %p208 = por %p206, %p207
      %p209 = scmp.ne.s32.totalorder %s198, %s199
      %p210 = scmp.eq.s32.totalorder %s23, 0
      %p211 = por %p209, %p210
      %p212 = scmp.ne.s32.totalorder %s198, %s199
      %p213 = scmp.eq.s32.totalorder %s24, 1
      %p214 = por %p212, %p213
      %p216 = scmp.ne.s32.totalorder %s199, %s215
      %p217 = scmp.eq.s32.totalorder %s24, 0
      %p218 = por %p216, %p217
      %s219 = ssub.s32 %s18, %s25
      %p220 = scmp.eq.s32.totalorder %s219, 0
      %s222 = sadd.s32 %s221, 1
      %s223 = scalar_select %p220, %s221, %s222
      %p226 = pneg %p220
      %p227 = scmp.eq.s32.totalorder %s18, 1
      %p228 = por %p226, %p227
      %p229 = scmp.ne.s32.totalorder %s221, %s224
      %p230 = scmp.eq.s32.totalorder %s18, 0
      %p231 = por %p229, %p230
      %p232 = scmp.ne.s32.totalorder %s221, %s224
      %p233 = scmp.eq.s32.totalorder %s23, 1
      %p234 = por %p232, %p233
      %p235 = scmp.ne.s32.totalorder %s224, %s225
      %p236 = scmp.eq.s32.totalorder %s23, 0
      %p237 = por %p235, %p236
      %p238 = scmp.ne.s32.totalorder %s224, %s225
      %p239 = scmp.eq.s32.totalorder %s24, 1
      %p240 = por %p238, %p239
      %p242 = scmp.ne.s32.totalorder %s225, %s241
      %p243 = scmp.eq.s32.totalorder %s24, 0
      %p244 = por %p242, %p243
      %p245 = scmp.le.s32.totalorder 1, %s18
      %p246 = scmp.lt.s32.totalorder %s18, 3
      %p247 = pnand %p245, %p246
      %p248 = pneg %p247
      // Predicated region
      $region9: #{fe_forward.4} parent=5 // pred_check
        _
      $region10: #{fe_forward.4} parent=5 // pred_check_branch
        %250 = sbr.rel (%p247) target = $region12
      $region11: #{fe_forward.4} parent=5 // pred_region
        %s251 = ssub.s32 %s18, 1
        // Predicated region
        $region13: #{fe_forward.4} parent=11 // pred_check
          %p252 = pneg %p65
        $region14: #{fe_forward.4} parent=11 // pred_check_branch
          %254 = sbr.rel (%p252) target = $region16
        $region15: #{fe_forward.4} parent=11 // pred_region
          _
        $region16: #{fe_forward.4} parent=11 // pred_fallthru
          _
        // Predicated region
        $region17: #{fe_forward.4} parent=11 // pred_check
          %p255 = pneg %p86
        $region18: #{fe_forward.4} parent=11 // pred_check_branch
          %257 = sbr.rel (%p255) target = $region20
        $region19: #{fe_forward.4} parent=11 // pred_region
          _
        $region20: #{fe_forward.4} parent=11 // pred_fallthru
          _
        // Predicated region
        $region21: #{fe_forward.4} parent=11 // pred_check
          %p258 = pneg %p133
        $region22: #{fe_forward.4} parent=11 // pred_check_branch
          %260 = sbr.rel (%p258) target = $region24
        $region23: #{fe_forward.4} parent=11 // pred_region
          _
        $region24: #{fe_forward.4} parent=11 // pred_fallthru
          _
      $region12: #{fe_forward.4} parent=5 // pred_fallthru
        _
      %p261 = scmp.lt.s32.totalorder %s18, 2
      // Predicated region
      $region25: #{fe_forward.4} parent=5 // pred_check
        %p262 = pneg %p261
      $region26: #{fe_forward.4} parent=5 // pred_check_branch
        %264 = sbr.rel (%p262) target = $region28
      $region27: #{fe_forward.4} parent=5 // pred_region
        // Predicated region
        $region29: #{fe_forward.4} parent=27 // pred_check
          %p265 = pneg %p38
        $region30: #{fe_forward.4} parent=27 // pred_check_branch
          %267 = sbr.rel (%p265) target = $region32
        $region31: #{fe_forward.4} parent=27 // pred_region
          %s268 = smul.u32 16, %s18
          %p269 = scmp.lt.s32.totalorder %s268, 31
          %s270 = scalar_select %p269, %s268, 31
          %s271 = smul.addr %s270, 4
          %s272 = smul.addr %s271, 8
          %s273 = scalar_lea.vmem %s0, %s272
          %s274 = smul.u32 16, %s18
        $region32: #{fe_forward.4} parent=27 // pred_fallthru
          _
        // Predicated region
        $region33: #{fe_forward.4} parent=27 // pred_check
          %p275 = pneg %p106
        $region34: #{fe_forward.4} parent=27 // pred_check_branch
          %277 = sbr.rel (%p275) target = $region36
        $region35: #{fe_forward.4} parent=27 // pred_region
          %s278 = smul.u32 16, %s18
          %p279 = scmp.lt.s32.totalorder %s278, 31
          %s280 = scalar_select %p279, %s278, 31
          %s281 = smul.addr %s280, 4
          %s282 = smul.addr %s281, 8
          %s283 = scalar_lea.vmem %s3, %s282
          %s284 = smul.u32 16, %s18
        $region36: #{fe_forward.4} parent=27 // pred_fallthru
          _
      $region28: #{fe_forward.4} parent=5 // pred_fallthru
        _
      %p285 = scmp.le.s32.totalorder 1, %s18
      %p286 = scmp.lt.s32.totalorder %s18, 3
      %p287 = pnand %p285, %p286
      %p288 = pneg %p287
      // Predicated region
      $region37: #{fe_forward.4} parent=5 // pred_check
        _
      $region38: #{fe_forward.4} parent=5 // pred_check_branch
        %290 = sbr.rel (%p287) target = $region40
      $region39: #{fe_forward.4} parent=5 // pred_region
        %s291 = ssub.s32 %s18, 1
        %s292 = smul.u32 16, %s23
        %p293 = scmp.lt.s32.totalorder %s292, 31
        %s294 = scalar_select %p293, %s292, 31
        %s295 = smul.addr %s294, 4
        %s296 = smul.addr %s295, 8
        %s297 = scalar_lea.vmem %s0, %s296
        %p298 = pneg %p44
        %p299 = pneg %p41
        %p300 = pneg %p65
        %p301 = pneg %p62
        %p302 = pneg %p86
        %p303 = pneg %p83
        %s304 = smul.u32 16, %s23
        %p305 = scmp.lt.s32.totalorder %s304, 31
        %s306 = scalar_select %p305, %s304, 31
        %s307 = smul.addr %s306, 4
        %s308 = smul.addr %s307, 8
        %s309 = scalar_lea.vmem %s3, %s308
        %p310 = pneg %p112
        %p311 = pneg %p109
        %p312 = pneg %p133
        %p313 = pneg %p130
        %p314 = pneg %p159
        %p315 = pneg %p156
        %s316 = sand.u32 %s146, 1
        %s317 = scalar_lea.sflag [#allocation3], %s316
        %s318 = sand.u32 %s146, 1
        %s319 = smul.addr %s318, 512
        %s320 = scalar_lea.vmem [#allocation2], %s319
        %p321 = pneg %p185
        %p322 = pneg %p182
        %s323 = smul.u32 16, %s23
        %p324 = scmp.lt.s32.totalorder %s323, 31
        %s325 = scalar_select %p324, %s323, 31
        %s326 = smul.addr %s325, 8
        %s327 = scalar_lea.vmem %s6, %s326
        %p328 = pneg %p211
        %p329 = pneg %p208
        %p330 = scmp.lt.s32.totalorder %s23, 1
        %s331 = scalar_select %p330, %s23, 1
        %s332 = scalar_lea.vmem %s7, %s331
        %p333 = pneg %p237
        %p334 = pneg %p234
        %p335 = scmp.lt.s32.totalorder %s23, 1
        %s336 = scalar_select %p335, %s23, 1
        %s337 = scalar_lea.vmem %s8, %s336
        %s338 = smul.u32 16, %s23
        %p339 = scmp.lt.s32.totalorder %s338, 31
        %s340 = scalar_select %p339, %s338, 31
        %s341 = smul.addr %s340, 4
        %s342 = smul.addr %s341, 8
        %s343 = scalar_lea.vmem %s0, %s342
        %s344 = smul.u32 16, %s23
        %s345 = smul.u32 16, %s23
        %p346 = scmp.lt.s32.totalorder %s345, 31
        %s347 = scalar_select %p346, %s345, 31
        %s348 = smul.addr %s347, 4
        %s349 = smul.addr %s348, 8
        %s350 = scalar_lea.vmem %s3, %s349
        %s351 = smul.u32 16, %s23
        %s352 = smul.u32 16, %s23
        %s353 = smul.u32 16, %s23
        %p354 = scmp.lt.s32.totalorder %s353, 31
        %s355 = scalar_select %p354, %s353, 31
        %s356 = smul.addr %s355, 8
        %s357 = scalar_lea.vmem %s6, %s356
        %s358 = smul.u32 16, %s23
        %p359 = scmp.lt.s32.totalorder %s23, 1
        %s360 = scalar_select %p359, %s23, 1
        %s361 = scalar_lea.vmem %s7, %s360
        %p362 = scmp.lt.s32.totalorder %s23, 1
        %s363 = scalar_select %p362, %s23, 1
        %s364 = scalar_lea.vmem %s8, %s363
        %v366 = vld [vmem:[%s343] sm:$0xff]
        %v367 = vld [vmem:[%s343 + $0x8] sm:$0xff]
        %v368 = vld [vmem:[%s343 + $0x10] sm:$0xff]
        %v369 = vld [vmem:[%s343 + $0x18] sm:$0xff]
        %v370 = vld [vmem:[%s343 + $0x20] sm:$0xff]
        %v371 = vld [vmem:[%s343 + $0x28] sm:$0xff]
        %v372 = vld [vmem:[%s343 + $0x30] sm:$0xff]
        %v373 = vld [vmem:[%s343 + $0x38] sm:$0xff]
        %v374 = vld [vmem:[%s343 + $0x40] sm:$0xff]
        %v375 = vld [vmem:[%s343 + $0x48] sm:$0xff]
        %v376 = vld [vmem:[%s343 + $0x50] sm:$0xff]
        %v377 = vld [vmem:[%s343 + $0x58] sm:$0xff]
        %v378 = vld [vmem:[%s343 + $0x60] sm:$0xff]
        %v379 = vld [vmem:[%s343 + $0x68] sm:$0xff]
        %v380 = vld [vmem:[%s343 + $0x70] sm:$0xff]
        %v381 = vld [vmem:[%s343 + $0x78] sm:$0xff]
        %v382 = vld [vmem:[%s343 + $0x80] sm:$0xff]
        %v383 = vld [vmem:[%s343 + $0x88] sm:$0xff]
        %v384 = vld [vmem:[%s343 + $0x90] sm:$0xff]
        %v385 = vld [vmem:[%s343 + $0x98] sm:$0xff]
        %v386 = vld [vmem:[%s343 + $0xa0] sm:$0xff]
        %v387 = vld [vmem:[%s343 + $0xa8] sm:$0xff]
        %v388 = vld [vmem:[%s343 + $0xb0] sm:$0xff]
        %v389 = vld [vmem:[%s343 + $0xb8] sm:$0xff]
        %v390 = vld [vmem:[%s343 + $0xc0] sm:$0xff]
        %v391 = vld [vmem:[%s343 + $0xc8] sm:$0xff]
        %v392 = vld [vmem:[%s343 + $0xd0] sm:$0xff]
        %v393 = vld [vmem:[%s343 + $0xd8] sm:$0xff]
        %v394 = vld [vmem:[%s343 + $0xe0] sm:$0xff]
        %v395 = vld [vmem:[%s343 + $0xe8] sm:$0xff]
        %v396 = vld [vmem:[%s343 + $0xf0] sm:$0xff]
        %v397 = vld [vmem:[%s343 + $0xf8] sm:$0xff]
        %v398 = vld [vmem:[%s343 + $0x100] sm:$0xff]
        %v399 = vld [vmem:[%s343 + $0x108] sm:$0xff]
        %v400 = vld [vmem:[%s343 + $0x110] sm:$0xff]
        %v401 = vld [vmem:[%s343 + $0x118] sm:$0xff]
        %v402 = vld [vmem:[%s343 + $0x120] sm:$0xff]
        %v403 = vld [vmem:[%s343 + $0x128] sm:$0xff]
        %v404 = vld [vmem:[%s343 + $0x130] sm:$0xff]
        %v405 = vld [vmem:[%s343 + $0x138] sm:$0xff]
        %v406 = vld [vmem:[%s343 + $0x140] sm:$0xff]
        %v407 = vld [vmem:[%s343 + $0x148] sm:$0xff]
        %v408 = vld [vmem:[%s343 + $0x150] sm:$0xff]
        %v409 = vld [vmem:[%s343 + $0x158] sm:$0xff]
        %v410 = vld [vmem:[%s343 + $0x160] sm:$0xff]
        %v411 = vld [vmem:[%s343 + $0x168] sm:$0xff]
        %v412 = vld [vmem:[%s343 + $0x170] sm:$0xff]
        %v413 = vld [vmem:[%s343 + $0x178] sm:$0xff]
        %v414 = vld [vmem:[%s343 + $0x180] sm:$0xff]
        %v415 = vld [vmem:[%s343 + $0x188] sm:$0xff]
        %v416 = vld [vmem:[%s343 + $0x190] sm:$0xff]
        %v417 = vld [vmem:[%s343 + $0x198] sm:$0xff]
        %v418 = vld [vmem:[%s343 + $0x1a0] sm:$0xff]
        %v419 = vld [vmem:[%s343 + $0x1a8] sm:$0xff]
        %v420 = vld [vmem:[%s343 + $0x1b0] sm:$0xff]
        %v421 = vld [vmem:[%s343 + $0x1b8] sm:$0xff]
        %v422 = vld [vmem:[%s343 + $0x1c0] sm:$0xff]
        %v423 = vld [vmem:[%s343 + $0x1c8] sm:$0xff]
        %v424 = vld [vmem:[%s343 + $0x1d0] sm:$0xff]
        %v425 = vld [vmem:[%s343 + $0x1d8] sm:$0xff]
        %v426 = vld [vmem:[%s343 + $0x1e0] sm:$0xff]
        %v427 = vld [vmem:[%s343 + $0x1e8] sm:$0xff]
        %v428 = vld [vmem:[%s343 + $0x1f0] sm:$0xff]
        %v429 = vld [vmem:[%s343 + $0x1f8] sm:$0xff]
        %v430 = vld [vmem:[%s1] sm:$0xf]
        %v432 = vlaneseq
        %v433 = vshrl.u32 %v432, 7
        %v434 = vsub.s32 0, %v433
        %v435 = vrot.slane %v430, %v434
        %v436 = vlaneseq
        %v437 = vshrl.u32 %v436, 7
        %v438 = vsub.s32 1, %v437
        %v439 = vrot.slane %v430, %v438
        %v440 = vlaneseq
        %v441 = vshrl.u32 %v440, 7
        %v442 = vsub.s32 2, %v441
        %v443 = vrot.slane %v430, %v442
        %v444 = vlaneseq
        %v445 = vshrl.u32 %v444, 7
        %v446 = vsub.s32 3, %v445
        %v447 = vrot.slane %v430, %v446
        %v452 = vmul.f32 %v366, %v435
        %v453 = vmul.f32 %v367, %v439
        %v454 = vmul.f32 %v368, %v443
        %v455 = vmul.f32 %v369, %v447
        %v456 = vmul.f32 %v370, %v435
        %v457 = vmul.f32 %v371, %v439
        %v458 = vmul.f32 %v372, %v443
        %v459 = vmul.f32 %v373, %v447
        %v460 = vmul.f32 %v374, %v435
        %v461 = vmul.f32 %v375, %v439
        %v462 = vmul.f32 %v376, %v443
        %v463 = vmul.f32 %v377, %v447
        %v464 = vmul.f32 %v378, %v435
        %v465 = vmul.f32 %v379, %v439
        %v466 = vmul.f32 %v380, %v443
        %v467 = vmul.f32 %v381, %v447
        %v468 = vmul.f32 %v382, %v435
        %v469 = vmul.f32 %v383, %v439
        %v470 = vmul.f32 %v384, %v443
        %v471 = vmul.f32 %v385, %v447
        %v472 = vmul.f32 %v386, %v435
        %v473 = vmul.f32 %v387, %v439
        %v474 = vmul.f32 %v388, %v443
        %v475 = vmul.f32 %v389, %v447
        %v476 = vmul.f32 %v390, %v435
        %v477 = vmul.f32 %v391, %v439
        %v478 = vmul.f32 %v392, %v443
        %v479 = vmul.f32 %v393, %v447
        %v480 = vmul.f32 %v394, %v435
        %v481 = vmul.f32 %v395, %v439
        %v482 = vmul.f32 %v396, %v443
        %v483 = vmul.f32 %v397, %v447
        %v484 = vmul.f32 %v398, %v435
        %v485 = vmul.f32 %v399, %v439
        %v486 = vmul.f32 %v400, %v443
        %v487 = vmul.f32 %v401, %v447
        %v488 = vmul.f32 %v402, %v435
        %v489 = vmul.f32 %v403, %v439
        %v490 = vmul.f32 %v404, %v443
        %v491 = vmul.f32 %v405, %v447
        %v492 = vmul.f32 %v406, %v435
        %v493 = vmul.f32 %v407, %v439
        %v494 = vmul.f32 %v408, %v443
        %v495 = vmul.f32 %v409, %v447
        %v496 = vmul.f32 %v410, %v435
        %v497 = vmul.f32 %v411, %v439
        %v498 = vmul.f32 %v412, %v443
        %v499 = vmul.f32 %v413, %v447
        %v500 = vmul.f32 %v414, %v435
        %v501 = vmul.f32 %v415, %v439
        %v502 = vmul.f32 %v416, %v443
        %v503 = vmul.f32 %v417, %v447
        %v504 = vmul.f32 %v418, %v435
        %v505 = vmul.f32 %v419, %v439
        %v506 = vmul.f32 %v420, %v443
        %v507 = vmul.f32 %v421, %v447
        %v508 = vmul.f32 %v422, %v435
        %v509 = vmul.f32 %v423, %v439
        %v510 = vmul.f32 %v424, %v443
        %v511 = vmul.f32 %v425, %v447
        %v512 = vmul.f32 %v426, %v435
        %v513 = vmul.f32 %v427, %v439
        %v514 = vmul.f32 %v428, %v443
        %v515 = vmul.f32 %v429, %v447
        %v516 = vld [vmem:[%s2] sm:$0xf]
        %v518 = vlaneseq
        %v519 = vshrl.u32 %v518, 7
        %v520 = vsub.s32 0, %v519
        %v521 = vrot.slane %v516, %v520
        %v522 = vlaneseq
        %v523 = vshrl.u32 %v522, 7
        %v524 = vsub.s32 1, %v523
        %v525 = vrot.slane %v516, %v524
        %v526 = vlaneseq
        %v527 = vshrl.u32 %v526, 7
        %v528 = vsub.s32 2, %v527
        %v529 = vrot.slane %v516, %v528
        %v530 = vlaneseq
        %v531 = vshrl.u32 %v530, 7
        %v532 = vsub.s32 3, %v531
        %v533 = vrot.slane %v516, %v532
        %v538 = vadd.f32 %v452, %v521
        %v539 = vadd.f32 %v453, %v525
        %v540 = vadd.f32 %v454, %v529
        %v541 = vadd.f32 %v455, %v533
        %v542 = vadd.f32 %v456, %v521
        %v543 = vadd.f32 %v457, %v525
        %v544 = vadd.f32 %v458, %v529
        %v545 = vadd.f32 %v459, %v533
        %v546 = vadd.f32 %v460, %v521
        %v547 = vadd.f32 %v461, %v525
        %v548 = vadd.f32 %v462, %v529
        %v549 = vadd.f32 %v463, %v533
        %v550 = vadd.f32 %v464, %v521
        %v551 = vadd.f32 %v465, %v525
        %v552 = vadd.f32 %v466, %v529
        %v553 = vadd.f32 %v467, %v533
        %v554 = vadd.f32 %v468, %v521
        %v555 = vadd.f32 %v469, %v525
        %v556 = vadd.f32 %v470, %v529
        %v557 = vadd.f32 %v471, %v533
        %v558 = vadd.f32 %v472, %v521
        %v559 = vadd.f32 %v473, %v525
        %v560 = vadd.f32 %v474, %v529
        %v561 = vadd.f32 %v475, %v533
        %v562 = vadd.f32 %v476, %v521
        %v563 = vadd.f32 %v477, %v525
        %v564 = vadd.f32 %v478, %v529
        %v565 = vadd.f32 %v479, %v533
        %v566 = vadd.f32 %v480, %v521
        %v567 = vadd.f32 %v481, %v525
        %v568 = vadd.f32 %v482, %v529
        %v569 = vadd.f32 %v483, %v533
        %v570 = vadd.f32 %v484, %v521
        %v571 = vadd.f32 %v485, %v525
        %v572 = vadd.f32 %v486, %v529
        %v573 = vadd.f32 %v487, %v533
        %v574 = vadd.f32 %v488, %v521
        %v575 = vadd.f32 %v489, %v525
        %v576 = vadd.f32 %v490, %v529
        %v577 = vadd.f32 %v491, %v533
        %v578 = vadd.f32 %v492, %v521
        %v579 = vadd.f32 %v493, %v525
        %v580 = vadd.f32 %v494, %v529
        %v581 = vadd.f32 %v495, %v533
        %v582 = vadd.f32 %v496, %v521
        %v583 = vadd.f32 %v497, %v525
        %v584 = vadd.f32 %v498, %v529
        %v585 = vadd.f32 %v499, %v533
        %v586 = vadd.f32 %v500, %v521
        %v587 = vadd.f32 %v501, %v525
        %v588 = vadd.f32 %v502, %v529
        %v589 = vadd.f32 %v503, %v533
        %v590 = vadd.f32 %v504, %v521
        %v591 = vadd.f32 %v505, %v525
        %v592 = vadd.f32 %v506, %v529
        %v593 = vadd.f32 %v507, %v533
        %v594 = vadd.f32 %v508, %v521
        %v595 = vadd.f32 %v509, %v525
        %v596 = vadd.f32 %v510, %v529
        %v597 = vadd.f32 %v511, %v533
        %v598 = vadd.f32 %v512, %v521
        %v599 = vadd.f32 %v513, %v525
        %v600 = vadd.f32 %v514, %v529
        %v601 = vadd.f32 %v515, %v533
        %v602 = vld [vmem:[%s350] sm:$0xff]
        %v603 = vld [vmem:[%s350 + $0x8] sm:$0xff]
        %v604 = vld [vmem:[%s350 + $0x10] sm:$0xff]
        %v605 = vld [vmem:[%s350 + $0x18] sm:$0xff]
        %v606 = vld [vmem:[%s350 + $0x20] sm:$0xff]
        %v607 = vld [vmem:[%s350 + $0x28] sm:$0xff]
        %v608 = vld [vmem:[%s350 + $0x30] sm:$0xff]
        %v609 = vld [vmem:[%s350 + $0x38] sm:$0xff]
        %v610 = vld [vmem:[%s350 + $0x40] sm:$0xff]
        %v611 = vld [vmem:[%s350 + $0x48] sm:$0xff]
        %v612 = vld [vmem:[%s350 + $0x50] sm:$0xff]
        %v613 = vld [vmem:[%s350 + $0x58] sm:$0xff]
        %v614 = vld [vmem:[%s350 + $0x60] sm:$0xff]
        %v615 = vld [vmem:[%s350 + $0x68] sm:$0xff]
        %v616 = vld [vmem:[%s350 + $0x70] sm:$0xff]
        %v617 = vld [vmem:[%s350 + $0x78] sm:$0xff]
        %v618 = vld [vmem:[%s350 + $0x80] sm:$0xff]
        %v619 = vld [vmem:[%s350 + $0x88] sm:$0xff]
        %v620 = vld [vmem:[%s350 + $0x90] sm:$0xff]
        %v621 = vld [vmem:[%s350 + $0x98] sm:$0xff]
        %v622 = vld [vmem:[%s350 + $0xa0] sm:$0xff]
        %v623 = vld [vmem:[%s350 + $0xa8] sm:$0xff]
        %v624 = vld [vmem:[%s350 + $0xb0] sm:$0xff]
        %v625 = vld [vmem:[%s350 + $0xb8] sm:$0xff]
        %v626 = vld [vmem:[%s350 + $0xc0] sm:$0xff]
        %v627 = vld [vmem:[%s350 + $0xc8] sm:$0xff]
        %v628 = vld [vmem:[%s350 + $0xd0] sm:$0xff]
        %v629 = vld [vmem:[%s350 + $0xd8] sm:$0xff]
        %v630 = vld [vmem:[%s350 + $0xe0] sm:$0xff]
        %v631 = vld [vmem:[%s350 + $0xe8] sm:$0xff]
        %v632 = vld [vmem:[%s350 + $0xf0] sm:$0xff]
        %v633 = vld [vmem:[%s350 + $0xf8] sm:$0xff]
        %v634 = vld [vmem:[%s350 + $0x100] sm:$0xff]
        %v635 = vld [vmem:[%s350 + $0x108] sm:$0xff]
        %v636 = vld [vmem:[%s350 + $0x110] sm:$0xff]
        %v637 = vld [vmem:[%s350 + $0x118] sm:$0xff]
        %v638 = vld [vmem:[%s350 + $0x120] sm:$0xff]
        %v639 = vld [vmem:[%s350 + $0x128] sm:$0xff]
        %v640 = vld [vmem:[%s350 + $0x130] sm:$0xff]
        %v641 = vld [vmem:[%s350 + $0x138] sm:$0xff]
        %v642 = vld [vmem:[%s350 + $0x140] sm:$0xff]
        %v643 = vld [vmem:[%s350 + $0x148] sm:$0xff]
        %v644 = vld [vmem:[%s350 + $0x150] sm:$0xff]
        %v645 = vld [vmem:[%s350 + $0x158] sm:$0xff]
        %v646 = vld [vmem:[%s350 + $0x160] sm:$0xff]
        %v647 = vld [vmem:[%s350 + $0x168] sm:$0xff]
        %v648 = vld [vmem:[%s350 + $0x170] sm:$0xff]
        %v649 = vld [vmem:[%s350 + $0x178] sm:$0xff]
        %v650 = vld [vmem:[%s350 + $0x180] sm:$0xff]
        %v651 = vld [vmem:[%s350 + $0x188] sm:$0xff]
        %v652 = vld [vmem:[%s350 + $0x190] sm:$0xff]
        %v653 = vld [vmem:[%s350 + $0x198] sm:$0xff]
        %v654 = vld [vmem:[%s350 + $0x1a0] sm:$0xff]
        %v655 = vld [vmem:[%s350 + $0x1a8] sm:$0xff]
        %v656 = vld [vmem:[%s350 + $0x1b0] sm:$0xff]
        %v657 = vld [vmem:[%s350 + $0x1b8] sm:$0xff]
        %v658 = vld [vmem:[%s350 + $0x1c0] sm:$0xff]
        %v659 = vld [vmem:[%s350 + $0x1c8] sm:$0xff]
        %v660 = vld [vmem:[%s350 + $0x1d0] sm:$0xff]
        %v661 = vld [vmem:[%s350 + $0x1d8] sm:$0xff]
        %v662 = vld [vmem:[%s350 + $0x1e0] sm:$0xff]
        %v663 = vld [vmem:[%s350 + $0x1e8] sm:$0xff]
        %v664 = vld [vmem:[%s350 + $0x1f0] sm:$0xff]
        %v665 = vld [vmem:[%s350 + $0x1f8] sm:$0xff]
        %vm666 = vcmp.lt.s32.totalorder %v602, 0
        %vm667 = vcmp.lt.s32.totalorder %v603, 0
        %vm668 = vcmp.lt.s32.totalorder %v604, 0
        %vm669 = vcmp.lt.s32.totalorder %v605, 0
        %vm670 = vcmp.lt.s32.totalorder %v606, 0
        %vm671 = vcmp.lt.s32.totalorder %v607, 0
        %vm672 = vcmp.lt.s32.totalorder %v608, 0
        %vm673 = vcmp.lt.s32.totalorder %v609, 0
        %vm674 = vcmp.lt.s32.totalorder %v610, 0
        %vm675 = vcmp.lt.s32.totalorder %v611, 0
        %vm676 = vcmp.lt.s32.totalorder %v612, 0
        %vm677 = vcmp.lt.s32.totalorder %v613, 0
        %vm678 = vcmp.lt.s32.totalorder %v614, 0
        %vm679 = vcmp.lt.s32.totalorder %v615, 0
        %vm680 = vcmp.lt.s32.totalorder %v616, 0
        %vm681 = vcmp.lt.s32.totalorder %v617, 0
        %vm682 = vcmp.lt.s32.totalorder %v618, 0
        %vm683 = vcmp.lt.s32.totalorder %v619, 0
        %vm684 = vcmp.lt.s32.totalorder %v620, 0
        %vm685 = vcmp.lt.s32.totalorder %v621, 0
        %vm686 = vcmp.lt.s32.totalorder %v622, 0
        %vm687 = vcmp.lt.s32.totalorder %v623, 0
        %vm688 = vcmp.lt.s32.totalorder %v624, 0
        %vm689 = vcmp.lt.s32.totalorder %v625, 0
        %vm690 = vcmp.lt.s32.totalorder %v626, 0
        %vm691 = vcmp.lt.s32.totalorder %v627, 0
        %vm692 = vcmp.lt.s32.totalorder %v628, 0
        %vm693 = vcmp.lt.s32.totalorder %v629, 0
        %vm694 = vcmp.lt.s32.totalorder %v630, 0
        %vm695 = vcmp.lt.s32.totalorder %v631, 0
        %vm696 = vcmp.lt.s32.totalorder %v632, 0
        %vm697 = vcmp.lt.s32.totalorder %v633, 0
        %vm698 = vcmp.lt.s32.totalorder %v634, 0
        %vm699 = vcmp.lt.s32.totalorder %v635, 0
        %vm700 = vcmp.lt.s32.totalorder %v636, 0
        %vm701 = vcmp.lt.s32.totalorder %v637, 0
        %vm702 = vcmp.lt.s32.totalorder %v638, 0
        %vm703 = vcmp.lt.s32.totalorder %v639, 0
        %vm704 = vcmp.lt.s32.totalorder %v640, 0
        %vm705 = vcmp.lt.s32.totalorder %v641, 0
        %vm706 = vcmp.lt.s32.totalorder %v642, 0
        %vm707 = vcmp.lt.s32.totalorder %v643, 0
        %vm708 = vcmp.lt.s32.totalorder %v644, 0
        %vm709 = vcmp.lt.s32.totalorder %v645, 0
        %vm710 = vcmp.lt.s32.totalorder %v646, 0
        %vm711 = vcmp.lt.s32.totalorder %v647, 0
        %vm712 = vcmp.lt.s32.totalorder %v648, 0
        %vm713 = vcmp.lt.s32.totalorder %v649, 0
        %vm714 = vcmp.lt.s32.totalorder %v650, 0
        %vm715 = vcmp.lt.s32.totalorder %v651, 0
        %vm716 = vcmp.lt.s32.totalorder %v652, 0
        %vm717 = vcmp.lt.s32.totalorder %v653, 0
        %vm718 = vcmp.lt.s32.totalorder %v654, 0
        %vm719 = vcmp.lt.s32.totalorder %v655, 0
        %vm720 = vcmp.lt.s32.totalorder %v656, 0
        %vm721 = vcmp.lt.s32.totalorder %v657, 0
        %vm722 = vcmp.lt.s32.totalorder %v658, 0
        %vm723 = vcmp.lt.s32.totalorder %v659, 0
        %vm724 = vcmp.lt.s32.totalorder %v660, 0
        %vm725 = vcmp.lt.s32.totalorder %v661, 0
        %vm726 = vcmp.lt.s32.totalorder %v662, 0
        %vm727 = vcmp.lt.s32.totalorder %v663, 0
        %vm728 = vcmp.lt.s32.totalorder %v664, 0
        %vm729 = vcmp.lt.s32.totalorder %v665, 0
        %vm730 = vcmp.gt.f32.partialorder %v538, 0.0
        %vm731 = vcmp.gt.f32.partialorder %v539, 0.0
        %vm732 = vcmp.gt.f32.partialorder %v540, 0.0
        %vm733 = vcmp.gt.f32.partialorder %v541, 0.0
        %vm734 = vcmp.gt.f32.partialorder %v542, 0.0
        %vm735 = vcmp.gt.f32.partialorder %v543, 0.0
        %vm736 = vcmp.gt.f32.partialorder %v544, 0.0
        %vm737 = vcmp.gt.f32.partialorder %v545, 0.0
        %vm738 = vcmp.gt.f32.partialorder %v546, 0.0
        %vm739 = vcmp.gt.f32.partialorder %v547, 0.0
        %vm740 = vcmp.gt.f32.partialorder %v548, 0.0
        %vm741 = vcmp.gt.f32.partialorder %v549, 0.0
        %vm742 = vcmp.gt.f32.partialorder %v550, 0.0
        %vm743 = vcmp.gt.f32.partialorder %v551, 0.0
        %vm744 = vcmp.gt.f32.partialorder %v552, 0.0
        %vm745 = vcmp.gt.f32.partialorder %v553, 0.0
        %vm746 = vcmp.gt.f32.partialorder %v554, 0.0
        %vm747 = vcmp.gt.f32.partialorder %v555, 0.0
        %vm748 = vcmp.gt.f32.partialorder %v556, 0.0
        %vm749 = vcmp.gt.f32.partialorder %v557, 0.0
        %vm750 = vcmp.gt.f32.partialorder %v558, 0.0
        %vm751 = vcmp.gt.f32.partialorder %v559, 0.0
        %vm752 = vcmp.gt.f32.partialorder %v560, 0.0
        %vm753 = vcmp.gt.f32.partialorder %v561, 0.0
        %vm754 = vcmp.gt.f32.partialorder %v562, 0.0
        %vm755 = vcmp.gt.f32.partialorder %v563, 0.0
        %vm756 = vcmp.gt.f32.partialorder %v564, 0.0
        %vm757 = vcmp.gt.f32.partialorder %v565, 0.0
        %vm758 = vcmp.gt.f32.partialorder %v566, 0.0
        %vm759 = vcmp.gt.f32.partialorder %v567, 0.0
        %vm760 = vcmp.gt.f32.partialorder %v568, 0.0
        %vm761 = vcmp.gt.f32.partialorder %v569, 0.0
        %vm762 = vcmp.gt.f32.partialorder %v570, 0.0
        %vm763 = vcmp.gt.f32.partialorder %v571, 0.0
        %vm764 = vcmp.gt.f32.partialorder %v572, 0.0
        %vm765 = vcmp.gt.f32.partialorder %v573, 0.0
        %vm766 = vcmp.gt.f32.partialorder %v574, 0.0
        %vm767 = vcmp.gt.f32.partialorder %v575, 0.0
        %vm768 = vcmp.gt.f32.partialorder %v576, 0.0
        %vm769 = vcmp.gt.f32.partialorder %v577, 0.0
        %vm770 = vcmp.gt.f32.partialorder %v578, 0.0
        %vm771 = vcmp.gt.f32.partialorder %v579, 0.0
        %vm772 = vcmp.gt.f32.partialorder %v580, 0.0
        %vm773 = vcmp.gt.f32.partialorder %v581, 0.0
        %vm774 = vcmp.gt.f32.partialorder %v582, 0.0
        %vm775 = vcmp.gt.f32.partialorder %v583, 0.0
        %vm776 = vcmp.gt.f32.partialorder %v584, 0.0
        %vm777 = vcmp.gt.f32.partialorder %v585, 0.0
        %vm778 = vcmp.gt.f32.partialorder %v586, 0.0
        %vm779 = vcmp.gt.f32.partialorder %v587, 0.0
        %vm780 = vcmp.gt.f32.partialorder %v588, 0.0
        %vm781 = vcmp.gt.f32.partialorder %v589, 0.0
        %vm782 = vcmp.gt.f32.partialorder %v590, 0.0
        %vm783 = vcmp.gt.f32.partialorder %v591, 0.0
        %vm784 = vcmp.gt.f32.partialorder %v592, 0.0
        %vm785 = vcmp.gt.f32.partialorder %v593, 0.0
        %vm786 = vcmp.gt.f32.partialorder %v594, 0.0
        %vm787 = vcmp.gt.f32.partialorder %v595, 0.0
        %vm788 = vcmp.gt.f32.partialorder %v596, 0.0
        %vm789 = vcmp.gt.f32.partialorder %v597, 0.0
        %vm790 = vcmp.gt.f32.partialorder %v598, 0.0
        %vm791 = vcmp.gt.f32.partialorder %v599, 0.0
        %vm792 = vcmp.gt.f32.partialorder %v600, 0.0
        %vm793 = vcmp.gt.f32.partialorder %v601, 0.0
        %vm794 = vmand %vm666, %vm730
        %vm795 = vmand %vm667, %vm731
        %vm796 = vmand %vm668, %vm732
        %vm797 = vmand %vm669, %vm733
        %vm798 = vmand %vm670, %vm734
        %vm799 = vmand %vm671, %vm735
        %vm800 = vmand %vm672, %vm736
        %vm801 = vmand %vm673, %vm737
        %vm802 = vmand %vm674, %vm738
        %vm803 = vmand %vm675, %vm739
        %vm804 = vmand %vm676, %vm740
        %vm805 = vmand %vm677, %vm741
        %vm806 = vmand %vm678, %vm742
        %vm807 = vmand %vm679, %vm743
        %vm808 = vmand %vm680, %vm744
        %vm809 = vmand %vm681, %vm745
        %vm810 = vmand %vm682, %vm746
        %vm811 = vmand %vm683, %vm747
        %vm812 = vmand %vm684, %vm748
        %vm813 = vmand %vm685, %vm749
        %vm814 = vmand %vm686, %vm750
        %vm815 = vmand %vm687, %vm751
        %vm816 = vmand %vm688, %vm752
        %vm817 = vmand %vm689, %vm753
        %vm818 = vmand %vm690, %vm754
        %vm819 = vmand %vm691, %vm755
        %vm820 = vmand %vm692, %vm756
        %vm821 = vmand %vm693, %vm757
        %vm822 = vmand %vm694, %vm758
        %vm823 = vmand %vm695, %vm759
        %vm824 = vmand %vm696, %vm760
        %vm825 = vmand %vm697, %vm761
        %vm826 = vmand %vm698, %vm762
        %vm827 = vmand %vm699, %vm763
        %vm828 = vmand %vm700, %vm764
        %vm829 = vmand %vm701, %vm765
        %vm830 = vmand %vm702, %vm766
        %vm831 = vmand %vm703, %vm767
        %vm832 = vmand %vm704, %vm768
        %vm833 = vmand %vm705, %vm769
        %vm834 = vmand %vm706, %vm770
        %vm835 = vmand %vm707, %vm771
        %vm836 = vmand %vm708, %vm772
        %vm837 = vmand %vm709, %vm773
        %vm838 = vmand %vm710, %vm774
        %vm839 = vmand %vm711, %vm775
        %vm840 = vmand %vm712, %vm776
        %vm841 = vmand %vm713, %vm777
        %vm842 = vmand %vm714, %vm778
        %vm843 = vmand %vm715, %vm779
        %vm844 = vmand %vm716, %vm780
        %vm845 = vmand %vm717, %vm781
        %vm846 = vmand %vm718, %vm782
        %vm847 = vmand %vm719, %vm783
        %vm848 = vmand %vm720, %vm784
        %vm849 = vmand %vm721, %vm785
        %vm850 = vmand %vm722, %vm786
        %vm851 = vmand %vm723, %vm787
        %vm852 = vmand %vm724, %vm788
        %vm853 = vmand %vm725, %vm789
        %vm854 = vmand %vm726, %vm790
        %vm855 = vmand %vm727, %vm791
        %vm856 = vmand %vm728, %vm792
        %vm857 = vmand %vm729, %vm793
        %v858 = vmul.f32 %v538, 2.0
        %v859 = vmul.f32 %v539, 2.0
        %v860 = vmul.f32 %v540, 2.0
        %v861 = vmul.f32 %v541, 2.0
        %v862 = vmul.f32 %v542, 2.0
        %v863 = vmul.f32 %v543, 2.0
        %v864 = vmul.f32 %v544, 2.0
        %v865 = vmul.f32 %v545, 2.0
        %v866 = vmul.f32 %v546, 2.0
        %v867 = vmul.f32 %v547, 2.0
        %v868 = vmul.f32 %v548, 2.0
        %v869 = vmul.f32 %v549, 2.0
        %v870 = vmul.f32 %v550, 2.0
        %v871 = vmul.f32 %v551, 2.0
        %v872 = vmul.f32 %v552, 2.0
        %v873 = vmul.f32 %v553, 2.0
        %v874 = vmul.f32 %v554, 2.0
        %v875 = vmul.f32 %v555, 2.0
        %v876 = vmul.f32 %v556, 2.0
        %v877 = vmul.f32 %v557, 2.0
        %v878 = vmul.f32 %v558, 2.0
        %v879 = vmul.f32 %v559, 2.0
        %v880 = vmul.f32 %v560, 2.0
        %v881 = vmul.f32 %v561, 2.0
        %v882 = vmul.f32 %v562, 2.0
        %v883 = vmul.f32 %v563, 2.0
        %v884 = vmul.f32 %v564, 2.0
        %v885 = vmul.f32 %v565, 2.0
        %v886 = vmul.f32 %v566, 2.0
        %v887 = vmul.f32 %v567, 2.0
        %v888 = vmul.f32 %v568, 2.0
        %v889 = vmul.f32 %v569, 2.0
        %v890 = vmul.f32 %v570, 2.0
        %v891 = vmul.f32 %v571, 2.0
        %v892 = vmul.f32 %v572, 2.0
        %v893 = vmul.f32 %v573, 2.0
        %v894 = vmul.f32 %v574, 2.0
        %v895 = vmul.f32 %v575, 2.0
        %v896 = vmul.f32 %v576, 2.0
        %v897 = vmul.f32 %v577, 2.0
        %v898 = vmul.f32 %v578, 2.0
        %v899 = vmul.f32 %v579, 2.0
        %v900 = vmul.f32 %v580, 2.0
        %v901 = vmul.f32 %v581, 2.0
        %v902 = vmul.f32 %v582, 2.0
        %v903 = vmul.f32 %v583, 2.0
        %v904 = vmul.f32 %v584, 2.0
        %v905 = vmul.f32 %v585, 2.0
        %v906 = vmul.f32 %v586, 2.0
        %v907 = vmul.f32 %v587, 2.0
        %v908 = vmul.f32 %v588, 2.0
        %v909 = vmul.f32 %v589, 2.0
        %v910 = vmul.f32 %v590, 2.0
        %v911 = vmul.f32 %v591, 2.0
        %v912 = vmul.f32 %v592, 2.0
        %v913 = vmul.f32 %v593, 2.0
        %v914 = vmul.f32 %v594, 2.0
        %v915 = vmul.f32 %v595, 2.0
        %v916 = vmul.f32 %v596, 2.0
        %v917 = vmul.f32 %v597, 2.0
        %v918 = vmul.f32 %v598, 2.0
        %v919 = vmul.f32 %v599, 2.0
        %v920 = vmul.f32 %v600, 2.0
        %v921 = vmul.f32 %v601, 2.0
        %v922 = vsel %vm794, %v858, 0.0
        %v923 = vsel %vm795, %v859, 0.0
        %v924 = vsel %vm796, %v860, 0.0
        %v925 = vsel %vm797, %v861, 0.0
        %v926 = vsel %vm798, %v862, 0.0
        %v927 = vsel %vm799, %v863, 0.0
        %v928 = vsel %vm800, %v864, 0.0
        %v929 = vsel %vm801, %v865, 0.0
        %v930 = vsel %vm802, %v866, 0.0
        %v931 = vsel %vm803, %v867, 0.0
        %v932 = vsel %vm804, %v868, 0.0
        %v933 = vsel %vm805, %v869, 0.0
        %v934 = vsel %vm806, %v870, 0.0
        %v935 = vsel %vm807, %v871, 0.0
        %v936 = vsel %vm808, %v872, 0.0
        %v937 = vsel %vm809, %v873, 0.0
        %v938 = vsel %vm810, %v874, 0.0
        %v939 = vsel %vm811, %v875, 0.0
        %v940 = vsel %vm812, %v876, 0.0
        %v941 = vsel %vm813, %v877, 0.0
        %v942 = vsel %vm814, %v878, 0.0
        %v943 = vsel %vm815, %v879, 0.0
        %v944 = vsel %vm816, %v880, 0.0
        %v945 = vsel %vm817, %v881, 0.0
        %v946 = vsel %vm818, %v882, 0.0
        %v947 = vsel %vm819, %v883, 0.0
        %v948 = vsel %vm820, %v884, 0.0
        %v949 = vsel %vm821, %v885, 0.0
        %v950 = vsel %vm822, %v886, 0.0
        %v951 = vsel %vm823, %v887, 0.0
        %v952 = vsel %vm824, %v888, 0.0
        %v953 = vsel %vm825, %v889, 0.0
        %v954 = vsel %vm826, %v890, 0.0
        %v955 = vsel %vm827, %v891, 0.0
        %v956 = vsel %vm828, %v892, 0.0
        %v957 = vsel %vm829, %v893, 0.0
        %v958 = vsel %vm830, %v894, 0.0
        %v959 = vsel %vm831, %v895, 0.0
        %v960 = vsel %vm832, %v896, 0.0
        %v961 = vsel %vm833, %v897, 0.0
        %v962 = vsel %vm834, %v898, 0.0
        %v963 = vsel %vm835, %v899, 0.0
        %v964 = vsel %vm836, %v900, 0.0
        %v965 = vsel %vm837, %v901, 0.0
        %v966 = vsel %vm838, %v902, 0.0
        %v967 = vsel %vm839, %v903, 0.0
        %v968 = vsel %vm840, %v904, 0.0
        %v969 = vsel %vm841, %v905, 0.0
        %v970 = vsel %vm842, %v906, 0.0
        %v971 = vsel %vm843, %v907, 0.0
        %v972 = vsel %vm844, %v908, 0.0
        %v973 = vsel %vm845, %v909, 0.0
        %v974 = vsel %vm846, %v910, 0.0
        %v975 = vsel %vm847, %v911, 0.0
        %v976 = vsel %vm848, %v912, 0.0
        %v977 = vsel %vm849, %v913, 0.0
        %v978 = vsel %vm850, %v914, 0.0
        %v979 = vsel %vm851, %v915, 0.0
        %v980 = vsel %vm852, %v916, 0.0
        %v981 = vsel %vm853, %v917, 0.0
        %v982 = vsel %vm854, %v918, 0.0
        %v983 = vsel %vm855, %v919, 0.0
        %v984 = vsel %vm856, %v920, 0.0
        %v985 = vsel %vm857, %v921, 0.0
        %986 = vst [vmem:[%s320] sm:$0xff] %v922
        %987 = vst [vmem:[%s320 + $0x8] sm:$0xff] %v923
        %988 = vst [vmem:[%s320 + $0x10] sm:$0xff] %v924
        %989 = vst [vmem:[%s320 + $0x18] sm:$0xff] %v925
        %990 = vst [vmem:[%s320 + $0x20] sm:$0xff] %v926
        %991 = vst [vmem:[%s320 + $0x28] sm:$0xff] %v927
        %992 = vst [vmem:[%s320 + $0x30] sm:$0xff] %v928
        %993 = vst [vmem:[%s320 + $0x38] sm:$0xff] %v929
        %994 = vst [vmem:[%s320 + $0x40] sm:$0xff] %v930
        %995 = vst [vmem:[%s320 + $0x48] sm:$0xff] %v931
        %996 = vst [vmem:[%s320 + $0x50] sm:$0xff] %v932
        %997 = vst [vmem:[%s320 + $0x58] sm:$0xff] %v933
        %998 = vst [vmem:[%s320 + $0x60] sm:$0xff] %v934
        %999 = vst [vmem:[%s320 + $0x68] sm:$0xff] %v935
        %1000 = vst [vmem:[%s320 + $0x70] sm:$0xff] %v936
        %1001 = vst [vmem:[%s320 + $0x78] sm:$0xff] %v937
        %1002 = vst [vmem:[%s320 + $0x80] sm:$0xff] %v938
        %1003 = vst [vmem:[%s320 + $0x88] sm:$0xff] %v939
        %1004 = vst [vmem:[%s320 + $0x90] sm:$0xff] %v940
        %1005 = vst [vmem:[%s320 + $0x98] sm:$0xff] %v941
        %1006 = vst [vmem:[%s320 + $0xa0] sm:$0xff] %v942
        %1007 = vst [vmem:[%s320 + $0xa8] sm:$0xff] %v943
        %1008 = vst [vmem:[%s320 + $0xb0] sm:$0xff] %v944
        %1009 = vst [vmem:[%s320 + $0xb8] sm:$0xff] %v945
        %1010 = vst [vmem:[%s320 + $0xc0] sm:$0xff] %v946
        %1011 = vst [vmem:[%s320 + $0xc8] sm:$0xff] %v947
        %1012 = vst [vmem:[%s320 + $0xd0] sm:$0xff] %v948
        %1013 = vst [vmem:[%s320 + $0xd8] sm:$0xff] %v949
        %1014 = vst [vmem:[%s320 + $0xe0] sm:$0xff] %v950
        %1015 = vst [vmem:[%s320 + $0xe8] sm:$0xff] %v951
        %1016 = vst [vmem:[%s320 + $0xf0] sm:$0xff] %v952
        %1017 = vst [vmem:[%s320 + $0xf8] sm:$0xff] %v953
        %1018 = vst [vmem:[%s320 + $0x100] sm:$0xff] %v954
        %1019 = vst [vmem:[%s320 + $0x108] sm:$0xff] %v955
        %1020 = vst [vmem:[%s320 + $0x110] sm:$0xff] %v956
        %1021 = vst [vmem:[%s320 + $0x118] sm:$0xff] %v957
        %1022 = vst [vmem:[%s320 + $0x120] sm:$0xff] %v958
        %1023 = vst [vmem:[%s320 + $0x128] sm:$0xff] %v959
        %1024 = vst [vmem:[%s320 + $0x130] sm:$0xff] %v960
        %1025 = vst [vmem:[%s320 + $0x138] sm:$0xff] %v961
        %1026 = vst [vmem:[%s320 + $0x140] sm:$0xff] %v962
        %1027 = vst [vmem:[%s320 + $0x148] sm:$0xff] %v963
        %1028 = vst [vmem:[%s320 + $0x150] sm:$0xff] %v964
        %1029 = vst [vmem:[%s320 + $0x158] sm:$0xff] %v965
        %1030 = vst [vmem:[%s320 + $0x160] sm:$0xff] %v966
        %1031 = vst [vmem:[%s320 + $0x168] sm:$0xff] %v967
        %1032 = vst [vmem:[%s320 + $0x170] sm:$0xff] %v968
        %1033 = vst [vmem:[%s320 + $0x178] sm:$0xff] %v969
        %1034 = vst [vmem:[%s320 + $0x180] sm:$0xff] %v970
        %1035 = vst [vmem:[%s320 + $0x188] sm:$0xff] %v971
        %1036 = vst [vmem:[%s320 + $0x190] sm:$0xff] %v972
        %1037 = vst [vmem:[%s320 + $0x198] sm:$0xff] %v973
        %1038 = vst [vmem:[%s320 + $0x1a0] sm:$0xff] %v974
        %1039 = vst [vmem:[%s320 + $0x1a8] sm:$0xff] %v975
        %1040 = vst [vmem:[%s320 + $0x1b0] sm:$0xff] %v976
        %1041 = vst [vmem:[%s320 + $0x1b8] sm:$0xff] %v977
        %1042 = vst [vmem:[%s320 + $0x1c0] sm:$0xff] %v978
        %1043 = vst [vmem:[%s320 + $0x1c8] sm:$0xff] %v979
        %1044 = vst [vmem:[%s320 + $0x1d0] sm:$0xff] %v980
        %1045 = vst [vmem:[%s320 + $0x1d8] sm:$0xff] %v981
        %1046 = vst [vmem:[%s320 + $0x1e0] sm:$0xff] %v982
        %1047 = vst [vmem:[%s320 + $0x1e8] sm:$0xff] %v983
        %1048 = vst [vmem:[%s320 + $0x1f0] sm:$0xff] %v984
        %1049 = vst [vmem:[%s320 + $0x1f8] sm:$0xff] %v985
        %v1050 = vpack.c.bf16 %v926, %v922
        %v1051 = vpack.c.bf16 %v927, %v923
        %v1052 = vpack.c.bf16 %v928, %v924
        %v1053 = vpack.c.bf16 %v929, %v925
        %v1054 = vpack.c.bf16 %v934, %v930
        %v1055 = vpack.c.bf16 %v935, %v931
        %v1056 = vpack.c.bf16 %v936, %v932
        %v1057 = vpack.c.bf16 %v937, %v933
        %v1058 = vpack.c.bf16 %v942, %v938
        %v1059 = vpack.c.bf16 %v943, %v939
        %v1060 = vpack.c.bf16 %v944, %v940
        %v1061 = vpack.c.bf16 %v945, %v941
        %v1062 = vpack.c.bf16 %v950, %v946
        %v1063 = vpack.c.bf16 %v951, %v947
        %v1064 = vpack.c.bf16 %v952, %v948
        %v1065 = vpack.c.bf16 %v953, %v949
        %v1066 = vpack.c.bf16 %v958, %v954
        %v1067 = vpack.c.bf16 %v959, %v955
        %v1068 = vpack.c.bf16 %v960, %v956
        %v1069 = vpack.c.bf16 %v961, %v957
        %v1070 = vpack.c.bf16 %v966, %v962
        %v1071 = vpack.c.bf16 %v967, %v963
        %v1072 = vpack.c.bf16 %v968, %v964
        %v1073 = vpack.c.bf16 %v969, %v965
        %v1074 = vpack.c.bf16 %v974, %v970
        %v1075 = vpack.c.bf16 %v975, %v971
        %v1076 = vpack.c.bf16 %v976, %v972
        %v1077 = vpack.c.bf16 %v977, %v973
        %v1078 = vpack.c.bf16 %v982, %v978
        %v1079 = vpack.c.bf16 %v983, %v979
        %v1080 = vpack.c.bf16 %v984, %v980
        %v1081 = vpack.c.bf16 %v985, %v981
        %v1082 = vld [vmem:[%s4] sm:$0xf]
        %v1083 = vld [vmem:[%s4 + $0x4] sm:$0xf]
        %v1084 = vld [vmem:[%s4 + $0x8] sm:$0xf]
        %v1085 = vld [vmem:[%s4 + $0xc] sm:$0xf]
        %v1086 = vld [vmem:[%s4 + $0x10] sm:$0xf]
        %v1087 = vld [vmem:[%s4 + $0x14] sm:$0xf]
        %v1088 = vld [vmem:[%s4 + $0x18] sm:$0xf]
        %v1089 = vld [vmem:[%s4 + $0x1c] sm:$0xf]
        %v1090 = vld [vmem:[%s4 + $0x20] sm:$0xf]
        %v1091 = vld [vmem:[%s4 + $0x24] sm:$0xf]
        %v1092 = vld [vmem:[%s4 + $0x28] sm:$0xf]
        %v1093 = vld [vmem:[%s4 + $0x2c] sm:$0xf]
        %v1094 = vld [vmem:[%s4 + $0x30] sm:$0xf]
        %v1095 = vld [vmem:[%s4 + $0x34] sm:$0xf]
        %v1096 = vld [vmem:[%s4 + $0x38] sm:$0xf]
        %v1097 = vld [vmem:[%s4 + $0x3c] sm:$0xf]
        %v1098 = vld [vmem:[%s4 + $0x40] sm:$0xf]
        %v1099 = vld [vmem:[%s4 + $0x44] sm:$0xf]
        %v1100 = vld [vmem:[%s4 + $0x48] sm:$0xf]
        %v1101 = vld [vmem:[%s4 + $0x4c] sm:$0xf]
        %v1102 = vld [vmem:[%s4 + $0x50] sm:$0xf]
        %v1103 = vld [vmem:[%s4 + $0x54] sm:$0xf]
        %v1104 = vld [vmem:[%s4 + $0x58] sm:$0xf]
        %v1105 = vld [vmem:[%s4 + $0x5c] sm:$0xf]
        %v1106 = vld [vmem:[%s4 + $0x60] sm:$0xf]
        %v1107 = vld [vmem:[%s4 + $0x64] sm:$0xf]
        %v1108 = vld [vmem:[%s4 + $0x68] sm:$0xf]
        %v1109 = vld [vmem:[%s4 + $0x6c] sm:$0xf]
        %v1110 = vld [vmem:[%s4 + $0x70] sm:$0xf]
        %v1111 = vld [vmem:[%s4 + $0x74] sm:$0xf]
        %v1112 = vld [vmem:[%s4 + $0x78] sm:$0xf]
        %v1113 = vld [vmem:[%s4 + $0x7c] sm:$0xf]
        %v1114 = vld [vmem:[%s4 + $0x80] sm:$0xf]
        %v1115 = vld [vmem:[%s4 + $0x84] sm:$0xf]
        %v1116 = vld [vmem:[%s4 + $0x88] sm:$0xf]
        %v1117 = vld [vmem:[%s4 + $0x8c] sm:$0xf]
        %v1118 = vld [vmem:[%s4 + $0x90] sm:$0xf]
        %v1119 = vld [vmem:[%s4 + $0x94] sm:$0xf]
        %v1120 = vld [vmem:[%s4 + $0x98] sm:$0xf]
        %v1121 = vld [vmem:[%s4 + $0x9c] sm:$0xf]
        %v1122 = vld [vmem:[%s4 + $0xa0] sm:$0xf]
        %v1123 = vld [vmem:[%s4 + $0xa4] sm:$0xf]
        %v1124 = vld [vmem:[%s4 + $0xa8] sm:$0xf]
        %v1125 = vld [vmem:[%s4 + $0xac] sm:$0xf]
        %v1126 = vld [vmem:[%s4 + $0xb0] sm:$0xf]
        %v1127 = vld [vmem:[%s4 + $0xb4] sm:$0xf]
        %v1128 = vld [vmem:[%s4 + $0xb8] sm:$0xf]
        %v1129 = vld [vmem:[%s4 + $0xbc] sm:$0xf]
        %v1130 = vld [vmem:[%s4 + $0xc0] sm:$0xf]
        %v1131 = vld [vmem:[%s4 + $0xc4] sm:$0xf]
        %v1132 = vld [vmem:[%s4 + $0xc8] sm:$0xf]
        %v1133 = vld [vmem:[%s4 + $0xcc] sm:$0xf]
        %v1134 = vld [vmem:[%s4 + $0xd0] sm:$0xf]
        %v1135 = vld [vmem:[%s4 + $0xd4] sm:$0xf]
        %v1136 = vld [vmem:[%s4 + $0xd8] sm:$0xf]
        %v1137 = vld [vmem:[%s4 + $0xdc] sm:$0xf]
        %v1138 = vld [vmem:[%s4 + $0xe0] sm:$0xf]
        %v1139 = vld [vmem:[%s4 + $0xe4] sm:$0xf]
        %v1140 = vld [vmem:[%s4 + $0xe8] sm:$0xf]
        %v1141 = vld [vmem:[%s4 + $0xec] sm:$0xf]
        %v1142 = vld [vmem:[%s4 + $0xf0] sm:$0xf]
        %v1143 = vld [vmem:[%s4 + $0xf4] sm:$0xf]
        %v1144 = vld [vmem:[%s4 + $0xf8] sm:$0xf]
        %v1145 = vld [vmem:[%s4 + $0xfc] sm:$0xf]
        %v1210 = vunpack.c.l.b16 %v1082
        %v1211 = vunpack.c.l.b16 %v1083
        %v1212 = vunpack.c.l.b16 %v1084
        %v1213 = vunpack.c.l.b16 %v1085
        %v1214 = vunpack.c.l.b16 %v1086
        %v1215 = vunpack.c.l.b16 %v1087
        %v1216 = vunpack.c.l.b16 %v1088
        %v1217 = vunpack.c.l.b16 %v1089
        %v1218 = vunpack.c.l.b16 %v1090
        %v1219 = vunpack.c.l.b16 %v1091
        %v1220 = vunpack.c.l.b16 %v1092
        %v1221 = vunpack.c.l.b16 %v1093
        %v1222 = vunpack.c.l.b16 %v1094
        %v1223 = vunpack.c.l.b16 %v1095
        %v1224 = vunpack.c.l.b16 %v1096
        %v1225 = vunpack.c.l.b16 %v1097
        %v1226 = vunpack.c.l.b16 %v1098
        %v1227 = vunpack.c.l.b16 %v1099
        %v1228 = vunpack.c.l.b16 %v1100
        %v1229 = vunpack.c.l.b16 %v1101
        %v1230 = vunpack.c.l.b16 %v1102
        %v1231 = vunpack.c.l.b16 %v1103
        %v1232 = vunpack.c.l.b16 %v1104
        %v1233 = vunpack.c.l.b16 %v1105
        %v1234 = vunpack.c.l.b16 %v1106
        %v1235 = vunpack.c.l.b16 %v1107
        %v1236 = vunpack.c.l.b16 %v1108
        %v1237 = vunpack.c.l.b16 %v1109
        %v1238 = vunpack.c.l.b16 %v1110
        %v1239 = vunpack.c.l.b16 %v1111
        %v1240 = vunpack.c.l.b16 %v1112
        %v1241 = vunpack.c.l.b16 %v1113
        %v1242 = vunpack.c.l.b16 %v1114
        %v1243 = vunpack.c.l.b16 %v1115
        %v1244 = vunpack.c.l.b16 %v1116
        %v1245 = vunpack.c.l.b16 %v1117
        %v1246 = vunpack.c.l.b16 %v1118
        %v1247 = vunpack.c.l.b16 %v1119
        %v1248 = vunpack.c.l.b16 %v1120
        %v1249 = vunpack.c.l.b16 %v1121
        %v1250 = vunpack.c.l.b16 %v1122
        %v1251 = vunpack.c.l.b16 %v1123
        %v1252 = vunpack.c.l.b16 %v1124
        %v1253 = vunpack.c.l.b16 %v1125
        %v1254 = vunpack.c.l.b16 %v1126
        %v1255 = vunpack.c.l.b16 %v1127
        %v1256 = vunpack.c.l.b16 %v1128
        %v1257 = vunpack.c.l.b16 %v1129
        %v1258 = vunpack.c.l.b16 %v1130
        %v1259 = vunpack.c.l.b16 %v1131
        %v1260 = vunpack.c.l.b16 %v1132
        %v1261 = vunpack.c.l.b16 %v1133
        %v1262 = vunpack.c.l.b16 %v1134
        %v1263 = vunpack.c.l.b16 %v1135
        %v1264 = vunpack.c.l.b16 %v1136
        %v1265 = vunpack.c.l.b16 %v1137
        %v1266 = vunpack.c.l.b16 %v1138
        %v1267 = vunpack.c.l.b16 %v1139
        %v1268 = vunpack.c.l.b16 %v1140
        %v1269 = vunpack.c.l.b16 %v1141
        %v1270 = vunpack.c.l.b16 %v1142
        %v1271 = vunpack.c.l.b16 %v1143
        %v1272 = vunpack.c.l.b16 %v1144
        %v1273 = vunpack.c.l.b16 %v1145
        %v1274 = vpack.c.b16 %v1211, %v1210
        %v1275 = vpack.c.b16 %v1213, %v1212
        %v1276 = vpack.c.b16 %v1215, %v1214
        %v1277 = vpack.c.b16 %v1217, %v1216
        %v1278 = vpack.c.b16 %v1219, %v1218
        %v1279 = vpack.c.b16 %v1221, %v1220
        %v1280 = vpack.c.b16 %v1223, %v1222
        %v1281 = vpack.c.b16 %v1225, %v1224
        %v1282 = vpack.c.b16 %v1227, %v1226
        %v1283 = vpack.c.b16 %v1229, %v1228
        %v1284 = vpack.c.b16 %v1231, %v1230
        %v1285 = vpack.c.b16 %v1233, %v1232
        %v1286 = vpack.c.b16 %v1235, %v1234
        %v1287 = vpack.c.b16 %v1237, %v1236
        %v1288 = vpack.c.b16 %v1239, %v1238
        %v1289 = vpack.c.b16 %v1241, %v1240
        %v1290 = vpack.c.b16 %v1243, %v1242
        %v1291 = vpack.c.b16 %v1245, %v1244
        %v1292 = vpack.c.b16 %v1247, %v1246
        %v1293 = vpack.c.b16 %v1249, %v1248
        %v1294 = vpack.c.b16 %v1251, %v1250
        %v1295 = vpack.c.b16 %v1253, %v1252
        %v1296 = vpack.c.b16 %v1255, %v1254
        %v1297 = vpack.c.b16 %v1257, %v1256
        %v1298 = vpack.c.b16 %v1259, %v1258
        %v1299 = vpack.c.b16 %v1261, %v1260
        %v1300 = vpack.c.b16 %v1263, %v1262
        %v1301 = vpack.c.b16 %v1265, %v1264
        %v1302 = vpack.c.b16 %v1267, %v1266
        %v1303 = vpack.c.b16 %v1269, %v1268
        %v1304 = vpack.c.b16 %v1271, %v1270
        %v1305 = vpack.c.b16 %v1273, %v1272
        %1338 = vmatprep.subr.bf16.mxu0 0
        %1339 = vmatpush1.bf16.msra.mxu0 %v1274
        %1340 = vmatprep.subr.bf16.mxu0 0
        %1341 = vmatpush1.bf16.msra.mxu0 %v1275
        %1342 = vmatprep.subr.bf16.mxu0 0
        %1343 = vmatpush1.bf16.msra.mxu0 %v1276
        %1344 = vmatprep.subr.bf16.mxu0 0
        %1345 = vmatpush1.bf16.msra.mxu0 %v1277
        %1346 = vmatprep.subr.bf16.mxu0 0
        %1347 = vmatpush1.bf16.msra.mxu0 %v1278
        %1348 = vmatprep.subr.bf16.mxu0 0
        %1349 = vmatpush1.bf16.msra.mxu0 %v1279
        %1350 = vmatprep.subr.bf16.mxu0 0
        %1351 = vmatpush1.bf16.msra.mxu0 %v1280
        %1352 = vmatprep.subr.bf16.mxu0 0
        %1353 = vmatpush1.bf16.msra.mxu0 %v1281
        %1354 = vmatprep.subr.bf16.mxu0 0
        %1355 = vmatpush1.bf16.msra.mxu0 %v1282
        %1356 = vmatprep.subr.bf16.mxu0 0
        %1357 = vmatpush1.bf16.msra.mxu0 %v1283
        %1358 = vmatprep.subr.bf16.mxu0 0
        %1359 = vmatpush1.bf16.msra.mxu0 %v1284
        %1360 = vmatprep.subr.bf16.mxu0 0
        %1361 = vmatpush1.bf16.msra.mxu0 %v1285
        %1362 = vmatprep.subr.bf16.mxu0 0
        %1363 = vmatpush1.bf16.msra.mxu0 %v1286
        %1364 = vmatprep.subr.bf16.mxu0 0
        %1365 = vmatpush1.bf16.msra.mxu0 %v1287
        %1366 = vmatprep.subr.bf16.mxu0 0
        %1367 = vmatpush1.bf16.msra.mxu0 %v1288
        %1368 = vmatprep.subr.bf16.mxu0 0
        %1369 = vmatpush1.bf16.msra.mxu0 %v1289
        %1370 = vmatprep.mubr.bf16.mxu0 %v1051
        %1371 = vmatmul.mubr.bf16.gmra.mrb[0].mxu0 %v1050
        %v1372 = vpop.f32.mrb[0].mxu0
        %v1373 = vadd.f32 0.0, %v1372
        %v1374 = vpop.f32.mrb[0].mxu0
        %v1375 = vpop.f32.mrb[0].mxu0
        %v1376 = vadd.f32 0.0, %v1375
        %v1377 = vpop.f32.mrb[0].mxu0
        %1378 = vmatprep.mubr.bf16.mxu0 %v1055
        %1379 = vmatmul.mubr.bf16.gmra.mrb[0].mxu0 %v1054
        %v1380 = vpop.f32.mrb[0].mxu0
        %v1381 = vadd.f32 0.0, %v1380
        %v1382 = vpop.f32.mrb[0].mxu0
        %v1383 = vpop.f32.mrb[0].mxu0
        %v1384 = vadd.f32 0.0, %v1383
        %v1385 = vpop.f32.mrb[0].mxu0
        %1386 = vmatprep.mubr.bf16.mxu0 %v1059
        %1387 = vmatmul.mubr.bf16.gmra.mrb[0].mxu0 %v1058
        %v1388 = vpop.f32.mrb[0].mxu0
        %v1389 = vadd.f32 0.0, %v1388
        %v1390 = vpop.f32.mrb[0].mxu0
        %v1391 = vpop.f32.mrb[0].mxu0
        %v1392 = vadd.f32 0.0, %v1391
        %v1393 = vpop.f32.mrb[0].mxu0
        %1394 = vmatprep.mubr.bf16.mxu0 %v1063
        %1395 = vmatmul.mubr.bf16.gmra.mrb[0].mxu0 %v1062
        %v1396 = vpop.f32.mrb[0].mxu0
        %v1397 = vadd.f32 0.0, %v1396
        %v1398 = vpop.f32.mrb[0].mxu0
        %v1399 = vpop.f32.mrb[0].mxu0
        %v1400 = vadd.f32 0.0, %v1399
        %v1401 = vpop.f32.mrb[0].mxu0
        %1402 = vmatprep.mubr.bf16.mxu0 %v1067
        %1403 = vmatmul.mubr.bf16.gmra.mrb[0].mxu0 %v1066
        %v1404 = vpop.f32.mrb[0].mxu0
        %v1405 = vadd.f32 0.0, %v1404
        %v1406 = vpop.f32.mrb[0].mxu0
        %v1407 = vpop.f32.mrb[0].mxu0
        %v1408 = vadd.f32 0.0, %v1407
        %v1409 = vpop.f32.mrb[0].mxu0
        %1410 = vmatprep.mubr.bf16.mxu0 %v1071
        %1411 = vmatmul.mubr.bf16.gmra.mrb[0].mxu0 %v1070
        %v1412 = vpop.f32.mrb[0].mxu0
        %v1413 = vadd.f32 0.0, %v1412
        %v1414 = vpop.f32.mrb[0].mxu0
        %v1415 = vpop.f32.mrb[0].mxu0
        %v1416 = vadd.f32 0.0, %v1415
        %v1417 = vpop.f32.mrb[0].mxu0
        %1418 = vmatprep.mubr.bf16.mxu0 %v1075
        %1419 = vmatmul.mubr.bf16.gmra.mrb[0].mxu0 %v1074
        %v1420 = vpop.f32.mrb[0].mxu0
        %v1421 = vadd.f32 0.0, %v1420
        %v1422 = vpop.f32.mrb[0].mxu0
        %v1423 = vpop.f32.mrb[0].mxu0
        %v1424 = vadd.f32 0.0, %v1423
        %v1425 = vpop.f32.mrb[0].mxu0
        %1426 = vmatprep.mubr.bf16.mxu0 %v1079
        %1427 = vmatmul.mubr.bf16.gmra.mrb[0].mxu0 %v1078
        %v1428 = vpop.f32.mrb[0].mxu0
        %v1429 = vadd.f32 0.0, %v1428
        %v1430 = vpop.f32.mrb[0].mxu0
        %v1431 = vpop.f32.mrb[0].mxu0
        %v1432 = vadd.f32 0.0, %v1431
        %v1433 = vpop.f32.mrb[0].mxu0
        %1434 = vdwg.mxu0
        %1435 = vmatprep.subr.bf16.mxu0 0
        %1436 = vmatpush1.bf16.msra.mxu0 %v1290
        %1437 = vmatprep.subr.bf16.mxu0 0
        %1438 = vmatpush1.bf16.msra.mxu0 %v1291
        %1439 = vmatprep.subr.bf16.mxu0 0
        %1440 = vmatpush1.bf16.msra.mxu0 %v1292
        %1441 = vmatprep.subr.bf16.mxu0 0
        %1442 = vmatpush1.bf16.msra.mxu0 %v1293
        %1443 = vmatprep.subr.bf16.mxu0 0
        %1444 = vmatpush1.bf16.msra.mxu0 %v1294
        %1445 = vmatprep.subr.bf16.mxu0 0
        %1446 = vmatpush1.bf16.msra.mxu0 %v1295
        %1447 = vmatprep.subr.bf16.mxu0 0
        %1448 = vmatpush1.bf16.msra.mxu0 %v1296
        %1449 = vmatprep.subr.bf16.mxu0 0
        %1450 = vmatpush1.bf16.msra.mxu0 %v1297
        %1451 = vmatprep.subr.bf16.mxu0 0
        %1452 = vmatpush1.bf16.msra.mxu0 %v1298
        %1453 = vmatprep.subr.bf16.mxu0 0
        %1454 = vmatpush1.bf16.msra.mxu0 %v1299
        %1455 = vmatprep.subr.bf16.mxu0 0
        %1456 = vmatpush1.bf16.msra.mxu0 %v1300
        %1457 = vmatprep.subr.bf16.mxu0 0
        %1458 = vmatpush1.bf16.msra.mxu0 %v1301
        %1459 = vmatprep.subr.bf16.mxu0 0
        %1460 = vmatpush1.bf16.msra.mxu0 %v1302
        %1461 = vmatprep.subr.bf16.mxu0 0
        %1462 = vmatpush1.bf16.msra.mxu0 %v1303
        %1463 = vmatprep.subr.bf16.mxu0 0
        %1464 = vmatpush1.bf16.msra.mxu0 %v1304
        %1465 = vmatprep.subr.bf16.mxu0 0
        %1466 = vmatpush1.bf16.msra.mxu0 %v1305
        %1467 = vmatprep.mubr.bf16.mxu0 %v1053
        %1468 = vmatmul.mubr.bf16.gmra.mrb[0].mxu0 %v1052
        %v1469 = vpop.f32.mrb[0].mxu0
        %v1470 = vadd.f32 %v1373, %v1469
        %v1471 = vpop.f32.mrb[0].mxu0
        %v1472 = vpop.f32.mrb[0].mxu0
        %v1473 = vadd.f32 %v1376, %v1472
        %v1474 = vpop.f32.mrb[0].mxu0
        %1475 = vmatprep.mubr.bf16.mxu0 %v1057
        %1476 = vmatmul.mubr.bf16.gmra.mrb[0].mxu0 %v1056
        %v1477 = vpop.f32.mrb[0].mxu0
        %v1478 = vadd.f32 %v1381, %v1477
        %v1479 = vpop.f32.mrb[0].mxu0
        %v1480 = vpop.f32.mrb[0].mxu0
        %v1481 = vadd.f32 %v1384, %v1480
        %v1482 = vpop.f32.mrb[0].mxu0
        %1483 = vmatprep.mubr.bf16.mxu0 %v1061
        %1484 = vmatmul.mubr.bf16.gmra.mrb[0].mxu0 %v1060
        %v1485 = vpop.f32.mrb[0].mxu0
        %v1486 = vadd.f32 %v1389, %v1485
        %v1487 = vpop.f32.mrb[0].mxu0
        %v1488 = vpop.f32.mrb[0].mxu0
        %v1489 = vadd.f32 %v1392, %v1488
        %v1490 = vpop.f32.mrb[0].mxu0
        %1491 = vmatprep.mubr.bf16.mxu0 %v1065
        %1492 = vmatmul.mubr.bf16.gmra.mrb[0].mxu0 %v1064
        %v1493 = vpop.f32.mrb[0].mxu0
        %v1494 = vadd.f32 %v1397, %v1493
        %v1495 = vpop.f32.mrb[0].mxu0
        %v1496 = vpop.f32.mrb[0].mxu0
        %v1497 = vadd.f32 %v1400, %v1496
        %v1498 = vpop.f32.mrb[0].mxu0
        %1499 = vmatprep.mubr.bf16.mxu0 %v1069
        %1500 = vmatmul.mubr.bf16.gmra.mrb[0].mxu0 %v1068
        %v1501 = vpop.f32.mrb[0].mxu0
        %v1502 = vadd.f32 %v1405, %v1501
        %v1503 = vpop.f32.mrb[0].mxu0
        %v1504 = vpop.f32.mrb[0].mxu0
        %v1505 = vadd.f32 %v1408, %v1504
        %v1506 = vpop.f32.mrb[0].mxu0
        %1507 = vmatprep.mubr.bf16.mxu0 %v1073
        %1508 = vmatmul.mubr.bf16.gmra.mrb[0].mxu0 %v1072
        %v1509 = vpop.f32.mrb[0].mxu0
        %v1510 = vadd.f32 %v1413, %v1509
        %v1511 = vpop.f32.mrb[0].mxu0
        %v1512 = vpop.f32.mrb[0].mxu0
        %v1513 = vadd.f32 %v1416, %v1512
        %v1514 = vpop.f32.mrb[0].mxu0
        %1515 = vmatprep.mubr.bf16.mxu0 %v1077
        %1516 = vmatmul.mubr.bf16.gmra.mrb[0].mxu0 %v1076
        %v1517 = vpop.f32.mrb[0].mxu0
        %v1518 = vadd.f32 %v1421, %v1517
        %v1519 = vpop.f32.mrb[0].mxu0
        %v1520 = vpop.f32.mrb[0].mxu0
        %v1521 = vadd.f32 %v1424, %v1520
        %v1522 = vpop.f32.mrb[0].mxu0
        %1523 = vmatprep.mubr.bf16.mxu0 %v1081
        %1524 = vmatmul.mubr.bf16.gmra.mrb[0].mxu0 %v1080
        %v1525 = vpop.f32.mrb[0].mxu0
        %v1526 = vadd.f32 %v1429, %v1525
        %v1527 = vpop.f32.mrb[0].mxu0
        %v1528 = vpop.f32.mrb[0].mxu0
        %v1529 = vadd.f32 %v1432, %v1528
        %v1530 = vpop.f32.mrb[0].mxu0
        %1531 = vdwg.mxu0
        %1532 = vst [vmem:[%s357] sm:$0xff] %v1470
        %1533 = vst [vmem:[%s357 + $0x8] sm:$0xff] %v1473
        %1534 = vst [vmem:[%s357 + $0x10] sm:$0xff] %v1478
        %1535 = vst [vmem:[%s357 + $0x18] sm:$0xff] %v1481
        %1536 = vst [vmem:[%s357 + $0x20] sm:$0xff] %v1486
        %1537 = vst [vmem:[%s357 + $0x28] sm:$0xff] %v1489
        %1538 = vst [vmem:[%s357 + $0x30] sm:$0xff] %v1494
        %1539 = vst [vmem:[%s357 + $0x38] sm:$0xff] %v1497
        %1540 = vst [vmem:[%s357 + $0x40] sm:$0xff] %v1502
        %1541 = vst [vmem:[%s357 + $0x48] sm:$0xff] %v1505
        %1542 = vst [vmem:[%s357 + $0x50] sm:$0xff] %v1510
        %1543 = vst [vmem:[%s357 + $0x58] sm:$0xff] %v1513
        %1544 = vst [vmem:[%s357 + $0x60] sm:$0xff] %v1518
        %1545 = vst [vmem:[%s357 + $0x68] sm:$0xff] %v1521
        %1546 = vst [vmem:[%s357 + $0x70] sm:$0xff] %v1526
        %1547 = vst [vmem:[%s357 + $0x78] sm:$0xff] %v1529
        %v1548 = vadd.f32 %v1470, %v1473
        %v1549 = vadd.f32 %v1548, %v1478
        %v1550 = vadd.f32 %v1549, %v1481
        %v1551 = vadd.f32 %v1550, %v1486
        %v1552 = vadd.f32 %v1551, %v1489
        %v1553 = vadd.f32 %v1552, %v1494
        %v1554 = vadd.f32 %v1553, %v1497
        %v1555 = vadd.f32 %v1554, %v1502
        %v1556 = vadd.f32 %v1555, %v1505
        %v1557 = vadd.f32 %v1556, %v1510
        %v1558 = vadd.f32 %v1557, %v1513
        %v1559 = vadd.f32 %v1558, %v1518
        %v1560 = vadd.f32 %v1559, %v1521
        %v1561 = vadd.f32 %v1560, %v1526
        %v1562 = vadd.f32 %v1561, %v1529
        %v1563 = vrot.slane %v1562, 4
        %v1564 = vadd.f32 %v1562, %v1563
        %v1565 = vrot.slane %v1564, 2
        %v1566 = vadd.f32 %v1564, %v1565
        %v1567 = vrot.slane %v1566, 1
        %v1568 = vadd.f32 %v1566, %v1567
        %1569 = vst [vmem:[%s361] sm:$0x1] %v1568
        %v1570 = vmul.f32 %v1470, %v1470
        %v1571 = vmul.f32 %v1473, %v1473
        %v1572 = vmul.f32 %v1478, %v1478
        %v1573 = vmul.f32 %v1481, %v1481
        %v1574 = vmul.f32 %v1486, %v1486
        %v1575 = vmul.f32 %v1489, %v1489
        %v1576 = vmul.f32 %v1494, %v1494
        %v1577 = vmul.f32 %v1497, %v1497
        %v1578 = vmul.f32 %v1502, %v1502
        %v1579 = vmul.f32 %v1505, %v1505
        %v1580 = vmul.f32 %v1510, %v1510
        %v1581 = vmul.f32 %v1513, %v1513
        %v1582 = vmul.f32 %v1518, %v1518
        %v1583 = vmul.f32 %v1521, %v1521
        %v1584 = vmul.f32 %v1526, %v1526
        %v1585 = vmul.f32 %v1529, %v1529
        %v1586 = vadd.f32 %v1570, %v1571
        %v1587 = vadd.f32 %v1586, %v1572
        %v1588 = vadd.f32 %v1587, %v1573
        %v1589 = vadd.f32 %v1588, %v1574
        %v1590 = vadd.f32 %v1589, %v1575
        %v1591 = vadd.f32 %v1590, %v1576
        %v1592 = vadd.f32 %v1591, %v1577
        %v1593 = vadd.f32 %v1592, %v1578
        %v1594 = vadd.f32 %v1593, %v1579
        %v1595 = vadd.f32 %v1594, %v1580
        %v1596 = vadd.f32 %v1595, %v1581
        %v1597 = vadd.f32 %v1596, %v1582
        %v1598 = vadd.f32 %v1597, %v1583
        %v1599 = vadd.f32 %v1598, %v1584
        %v1600 = vadd.f32 %v1599, %v1585
        %v1601 = vrot.slane %v1600, 4
        %v1602 = vadd.f32 %v1600, %v1601
        %v1603 = vrot.slane %v1602, 2
        %v1604 = vadd.f32 %v1602, %v1603
        %v1605 = vrot.slane %v1604, 1
        %v1606 = vadd.f32 %v1604, %v1605
        %1607 = vst [vmem:[%s364] sm:$0x1] %v1606
        %s1608 = sand.u32 %s146, 1
        %s1609 = scalar_lea.sflag [#allocation3], %s1608
        %s1610 = sand.u32 %s146, 1
        %s1611 = smul.addr %s1610, 512
        %s1612 = scalar_lea.vmem [#allocation2], %s1611
        %s1613 = smul.u32 16, %s23
        %p1614 = scmp.lt.s32.totalorder %s1613, 31
        %s1615 = scalar_select %p1614, %s1613, 31
        %s1616 = smul.addr %s1615, 8
        %s1617 = scalar_lea.vmem %s6, %s1616
        %p1618 = scmp.lt.s32.totalorder %s23, 1
        %s1619 = scalar_select %p1618, %s23, 1
        %s1620 = scalar_lea.vmem %s7, %s1619
        %p1621 = scmp.lt.s32.totalorder %s23, 1
        %s1622 = scalar_select %p1621, %s23, 1
        %s1623 = scalar_lea.vmem %s8, %s1622
        // Predicated region
        $region41: #{fe_forward.4} parent=39 // pred_check
          %p1624 = pneg %p156
        $region42: #{fe_forward.4} parent=39 // pred_check_branch
          %1626 = sbr.rel (%p1624) target = $region44
        $region43: #{fe_forward.4} parent=39 // pred_region
          %s1627 = smul.u32 16, %s23
          %s1629 = ssub.s32 8192, 8192
          %1630 = vsyncadd %s1609, %s1629
          %s1631 = smul.addr %s1627, 4
          %s1632 = smul.addr %s1631, 128
          %s1633 = scalar_lea.hbm %s5, %s1632
          %s1634 = sshll.u32 %s1612, 4
          %s1635 = int_to_ptr.vmem [resolvable:$true] %s1634
          %1640 = dma.vmem_to_hbm [thread:$0]  %s1635, 8192, %s1633, %s1609, 512, 512, 32
        $region44: #{fe_forward.4} parent=39 // pred_fallthru
          _
        // Predicated region
        $region45: #{fe_forward.4} parent=39 // pred_check
          %p1641 = pneg %p182
        $region46: #{fe_forward.4} parent=39 // pred_check_branch
          %1643 = sbr.rel (%p1641) target = $region48
        $region47: #{fe_forward.4} parent=39 // pred_region
          %s1644 = smul.u32 16, %s23
        $region48: #{fe_forward.4} parent=39 // pred_fallthru
          _
        // Predicated region
        $region49: #{fe_forward.4} parent=39 // pred_check
          %p1645 = pneg %p208
        $region50: #{fe_forward.4} parent=39 // pred_check_branch
          %1647 = sbr.rel (%p1645) target = $region52
        $region51: #{fe_forward.4} parent=39 // pred_region
          _
        $region52: #{fe_forward.4} parent=39 // pred_fallthru
          _
        // Predicated region
        $region53: #{fe_forward.4} parent=39 // pred_check
          %p1648 = pneg %p234
        $region54: #{fe_forward.4} parent=39 // pred_check_branch
          %1650 = sbr.rel (%p1648) target = $region56
        $region55: #{fe_forward.4} parent=39 // pred_region
          _
        $region56: #{fe_forward.4} parent=39 // pred_fallthru
          _
      $region40: #{fe_forward.4} parent=5 // pred_fallthru
        _
      %p1651 = scmp.le.s32.totalorder 2, %s18
      // Predicated region
      $region57: #{fe_forward.4} parent=5 // pred_check
        %p1652 = pneg %p1651
      $region58: #{fe_forward.4} parent=5 // pred_check_branch
        %1654 = sbr.rel (%p1652) target = $region60
      $region59: #{fe_forward.4} parent=5 // pred_region
        %s1655 = ssub.s32 %s18, 2
        // Predicated region
        $region61: #{fe_forward.4} parent=59 // pred_check
          %p1656 = pneg %p162
        $region62: #{fe_forward.4} parent=59 // pred_check_branch
          %1658 = sbr.rel (%p1656) target = $region64
        $region63: #{fe_forward.4} parent=59 // pred_region
          %s1659 = sand.u32 %s147, 1
          %s1660 = scalar_lea.sflag [#allocation3], %s1659
          %s1661 = sand.u32 %s147, 1
          %s1662 = smul.addr %s1661, 512
          %s1663 = scalar_lea.vmem [#allocation2], %s1662
          %1664 = dma.done %s1660, 8192
        $region64: #{fe_forward.4} parent=59 // pred_fallthru
          _
        // Predicated region
        $region65: #{fe_forward.4} parent=59 // pred_check
          %p1665 = pneg %p188
        $region66: #{fe_forward.4} parent=59 // pred_check_branch
          %1667 = sbr.rel (%p1665) target = $region68
        $region67: #{fe_forward.4} parent=59 // pred_region
          %s1668 = smul.u32 16, %s24
          %p1669 = scmp.lt.s32.totalorder %s1668, 31
          %s1670 = scalar_select %p1669, %s1668, 31
          %s1671 = smul.addr %s1670, 8
          %s1672 = scalar_lea.vmem %s6, %s1671
        $region68: #{fe_forward.4} parent=59 // pred_fallthru
          _
        // Predicated region
        $region69: #{fe_forward.4} parent=59 // pred_check
          %p1673 = pneg %p214
        $region70: #{fe_forward.4} parent=59 // pred_check_branch
          %1675 = sbr.rel (%p1673) target = $region72
        $region71: #{fe_forward.4} parent=59 // pred_region
          %p1676 = scmp.lt.s32.totalorder %s24, 1
          %s1677 = scalar_select %p1676, %s24, 1
          %s1678 = scalar_lea.vmem %s7, %s1677
        $region72: #{fe_forward.4} parent=59 // pred_fallthru
          _
        // Predicated region
        $region73: #{fe_forward.4} parent=59 // pred_check
          %p1679 = pneg %p240
        $region74: #{fe_forward.4} parent=59 // pred_check_branch
          %1681 = sbr.rel (%p1679) target = $region76
        $region75: #{fe_forward.4} parent=59 // pred_region
          %p1682 = scmp.lt.s32.totalorder %s24, 1
          %s1683 = scalar_select %p1682, %s24, 1
          %s1684 = scalar_lea.vmem %s8, %s1683
        $region76: #{fe_forward.4} parent=59 // pred_fallthru
          _
      $region60: #{fe_forward.4} parent=5 // pred_fallthru
        _
    $region6: #{fe_forward.4} parent=1 // loop_footer
      %s22 = sadd.s32 1, %s18
    $region7: #{fe_forward.4} parent=1 // loop_footer_branch
      %17 = sbr.rel target = $region3
    $region8: #{fe_forward.4} parent=1 // loop_exit
      _
    %1685 = vsyncpa [#allocation3], 1
    %s1686 = scalar_lea.sflag [#allocation3], 1
    %1687 = vsyncpa %s1686, 1

</llo_original>
